<compile_context>
chip_gen: v7x
topology: tpu7x:2x2x1
jax: 0.10.0
libtpu: 0.0.40
codegen_flags: <defaults>
</compile_context>

<pallas_src>
import functools

import jax
import jax.numpy as jnp
from jax.experimental import pallas as pl
from jax.experimental.pallas import tpu as pltpu

_LRELU_SLOPE = 0.01     # torch.nn.LeakyReLU default negative_slope
_MARGIN = 128           # lane-tile aligned margin for the shifted-tap scratch


def _leaky_relu(x):
    return jnp.where(x >= 0, x, _LRELU_SLOPE * x)


def _conv3x3_reflect(a, pad_ref, w_ref, b_ref, masks, *, W):
    """3x3 conv with reflect(1) padding over the flattened (B,H,W) lane dim.

    a       : (C_in, N) activated input value, N = B*H*W, flat p = b*H*W + h*W + w
    pad_ref : (C_in, N + 2*_MARGIN) f32 VMEM scratch used to materialize taps
    w_ref   : (9, C_out, C_in) tap-major weights, tap t = (dh+1)*3 + (dw+1)
    b_ref   : (C_out, 1) bias
    masks   : (w_first, w_last, h_first, h_last), each (1, N) bool
    """
    n = a.shape[1]
    w_first, w_last, h_first, h_last = masks

    # One aligned store; every tap below is a statically-offset slice of it.
    pad_ref[:, _MARGIN:_MARGIN + n] = a

    def shifted(s):
        # value[p] = a[p + s]; positions where p + s is out of range are junk,
        # but every such position is overridden by a reflect fix before use.
        return pad_ref[:, _MARGIN + s:_MARGIN + s + n]

    acc = None
    for dh in (-1, 0, 1):
        for dw in (-1, 0, 1):
            w_bad = w_last if dw == 1 else (w_first if dw == -1 else None)
            h_bad = h_last if dh == 1 else (h_first if dh == -1 else None)

            tap = shifted(dh * W + dw)
            if w_bad is not None:                        # reflect in w: dw -> -dw
                tap = jnp.where(w_bad, shifted(dh * W - dw), tap)
            if h_bad is not None:                        # reflect in h: dh -> -dh
                tap = jnp.where(h_bad, shifted(-dh * W + dw), tap)
            if w_bad is not None and h_bad is not None:  # corners: both reflected
                tap = jnp.where(jnp.logical_and(w_bad, h_bad),
                                shifted(-dh * W - dw), tap)

            t = (dh + 1) * 3 + (dw + 1)
            contrib = jnp.dot(w_ref[t], tap, preferred_element_type=jnp.float32)
            acc = contrib if acc is None else acc + contrib

    return acc + b_ref[...]


def _res_block_kernel(*refs, H, W, learned_shortcut):
    if learned_shortcut:
        (x_ref, pos_ref, w0_ref, b0_ref, w1_ref, b1_ref, ws_ref,
         o_ref, pad0_ref, pad1_ref) = refs
    else:
        (x_ref, pos_ref, w0_ref, b0_ref, w1_ref, b1_ref,
         o_ref, pad0_ref, pad1_ref) = refs

    # Zero the scratch so masked-off tap positions never read uninitialized VMEM.
    pad0_ref[...] = jnp.zeros_like(pad0_ref)
    pad1_ref[...] = jnp.zeros_like(pad1_ref)

    w_idx = pos_ref[0:1, :]
    h_idx = pos_ref[1:2, :]
    masks = (w_idx == 0, w_idx == W - 1, h_idx == 0, h_idx == H - 1)

    x = x_ref[...]                                   # raw input (C_in, N)

    # conv_0: lrelu -> reflect-pad(1) -> 3x3 conv (+bias)
    h0 = _conv3x3_reflect(_leaky_relu(x), pad0_ref, w0_ref, b0_ref, masks, W=W)
    # conv_1: lrelu -> reflect-pad(1) -> 3x3 conv (+bias)
    h1 = _conv3x3_reflect(_leaky_relu(h0), pad1_ref, w1_ref, b1_ref, masks, W=W)

    # shortcut: 1x1 conv (no bias, no activation) on the RAW input, or identity.
    if learned_shortcut:
        x_s = jnp.dot(ws_ref[...], x, preferred_element_type=jnp.float32)
    else:
        x_s = x

    o_ref[...] = (x_s + h1).astype(o_ref.dtype)


# ---------------------------------------------------------------------------
# Parameters (deterministic, PyTorch Conv2d-style uniform init)
# ---------------------------------------------------------------------------
def init_params(key, fin, fout, fhid=None):
    fhid = min(fin, fout) if fhid is None else fhid
    k0w, k0b, k1w, k1b, ksw = jax.random.split(key, 5)

    def conv_init(kw, kb, c_out, c_in, ksz):
        bound = (c_in * ksz * ksz) ** -0.5
        w = jax.random.uniform(kw, (c_out, c_in, ksz, ksz), jnp.float32, -bound, bound)
        b = jax.random.uniform(kb, (c_out,), jnp.float32, -bound, bound)
        return w, b

    w0, b0 = conv_init(k0w, k0b, fhid, fin, 3)
    w1, b1 = conv_init(k1w, k1b, fout, fhid, 3)
    params = {"w0": w0, "b0": b0, "w1": w1, "b1": b1, "ws": None}
    if fin != fout:                                    # learned 1x1 shortcut, no bias
        bound = float(fin) ** -0.5
        params["ws"] = jax.random.uniform(ksw, (fout, fin, 1, 1), jnp.float32,
                                          -bound, bound)
    return params


def prepare_kernel_params(params):
    """One-time rearrangement into the kernel's layout (no per-call transposes)."""
    def tap_major(w):   # (C_out, C_in, 3, 3) -> (9, C_out, C_in), t = kh*3 + kw
        c_out, c_in = w.shape[0], w.shape[1]
        return jnp.transpose(w, (2, 3, 0, 1)).reshape(9, c_out, c_in)

    kp = {
        "w0": tap_major(params["w0"]),
        "b0": params["b0"].reshape(-1, 1),
        "w1": tap_major(params["w1"]),
        "b1": params["b1"].reshape(-1, 1),
    }
    if params.get("ws") is not None:
        ws = params["ws"]
        kp["ws"] = ws.reshape(ws.shape[0], ws.shape[1])   # (C_out, C_in)
    return kp


# ---------------------------------------------------------------------------
# Forward (single fused pallas_call)
# ---------------------------------------------------------------------------
def act_first_res_block_forward(kparams, x_nchw):
    """x_nchw: (B, fin, H, W) f32 -> (B, fout, H, W) f32."""
    B, c_in, H, W = x_nchw.shape
    n = B * H * W
    c_hid = kparams["w0"].shape[1]
    c_out = kparams["w1"].shape[1]
    learned = "ws" in kparams
    assert W + 1 <= _MARGIN, "spatial width too large for the fixed tap margin"

    # activations: channels on sublanes, flattened (B,H,W) on lanes (lane-dense).
    x_flat = jnp.transpose(x_nchw, (1, 0, 2, 3)).reshape(c_in, n)

    # per-lane (w, h) coordinates, used in-kernel for reflect boundary masks.
    hw = jnp.arange(H * W, dtype=jnp.int32)
    pos = jnp.stack([jnp.tile(hw % W, B), jnp.tile(hw // W, B)], axis=0)  # (2, N)

    inputs = [x_flat, pos, kparams["w0"], kparams["b0"], kparams["w1"], kparams["b1"]]
    if learned:
        inputs.append(kparams["ws"])

    kernel = functools.partial(_res_block_kernel, H=H, W=W,
                               learned_shortcut=learned)

    flops = 2 * n * (9 * c_hid * c_in + 9 * c_out * c_hid
                     + (c_out * c_in if learned else 0))
    bytes_accessed = sum(int(a.size) * a.dtype.itemsize for a in inputs) + c_out * n * 4

    out_flat = pl.pallas_call(
        kernel,
        out_shape=jax.ShapeDtypeStruct((c_out, n), jnp.float32),
        in_specs=[pl.BlockSpec(memory_space=pltpu.MemorySpace.VMEM)
                  for _ in inputs],
        out_specs=pl.BlockSpec(memory_space=pltpu.MemorySpace.VMEM),
        scratch_shapes=[
            pltpu.VMEM((c_in, n + 2 * _MARGIN), jnp.float32),
            pltpu.VMEM((c_hid, n + 2 * _MARGIN), jnp.float32),
        ],
        cost_estimate=pl.CostEstimate(flops=flops, transcendentals=0,
                                      bytes_accessed=bytes_accessed),
    )(*inputs)

    return jnp.transpose(out_flat.reshape(c_out, B, H, W), (1, 0, 2, 3))


# ---------------------------------------------------------------------------
# Pure-JAX reference for verification
# ---------------------------------------------------------------------------
def act_first_res_block_ref(params, x):
    lrelu = lambda t: jnp.where(t >= 0, t, _LRELU_SLOPE * t)

    def conv(h, w, b=None, reflect=False):
        if reflect:
            h = jnp.pad(h, ((0, 0), (0, 0), (1, 1), (1, 1)), mode="reflect")
        y = jax.lax.conv_general_dilated(
            h, w, window_strides=(1, 1), padding="VALID",
            dimension_numbers=("NCHW", "OIHW", "NCHW"),
            precision=jax.lax.Precision.HIGHEST)
        if b is not None:
            y = y + b[None, :, None, None]
        return y

    dx = conv(lrelu(x), params["w0"], params["b0"], reflect=True)
    dx = conv(lrelu(dx), params["w1"], params["b1"], reflect=True)
    x_s = conv(x, params["ws"]) if params.get("ws") is not None else x
    return x_s + dx


if __name__ == "__main__":
    key = jax.random.PRNGKey(0)
    B, H, W = 2, 16, 16
    k_p1, k_x1, k_p2, k_x2 = jax.random.split(key, 4)

    # Case 1: fin != fout -> learned 1x1 shortcut (conv_s)
    fin, fout = 4, 8
    params1 = init_params(k_p1, fin, fout)
    x1 = jax.random.normal(k_x1, (B, fin, H, W), jnp.float32)
    out1 = jax.block_until_ready(
        act_first_res_block_forward(prepare_kernel_params(params1), x1))
    ref1 = act_first_res_block_ref(params1, x1)
    assert out1.shape == (B, fout, H, W), out1.shape
    err1 = float(jnp.max(jnp.abs(out1 - ref1)))
    assert jnp.allclose(out1, ref1, atol=2e-2, rtol=2e-2), err1

    # Case 2: fin == fout -> identity shortcut
    fin2 = fout2 = 4
    params2 = init_params(k_p2, fin2, fout2)
    x2 = jax.random.normal(k_x2, (B, fin2, H, W), jnp.float32)
    out2 = jax.block_until_ready(
        act_first_res_block_forward(prepare_kernel_params(params2), x2))
    ref2 = act_first_res_block_ref(params2, x2)
    assert out2.shape == (B, fout2, H, W), out2.shape
    err2 = float(jnp.max(jnp.abs(out2 - ref2)))
    assert jnp.allclose(out2, ref2, atol=2e-2, rtol=2e-2), err2

    print("KERNEL_OK")
</pallas_src>

<mosaic_0001>
module attributes {stable_mosaic.version = 11 : i64} {
  func.func @_res_block_kernel(%arg0: memref<4x512xf32, #tpu.memory_space<vmem>>, %arg1: memref<2x512xi32, #tpu.memory_space<vmem>>, %arg2: memref<9x4x4xf32, #tpu.memory_space<vmem>>, %arg3: memref<4x1xf32, #tpu.memory_space<vmem>>, %arg4: memref<9x8x4xf32, #tpu.memory_space<vmem>>, %arg5: memref<8x1xf32, #tpu.memory_space<vmem>>, %arg6: memref<8x4xf32, #tpu.memory_space<vmem>>, %arg7: memref<8x512xf32, #tpu.memory_space<vmem>>, %arg8: memref<4x768xf32, #tpu.memory_space<vmem>>, %arg9: memref<4x768xf32, #tpu.memory_space<vmem>>) attributes {dimension_semantics = [], scalar_prefetch = 0 : i64, scratch_operands = 2 : i64, tpu.core_type = #tpu.core_type<tc>} {
    %cst = arith.constant 0.000000e+00 : f32
    %0 = vector.broadcast %cst : f32 to vector<4x768xf32>
    %c0 = arith.constant 0 : index
    %c0_0 = arith.constant 0 : index
    %1 = vector.load %arg8[%c0, %c0_0] : memref<4x768xf32, #tpu.memory_space<vmem>>, vector<4x768xf32>
    tpu.vector_store %arg8[%c0, %c0_0], %0 {strides = array<i32>} : memref<4x768xf32, #tpu.memory_space<vmem>>, vector<4x768xf32>,
    %cst_1 = arith.constant 0.000000e+00 : f32
    %2 = vector.broadcast %cst_1 : f32 to vector<4x768xf32>
    %c0_2 = arith.constant 0 : index
    %c0_3 = arith.constant 0 : index
    %3 = vector.load %arg9[%c0_2, %c0_3] : memref<4x768xf32, #tpu.memory_space<vmem>>, vector<4x768xf32>
    tpu.vector_store %arg9[%c0_2, %c0_3], %2 {strides = array<i32>} : memref<4x768xf32, #tpu.memory_space<vmem>>, vector<4x768xf32>,
    %c0_4 = arith.constant 0 : index
    %c0_5 = arith.constant 0 : index
    %4 = vector.load %arg1[%c0_4, %c0_5] : memref<2x512xi32, #tpu.memory_space<vmem>>, vector<1x512xi32>
    %c1 = arith.constant 1 : index
    %c0_6 = arith.constant 0 : index
    %5 = vector.load %arg1[%c1, %c0_6] : memref<2x512xi32, #tpu.memory_space<vmem>>, vector<1x512xi32>
    %c0_i32 = arith.constant 0 : i32
    %6 = vector.broadcast %c0_i32 : i32 to vector<1x512xi32>
    %7 = arith.cmpi eq, %4, %6 : vector<1x512xi32>
    %c15_i32 = arith.constant 15 : i32
    %8 = vector.broadcast %c15_i32 : i32 to vector<1x512xi32>
    %9 = arith.cmpi eq, %4, %8 : vector<1x512xi32>
    %c0_i32_7 = arith.constant 0 : i32
    %10 = vector.broadcast %c0_i32_7 : i32 to vector<1x512xi32>
    %11 = arith.cmpi eq, %5, %10 : vector<1x512xi32>
    %c15_i32_8 = arith.constant 15 : i32
    %12 = vector.broadcast %c15_i32_8 : i32 to vector<1x512xi32>
    %13 = arith.cmpi eq, %5, %12 : vector<1x512xi32>
    %c0_9 = arith.constant 0 : index
    %c0_10 = arith.constant 0 : index
    %14 = vector.load %arg0[%c0_9, %c0_10] : memref<4x512xf32, #tpu.memory_space<vmem>>, vector<4x512xf32>
    %cst_11 = arith.constant 0.000000e+00 : f32
    %15 = vector.broadcast %cst_11 : f32 to vector<4x512xf32>
    %16 = arith.cmpf oge, %14, %15 : vector<4x512xf32>
    %cst_12 = arith.constant 0.00999999977 : f32
    %17 = vector.broadcast %cst_12 : f32 to vector<4x512xf32>
    %18 = arith.mulf %17, %14 : vector<4x512xf32>
    %19 = arith.select %16, %14, %18 : vector<4x512xi1>, vector<4x512xf32>
    %c0_13 = arith.constant 0 : index
    %c128 = arith.constant 128 : index
    %20 = vector.load %arg8[%c0_13, %c128] : memref<4x768xf32, #tpu.memory_space<vmem>>, vector<4x512xf32>
    tpu.vector_store %arg8[%c0_13, %c128], %19 {strides = array<i32>} : memref<4x768xf32, #tpu.memory_space<vmem>>, vector<4x512xf32>,
    %c0_14 = arith.constant 0 : index
    %c111 = arith.constant 111 : index
    %21 = vector.load %arg8[%c0_14, %c111] : memref<4x768xf32, #tpu.memory_space<vmem>>, vector<4x512xf32>
    %c0_15 = arith.constant 0 : index
    %c113 = arith.constant 113 : index
    %22 = vector.load %arg8[%c0_15, %c113] : memref<4x768xf32, #tpu.memory_space<vmem>>, vector<4x512xf32>
    %23 = vector.shape_cast %7 : vector<1x512xi1> to vector<1x512xi1>
    %24 = vector.broadcast %23 : vector<1x512xi1> to vector<4x512xi1>
    %25 = arith.select %24, %22, %21 : vector<4x512xi1>, vector<4x512xf32>
    %c0_16 = arith.constant 0 : index
    %c143 = arith.constant 143 : index
    %26 = vector.load %arg8[%c0_16, %c143] : memref<4x768xf32, #tpu.memory_space<vmem>>, vector<4x512xf32>
    %27 = vector.shape_cast %11 : vector<1x512xi1> to vector<1x512xi1>
    %28 = vector.broadcast %27 : vector<1x512xi1> to vector<4x512xi1>
    %29 = arith.select %28, %26, %25 : vector<4x512xi1>, vector<4x512xf32>
    %30 = arith.andi %7, %11 : vector<1x512xi1>
    %c0_17 = arith.constant 0 : index
    %c145 = arith.constant 145 : index
    %31 = vector.load %arg8[%c0_17, %c145] : memref<4x768xf32, #tpu.memory_space<vmem>>, vector<4x512xf32>
    %32 = vector.shape_cast %30 : vector<1x512xi1> to vector<1x512xi1>
    %33 = vector.broadcast %32 : vector<1x512xi1> to vector<4x512xi1>
    %34 = arith.select %33, %31, %29 : vector<4x512xi1>, vector<4x512xf32>
    %c0_18 = arith.constant 0 : index
    %c0_19 = arith.constant 0 : index
    %c0_20 = arith.constant 0 : index
    %35 = vector.load %arg2[%c0_18, %c0_19, %c0_20] : memref<9x4x4xf32, #tpu.memory_space<vmem>>, vector<1x4x4xf32>
    %36 = vector.shape_cast %35 : vector<1x4x4xf32> to vector<4x4xf32>
    %cst_21 = arith.constant dense<0.000000e+00> : vector<4x512xf32>
    %37 = tpu.matmul %36, %34, %cst_21 {dimension_numbers = #tpu.dot_dimension_numbers<[1], [0], [0], [1], [0, 0, 1, 1], [], []>} : vector<4x4xf32>, vector<4x512xf32>, vector<4x512xf32> -> vector<4x512xf32>
    %c0_22 = arith.constant 0 : index
    %c112 = arith.constant 112 : index
    %38 = vector.load %arg8[%c0_22, %c112] : memref<4x768xf32, #tpu.memory_space<vmem>>, vector<4x512xf32>
    %c0_23 = arith.constant 0 : index
    %c144 = arith.constant 144 : index
    %39 = vector.load %arg8[%c0_23, %c144] : memref<4x768xf32, #tpu.memory_space<vmem>>, vector<4x512xf32>
    %40 = vector.shape_cast %11 : vector<1x512xi1> to vector<1x512xi1>
    %41 = vector.broadcast %40 : vector<1x512xi1> to vector<4x512xi1>
    %42 = arith.select %41, %39, %38 : vector<4x512xi1>, vector<4x512xf32>
    %c1_24 = arith.constant 1 : index
    %c0_25 = arith.constant 0 : index
    %c0_26 = arith.constant 0 : index
    %43 = vector.load %arg2[%c1_24, %c0_25, %c0_26] : memref<9x4x4xf32, #tpu.memory_space<vmem>>, vector<1x4x4xf32>
    %44 = vector.shape_cast %43 : vector<1x4x4xf32> to vector<4x4xf32>
    %cst_27 = arith.constant dense<0.000000e+00> : vector<4x512xf32>
    %45 = tpu.matmul %44, %42, %cst_27 {dimension_numbers = #tpu.dot_dimension_numbers<[1], [0], [0], [1], [0, 0, 1, 1], [], []>} : vector<4x4xf32>, vector<4x512xf32>, vector<4x512xf32> -> vector<4x512xf32>
    %46 = arith.addf %37, %45 : vector<4x512xf32>
    %c0_28 = arith.constant 0 : index
    %c113_29 = arith.constant 113 : index
    %47 = vector.load %arg8[%c0_28, %c113_29] : memref<4x768xf32, #tpu.memory_space<vmem>>, vector<4x512xf32>
    %c0_30 = arith.constant 0 : index
    %c111_31 = arith.constant 111 : index
    %48 = vector.load %arg8[%c0_30, %c111_31] : memref<4x768xf32, #tpu.memory_space<vmem>>, vector<4x512xf32>
    %49 = vector.shape_cast %9 : vector<1x512xi1> to vector<1x512xi1>
    %50 = vector.broadcast %49 : vector<1x512xi1> to vector<4x512xi1>
    %51 = arith.select %50, %48, %47 : vector<4x512xi1>, vector<4x512xf32>
    %c0_32 = arith.constant 0 : index
    %c145_33 = arith.constant 145 : index
    %52 = vector.load %arg8[%c0_32, %c145_33] : memref<4x768xf32, #tpu.memory_space<vmem>>, vector<4x512xf32>
    %53 = vector.shape_cast %11 : vector<1x512xi1> to vector<1x512xi1>
    %54 = vector.broadcast %53 : vector<1x512xi1> to vector<4x512xi1>
    %55 = arith.select %54, %52, %51 : vector<4x512xi1>, vector<4x512xf32>
    %56 = arith.andi %9, %11 : vector<1x512xi1>
    %c0_34 = arith.constant 0 : index
    %c143_35 = arith.constant 143 : index
    %57 = vector.load %arg8[%c0_34, %c143_35] : memref<4x768xf32, #tpu.memory_space<vmem>>, vector<4x512xf32>
    %58 = vector.shape_cast %56 : vector<1x512xi1> to vector<1x512xi1>
    %59 = vector.broadcast %58 : vector<1x512xi1> to vector<4x512xi1>
    %60 = arith.select %59, %57, %55 : vector<4x512xi1>, vector<4x512xf32>
    %c2 = arith.constant 2 : index
    %c0_36 = arith.constant 0 : index
    %c0_37 = arith.constant 0 : index
    %61 = vector.load %arg2[%c2, %c0_36, %c0_37] : memref<9x4x4xf32, #tpu.memory_space<vmem>>, vector<1x4x4xf32>
    %62 = vector.shape_cast %61 : vector<1x4x4xf32> to vector<4x4xf32>
    %cst_38 = arith.constant dense<0.000000e+00> : vector<4x512xf32>
    %63 = tpu.matmul %62, %60, %cst_38 {dimension_numbers = #tpu.dot_dimension_numbers<[1], [0], [0], [1], [0, 0, 1, 1], [], []>} : vector<4x4xf32>, vector<4x512xf32>, vector<4x512xf32> -> vector<4x512xf32>
    %64 = arith.addf %46, %63 : vector<4x512xf32>
    %c0_39 = arith.constant 0 : index
    %c127 = arith.constant 127 : index
    %65 = vector.load %arg8[%c0_39, %c127] : memref<4x768xf32, #tpu.memory_space<vmem>>, vector<4x512xf32>
    %c0_40 = arith.constant 0 : index
    %c129 = arith.constant 129 : index
    %66 = vector.load %arg8[%c0_40, %c129] : memref<4x768xf32, #tpu.memory_space<vmem>>, vector<4x512xf32>
    %67 = vector.shape_cast %7 : vector<1x512xi1> to vector<1x512xi1>
    %68 = vector.broadcast %67 : vector<1x512xi1> to vector<4x512xi1>
    %69 = arith.select %68, %66, %65 : vector<4x512xi1>, vector<4x512xf32>
    %c3 = arith.constant 3 : index
    %c0_41 = arith.constant 0 : index
    %c0_42 = arith.constant 0 : index
    %70 = vector.load %arg2[%c3, %c0_41, %c0_42] : memref<9x4x4xf32, #tpu.memory_space<vmem>>, vector<1x4x4xf32>
    %71 = vector.shape_cast %70 : vector<1x4x4xf32> to vector<4x4xf32>
    %cst_43 = arith.constant dense<0.000000e+00> : vector<4x512xf32>
    %72 = tpu.matmul %71, %69, %cst_43 {dimension_numbers = #tpu.dot_dimension_numbers<[1], [0], [0], [1], [0, 0, 1, 1], [], []>} : vector<4x4xf32>, vector<4x512xf32>, vector<4x512xf32> -> vector<4x512xf32>
    %73 = arith.addf %64, %72 : vector<4x512xf32>
    %c0_44 = arith.constant 0 : index
    %c128_45 = arith.constant 128 : index
    %74 = vector.load %arg8[%c0_44, %c128_45] : memref<4x768xf32, #tpu.memory_space<vmem>>, vector<4x512xf32>
    %c4 = arith.constant 4 : index
    %c0_46 = arith.constant 0 : index
    %c0_47 = arith.constant 0 : index
    %75 = vector.load %arg2[%c4, %c0_46, %c0_47] : memref<9x4x4xf32, #tpu.memory_space<vmem>>, vector<1x4x4xf32>
    %76 = vector.shape_cast %75 : vector<1x4x4xf32> to vector<4x4xf32>
    %cst_48 = arith.constant dense<0.000000e+00> : vector<4x512xf32>
    %77 = tpu.matmul %76, %74, %cst_48 {dimension_numbers = #tpu.dot_dimension_numbers<[1], [0], [0], [1], [0, 0, 1, 1], [], []>} : vector<4x4xf32>, vector<4x512xf32>, vector<4x512xf32> -> vector<4x512xf32>
    %78 = arith.addf %73, %77 : vector<4x512xf32>
    %c0_49 = arith.constant 0 : index
    %c129_50 = arith.constant 129 : index
    %79 = vector.load %arg8[%c0_49, %c129_50] : memref<4x768xf32, #tpu.memory_space<vmem>>, vector<4x512xf32>
    %c0_51 = arith.constant 0 : index
    %c127_52 = arith.constant 127 : index
    %80 = vector.load %arg8[%c0_51, %c127_52] : memref<4x768xf32, #tpu.memory_space<vmem>>, vector<4x512xf32>
    %81 = vector.shape_cast %9 : vector<1x512xi1> to vector<1x512xi1>
    %82 = vector.broadcast %81 : vector<1x512xi1> to vector<4x512xi1>
    %83 = arith.select %82, %80, %79 : vector<4x512xi1>, vector<4x512xf32>
    %c5 = arith.constant 5 : index
    %c0_53 = arith.constant 0 : index
    %c0_54 = arith.constant 0 : index
    %84 = vector.load %arg2[%c5, %c0_53, %c0_54] : memref<9x4x4xf32, #tpu.memory_space<vmem>>, vector<1x4x4xf32>
    %85 = vector.shape_cast %84 : vector<1x4x4xf32> to vector<4x4xf32>
    %cst_55 = arith.constant dense<0.000000e+00> : vector<4x512xf32>
    %86 = tpu.matmul %85, %83, %cst_55 {dimension_numbers = #tpu.dot_dimension_numbers<[1], [0], [0], [1], [0, 0, 1, 1], [], []>} : vector<4x4xf32>, vector<4x512xf32>, vector<4x512xf32> -> vector<4x512xf32>
    %87 = arith.addf %78, %86 : vector<4x512xf32>
    %c0_56 = arith.constant 0 : index
    %c143_57 = arith.constant 143 : index
    %88 = vector.load %arg8[%c0_56, %c143_57] : memref<4x768xf32, #tpu.memory_space<vmem>>, vector<4x512xf32>
    %c0_58 = arith.constant 0 : index
    %c145_59 = arith.constant 145 : index
    %89 = vector.load %arg8[%c0_58, %c145_59] : memref<4x768xf32, #tpu.memory_space<vmem>>, vector<4x512xf32>
    %90 = vector.shape_cast %7 : vector<1x512xi1> to vector<1x512xi1>
    %91 = vector.broadcast %90 : vector<1x512xi1> to vector<4x512xi1>
    %92 = arith.select %91, %89, %88 : vector<4x512xi1>, vector<4x512xf32>
    %c0_60 = arith.constant 0 : index
    %c111_61 = arith.constant 111 : index
    %93 = vector.load %arg8[%c0_60, %c111_61] : memref<4x768xf32, #tpu.memory_space<vmem>>, vector<4x512xf32>
    %94 = vector.shape_cast %13 : vector<1x512xi1> to vector<1x512xi1>
    %95 = vector.broadcast %94 : vector<1x512xi1> to vector<4x512xi1>
    %96 = arith.select %95, %93, %92 : vector<4x512xi1>, vector<4x512xf32>
    %97 = arith.andi %7, %13 : vector<1x512xi1>
    %c0_62 = arith.constant 0 : index
    %c113_63 = arith.constant 113 : index
    %98 = vector.load %arg8[%c0_62, %c113_63] : memref<4x768xf32, #tpu.memory_space<vmem>>, vector<4x512xf32>
    %99 = vector.shape_cast %97 : vector<1x512xi1> to vector<1x512xi1>
    %100 = vector.broadcast %99 : vector<1x512xi1> to vector<4x512xi1>
    %101 = arith.select %100, %98, %96 : vector<4x512xi1>, vector<4x512xf32>
    %c6 = arith.constant 6 : index
    %c0_64 = arith.constant 0 : index
    %c0_65 = arith.constant 0 : index
    %102 = vector.load %arg2[%c6, %c0_64, %c0_65] : memref<9x4x4xf32, #tpu.memory_space<vmem>>, vector<1x4x4xf32>
    %103 = vector.shape_cast %102 : vector<1x4x4xf32> to vector<4x4xf32>
    %cst_66 = arith.constant dense<0.000000e+00> : vector<4x512xf32>
    %104 = tpu.matmul %103, %101, %cst_66 {dimension_numbers = #tpu.dot_dimension_numbers<[1], [0], [0], [1], [0, 0, 1, 1], [], []>} : vector<4x4xf32>, vector<4x512xf32>, vector<4x512xf32> -> vector<4x512xf32>
    %105 = arith.addf %87, %104 : vector<4x512xf32>
    %c0_67 = arith.constant 0 : index
    %c144_68 = arith.constant 144 : index
    %106 = vector.load %arg8[%c0_67, %c144_68] : memref<4x768xf32, #tpu.memory_space<vmem>>, vector<4x512xf32>
    %c0_69 = arith.constant 0 : index
    %c112_70 = arith.constant 112 : index
    %107 = vector.load %arg8[%c0_69, %c112_70] : memref<4x768xf32, #tpu.memory_space<vmem>>, vector<4x512xf32>
    %108 = vector.shape_cast %13 : vector<1x512xi1> to vector<1x512xi1>
    %109 = vector.broadcast %108 : vector<1x512xi1> to vector<4x512xi1>
    %110 = arith.select %109, %107, %106 : vector<4x512xi1>, vector<4x512xf32>
    %c7 = arith.constant 7 : index
    %c0_71 = arith.constant 0 : index
    %c0_72 = arith.constant 0 : index
    %111 = vector.load %arg2[%c7, %c0_71, %c0_72] : memref<9x4x4xf32, #tpu.memory_space<vmem>>, vector<1x4x4xf32>
    %112 = vector.shape_cast %111 : vector<1x4x4xf32> to vector<4x4xf32>
    %cst_73 = arith.constant dense<0.000000e+00> : vector<4x512xf32>
    %113 = tpu.matmul %112, %110, %cst_73 {dimension_numbers = #tpu.dot_dimension_numbers<[1], [0], [0], [1], [0, 0, 1, 1], [], []>} : vector<4x4xf32>, vector<4x512xf32>, vector<4x512xf32> -> vector<4x512xf32>
    %114 = arith.addf %105, %113 : vector<4x512xf32>
    %c0_74 = arith.constant 0 : index
    %c145_75 = arith.constant 145 : index
    %115 = vector.load %arg8[%c0_74, %c145_75] : memref<4x768xf32, #tpu.memory_space<vmem>>, vector<4x512xf32>
    %c0_76 = arith.constant 0 : index
    %c143_77 = arith.constant 143 : index
    %116 = vector.load %arg8[%c0_76, %c143_77] : memref<4x768xf32, #tpu.memory_space<vmem>>, vector<4x512xf32>
    %117 = vector.shape_cast %9 : vector<1x512xi1> to vector<1x512xi1>
    %118 = vector.broadcast %117 : vector<1x512xi1> to vector<4x512xi1>
    %119 = arith.select %118, %116, %115 : vector<4x512xi1>, vector<4x512xf32>
    %c0_78 = arith.constant 0 : index
    %c113_79 = arith.constant 113 : index
    %120 = vector.load %arg8[%c0_78, %c113_79] : memref<4x768xf32, #tpu.memory_space<vmem>>, vector<4x512xf32>
    %121 = vector.shape_cast %13 : vector<1x512xi1> to vector<1x512xi1>
    %122 = vector.broadcast %121 : vector<1x512xi1> to vector<4x512xi1>
    %123 = arith.select %122, %120, %119 : vector<4x512xi1>, vector<4x512xf32>
    %124 = arith.andi %9, %13 : vector<1x512xi1>
    %c0_80 = arith.constant 0 : index
    %c111_81 = arith.constant 111 : index
    %125 = vector.load %arg8[%c0_80, %c111_81] : memref<4x768xf32, #tpu.memory_space<vmem>>, vector<4x512xf32>
    %126 = vector.shape_cast %124 : vector<1x512xi1> to vector<1x512xi1>
    %127 = vector.broadcast %126 : vector<1x512xi1> to vector<4x512xi1>
    %128 = arith.select %127, %125, %123 : vector<4x512xi1>, vector<4x512xf32>
    %c8 = arith.constant 8 : index
    %c0_82 = arith.constant 0 : index
    %c0_83 = arith.constant 0 : index
    %129 = vector.load %arg2[%c8, %c0_82, %c0_83] : memref<9x4x4xf32, #tpu.memory_space<vmem>>, vector<1x4x4xf32>
    %130 = vector.shape_cast %129 : vector<1x4x4xf32> to vector<4x4xf32>
    %cst_84 = arith.constant dense<0.000000e+00> : vector<4x512xf32>
    %131 = tpu.matmul %130, %128, %cst_84 {dimension_numbers = #tpu.dot_dimension_numbers<[1], [0], [0], [1], [0, 0, 1, 1], [], []>} : vector<4x4xf32>, vector<4x512xf32>, vector<4x512xf32> -> vector<4x512xf32>
    %132 = arith.addf %114, %131 : vector<4x512xf32>
    %c0_85 = arith.constant 0 : index
    %c0_86 = arith.constant 0 : index
    %133 = vector.load %arg3[%c0_85, %c0_86] : memref<4x1xf32, #tpu.memory_space<vmem>>, vector<4x1xf32>
    %134 = vector.broadcast %133 : vector<4x1xf32> to vector<4x512xf32>
    %135 = arith.addf %132, %134 : vector<4x512xf32>
    %cst_87 = arith.constant 0.000000e+00 : f32
    %136 = vector.broadcast %cst_87 : f32 to vector<4x512xf32>
    %137 = arith.cmpf oge, %135, %136 : vector<4x512xf32>
    %cst_88 = arith.constant 0.00999999977 : f32
    %138 = vector.broadcast %cst_88 : f32 to vector<4x512xf32>
    %139 = arith.mulf %138, %135 : vector<4x512xf32>
    %140 = arith.select %137, %135, %139 : vector<4x512xi1>, vector<4x512xf32>
    %c0_89 = arith.constant 0 : index
    %c128_90 = arith.constant 128 : index
    %141 = vector.load %arg9[%c0_89, %c128_90] : memref<4x768xf32, #tpu.memory_space<vmem>>, vector<4x512xf32>
    tpu.vector_store %arg9[%c0_89, %c128_90], %140 {strides = array<i32>} : memref<4x768xf32, #tpu.memory_space<vmem>>, vector<4x512xf32>,
    %c0_91 = arith.constant 0 : index
    %c111_92 = arith.constant 111 : index
    %142 = vector.load %arg9[%c0_91, %c111_92] : memref<4x768xf32, #tpu.memory_space<vmem>>, vector<4x512xf32>
    %c0_93 = arith.constant 0 : index
    %c113_94 = arith.constant 113 : index
    %143 = vector.load %arg9[%c0_93, %c113_94] : memref<4x768xf32, #tpu.memory_space<vmem>>, vector<4x512xf32>
    %144 = vector.shape_cast %7 : vector<1x512xi1> to vector<1x512xi1>
    %145 = vector.broadcast %144 : vector<1x512xi1> to vector<4x512xi1>
    %146 = arith.select %145, %143, %142 : vector<4x512xi1>, vector<4x512xf32>
    %c0_95 = arith.constant 0 : index
    %c143_96 = arith.constant 143 : index
    %147 = vector.load %arg9[%c0_95, %c143_96] : memref<4x768xf32, #tpu.memory_space<vmem>>, vector<4x512xf32>
    %148 = vector.shape_cast %11 : vector<1x512xi1> to vector<1x512xi1>
    %149 = vector.broadcast %148 : vector<1x512xi1> to vector<4x512xi1>
    %150 = arith.select %149, %147, %146 : vector<4x512xi1>, vector<4x512xf32>
    %151 = arith.andi %7, %11 : vector<1x512xi1>
    %c0_97 = arith.constant 0 : index
    %c145_98 = arith.constant 145 : index
    %152 = vector.load %arg9[%c0_97, %c145_98] : memref<4x768xf32, #tpu.memory_space<vmem>>, vector<4x512xf32>
    %153 = vector.shape_cast %151 : vector<1x512xi1> to vector<1x512xi1>
    %154 = vector.broadcast %153 : vector<1x512xi1> to vector<4x512xi1>
    %155 = arith.select %154, %152, %150 : vector<4x512xi1>, vector<4x512xf32>
    %c0_99 = arith.constant 0 : index
    %c0_100 = arith.constant 0 : index
    %c0_101 = arith.constant 0 : index
    %156 = vector.load %arg4[%c0_99, %c0_100, %c0_101] : memref<9x8x4xf32, #tpu.memory_space<vmem>>, vector<1x8x4xf32>
    %157 = vector.shape_cast %156 : vector<1x8x4xf32> to vector<8x4xf32>
    %cst_102 = arith.constant dense<0.000000e+00> : vector<8x512xf32>
    %158 = tpu.matmul %157, %155, %cst_102 {dimension_numbers = #tpu.dot_dimension_numbers<[1], [0], [0], [1], [0, 0, 1, 1], [], []>} : vector<8x4xf32>, vector<4x512xf32>, vector<8x512xf32> -> vector<8x512xf32>
    %c0_103 = arith.constant 0 : index
    %c112_104 = arith.constant 112 : index
    %159 = vector.load %arg9[%c0_103, %c112_104] : memref<4x768xf32, #tpu.memory_space<vmem>>, vector<4x512xf32>
    %c0_105 = arith.constant 0 : index
    %c144_106 = arith.constant 144 : index
    %160 = vector.load %arg9[%c0_105, %c144_106] : memref<4x768xf32, #tpu.memory_space<vmem>>, vector<4x512xf32>
    %161 = vector.shape_cast %11 : vector<1x512xi1> to vector<1x512xi1>
    %162 = vector.broadcast %161 : vector<1x512xi1> to vector<4x512xi1>
    %163 = arith.select %162, %160, %159 : vector<4x512xi1>, vector<4x512xf32>
    %c1_107 = arith.constant 1 : index
    %c0_108 = arith.constant 0 : index
    %c0_109 = arith.constant 0 : index
    %164 = vector.load %arg4[%c1_107, %c0_108, %c0_109] : memref<9x8x4xf32, #tpu.memory_space<vmem>>, vector<1x8x4xf32>
    %165 = vector.shape_cast %164 : vector<1x8x4xf32> to vector<8x4xf32>
    %cst_110 = arith.constant dense<0.000000e+00> : vector<8x512xf32>
    %166 = tpu.matmul %165, %163, %cst_110 {dimension_numbers = #tpu.dot_dimension_numbers<[1], [0], [0], [1], [0, 0, 1, 1], [], []>} : vector<8x4xf32>, vector<4x512xf32>, vector<8x512xf32> -> vector<8x512xf32>
    %167 = arith.addf %158, %166 : vector<8x512xf32>
    %c0_111 = arith.constant 0 : index
    %c113_112 = arith.constant 113 : index
    %168 = vector.load %arg9[%c0_111, %c113_112] : memref<4x768xf32, #tpu.memory_space<vmem>>, vector<4x512xf32>
    %c0_113 = arith.constant 0 : index
    %c111_114 = arith.constant 111 : index
    %169 = vector.load %arg9[%c0_113, %c111_114] : memref<4x768xf32, #tpu.memory_space<vmem>>, vector<4x512xf32>
    %170 = vector.shape_cast %9 : vector<1x512xi1> to vector<1x512xi1>
    %171 = vector.broadcast %170 : vector<1x512xi1> to vector<4x512xi1>
    %172 = arith.select %171, %169, %168 : vector<4x512xi1>, vector<4x512xf32>
    %c0_115 = arith.constant 0 : index
    %c145_116 = arith.constant 145 : index
    %173 = vector.load %arg9[%c0_115, %c145_116] : memref<4x768xf32, #tpu.memory_space<vmem>>, vector<4x512xf32>
    %174 = vector.shape_cast %11 : vector<1x512xi1> to vector<1x512xi1>
    %175 = vector.broadcast %174 : vector<1x512xi1> to vector<4x512xi1>
    %176 = arith.select %175, %173, %172 : vector<4x512xi1>, vector<4x512xf32>
    %177 = arith.andi %9, %11 : vector<1x512xi1>
    %c0_117 = arith.constant 0 : index
    %c143_118 = arith.constant 143 : index
    %178 = vector.load %arg9[%c0_117, %c143_118] : memref<4x768xf32, #tpu.memory_space<vmem>>, vector<4x512xf32>
    %179 = vector.shape_cast %177 : vector<1x512xi1> to vector<1x512xi1>
    %180 = vector.broadcast %179 : vector<1x512xi1> to vector<4x512xi1>
    %181 = arith.select %180, %178, %176 : vector<4x512xi1>, vector<4x512xf32>
    %c2_119 = arith.constant 2 : index
    %c0_120 = arith.constant 0 : index
    %c0_121 = arith.constant 0 : index
    %182 = vector.load %arg4[%c2_119, %c0_120, %c0_121] : memref<9x8x4xf32, #tpu.memory_space<vmem>>, vector<1x8x4xf32>
    %183 = vector.shape_cast %182 : vector<1x8x4xf32> to vector<8x4xf32>
    %cst_122 = arith.constant dense<0.000000e+00> : vector<8x512xf32>
    %184 = tpu.matmul %183, %181, %cst_122 {dimension_numbers = #tpu.dot_dimension_numbers<[1], [0], [0], [1], [0, 0, 1, 1], [], []>} : vector<8x4xf32>, vector<4x512xf32>, vector<8x512xf32> -> vector<8x512xf32>
    %185 = arith.addf %167, %184 : vector<8x512xf32>
    %c0_123 = arith.constant 0 : index
    %c127_124 = arith.constant 127 : index
    %186 = vector.load %arg9[%c0_123, %c127_124] : memref<4x768xf32, #tpu.memory_space<vmem>>, vector<4x512xf32>
    %c0_125 = arith.constant 0 : index
    %c129_126 = arith.constant 129 : index
    %187 = vector.load %arg9[%c0_125, %c129_126] : memref<4x768xf32, #tpu.memory_space<vmem>>, vector<4x512xf32>
    %188 = vector.shape_cast %7 : vector<1x512xi1> to vector<1x512xi1>
    %189 = vector.broadcast %188 : vector<1x512xi1> to vector<4x512xi1>
    %190 = arith.select %189, %187, %186 : vector<4x512xi1>, vector<4x512xf32>
    %c3_127 = arith.constant 3 : index
    %c0_128 = arith.constant 0 : index
    %c0_129 = arith.constant 0 : index
    %191 = vector.load %arg4[%c3_127, %c0_128, %c0_129] : memref<9x8x4xf32, #tpu.memory_space<vmem>>, vector<1x8x4xf32>
    %192 = vector.shape_cast %191 : vector<1x8x4xf32> to vector<8x4xf32>
    %cst_130 = arith.constant dense<0.000000e+00> : vector<8x512xf32>
    %193 = tpu.matmul %192, %190, %cst_130 {dimension_numbers = #tpu.dot_dimension_numbers<[1], [0], [0], [1], [0, 0, 1, 1], [], []>} : vector<8x4xf32>, vector<4x512xf32>, vector<8x512xf32> -> vector<8x512xf32>
    %194 = arith.addf %185, %193 : vector<8x512xf32>
    %c0_131 = arith.constant 0 : index
    %c128_132 = arith.constant 128 : index
    %195 = vector.load %arg9[%c0_131, %c128_132] : memref<4x768xf32, #tpu.memory_space<vmem>>, vector<4x512xf32>
    %c4_133 = arith.constant 4 : index
    %c0_134 = arith.constant 0 : index
    %c0_135 = arith.constant 0 : index
    %196 = vector.load %arg4[%c4_133, %c0_134, %c0_135] : memref<9x8x4xf32, #tpu.memory_space<vmem>>, vector<1x8x4xf32>
    %197 = vector.shape_cast %196 : vector<1x8x4xf32> to vector<8x4xf32>
    %cst_136 = arith.constant dense<0.000000e+00> : vector<8x512xf32>
    %198 = tpu.matmul %197, %195, %cst_136 {dimension_numbers = #tpu.dot_dimension_numbers<[1], [0], [0], [1], [0, 0, 1, 1], [], []>} : vector<8x4xf32>, vector<4x512xf32>, vector<8x512xf32> -> vector<8x512xf32>
    %199 = arith.addf %194, %198 : vector<8x512xf32>
    %c0_137 = arith.constant 0 : index
    %c129_138 = arith.constant 129 : index
    %200 = vector.load %arg9[%c0_137, %c129_138] : memref<4x768xf32, #tpu.memory_space<vmem>>, vector<4x512xf32>
    %c0_139 = arith.constant 0 : index
    %c127_140 = arith.constant 127 : index
    %201 = vector.load %arg9[%c0_139, %c127_140] : memref<4x768xf32, #tpu.memory_space<vmem>>, vector<4x512xf32>
    %202 = vector.shape_cast %9 : vector<1x512xi1> to vector<1x512xi1>
    %203 = vector.broadcast %202 : vector<1x512xi1> to vector<4x512xi1>
    %204 = arith.select %203, %201, %200 : vector<4x512xi1>, vector<4x512xf32>
    %c5_141 = arith.constant 5 : index
    %c0_142 = arith.constant 0 : index
    %c0_143 = arith.constant 0 : index
    %205 = vector.load %arg4[%c5_141, %c0_142, %c0_143] : memref<9x8x4xf32, #tpu.memory_space<vmem>>, vector<1x8x4xf32>
    %206 = vector.shape_cast %205 : vector<1x8x4xf32> to vector<8x4xf32>
    %cst_144 = arith.constant dense<0.000000e+00> : vector<8x512xf32>
    %207 = tpu.matmul %206, %204, %cst_144 {dimension_numbers = #tpu.dot_dimension_numbers<[1], [0], [0], [1], [0, 0, 1, 1], [], []>} : vector<8x4xf32>, vector<4x512xf32>, vector<8x512xf32> -> vector<8x512xf32>
    %208 = arith.addf %199, %207 : vector<8x512xf32>
    %c0_145 = arith.constant 0 : index
    %c143_146 = arith.constant 143 : index
    %209 = vector.load %arg9[%c0_145, %c143_146] : memref<4x768xf32, #tpu.memory_space<vmem>>, vector<4x512xf32>
    %c0_147 = arith.constant 0 : index
    %c145_148 = arith.constant 145 : index
    %210 = vector.load %arg9[%c0_147, %c145_148] : memref<4x768xf32, #tpu.memory_space<vmem>>, vector<4x512xf32>
    %211 = vector.shape_cast %7 : vector<1x512xi1> to vector<1x512xi1>
    %212 = vector.broadcast %211 : vector<1x512xi1> to vector<4x512xi1>
    %213 = arith.select %212, %210, %209 : vector<4x512xi1>, vector<4x512xf32>
    %c0_149 = arith.constant 0 : index
    %c111_150 = arith.constant 111 : index
    %214 = vector.load %arg9[%c0_149, %c111_150] : memref<4x768xf32, #tpu.memory_space<vmem>>, vector<4x512xf32>
    %215 = vector.shape_cast %13 : vector<1x512xi1> to vector<1x512xi1>
    %216 = vector.broadcast %215 : vector<1x512xi1> to vector<4x512xi1>
    %217 = arith.select %216, %214, %213 : vector<4x512xi1>, vector<4x512xf32>
    %218 = arith.andi %7, %13 : vector<1x512xi1>
    %c0_151 = arith.constant 0 : index
    %c113_152 = arith.constant 113 : index
    %219 = vector.load %arg9[%c0_151, %c113_152] : memref<4x768xf32, #tpu.memory_space<vmem>>, vector<4x512xf32>
    %220 = vector.shape_cast %218 : vector<1x512xi1> to vector<1x512xi1>
    %221 = vector.broadcast %220 : vector<1x512xi1> to vector<4x512xi1>
    %222 = arith.select %221, %219, %217 : vector<4x512xi1>, vector<4x512xf32>
    %c6_153 = arith.constant 6 : index
    %c0_154 = arith.constant 0 : index
    %c0_155 = arith.constant 0 : index
    %223 = vector.load %arg4[%c6_153, %c0_154, %c0_155] : memref<9x8x4xf32, #tpu.memory_space<vmem>>, vector<1x8x4xf32>
    %224 = vector.shape_cast %223 : vector<1x8x4xf32> to vector<8x4xf32>
    %cst_156 = arith.constant dense<0.000000e+00> : vector<8x512xf32>
    %225 = tpu.matmul %224, %222, %cst_156 {dimension_numbers = #tpu.dot_dimension_numbers<[1], [0], [0], [1], [0, 0, 1, 1], [], []>} : vector<8x4xf32>, vector<4x512xf32>, vector<8x512xf32> -> vector<8x512xf32>
    %226 = arith.addf %208, %225 : vector<8x512xf32>
    %c0_157 = arith.constant 0 : index
    %c144_158 = arith.constant 144 : index
    %227 = vector.load %arg9[%c0_157, %c144_158] : memref<4x768xf32, #tpu.memory_space<vmem>>, vector<4x512xf32>
    %c0_159 = arith.constant 0 : index
    %c112_160 = arith.constant 112 : index
    %228 = vector.load %arg9[%c0_159, %c112_160] : memref<4x768xf32, #tpu.memory_space<vmem>>, vector<4x512xf32>
    %229 = vector.shape_cast %13 : vector<1x512xi1> to vector<1x512xi1>
    %230 = vector.broadcast %229 : vector<1x512xi1> to vector<4x512xi1>
    %231 = arith.select %230, %228, %227 : vector<4x512xi1>, vector<4x512xf32>
    %c7_161 = arith.constant 7 : index
    %c0_162 = arith.constant 0 : index
    %c0_163 = arith.constant 0 : index
    %232 = vector.load %arg4[%c7_161, %c0_162, %c0_163] : memref<9x8x4xf32, #tpu.memory_space<vmem>>, vector<1x8x4xf32>
    %233 = vector.shape_cast %232 : vector<1x8x4xf32> to vector<8x4xf32>
    %cst_164 = arith.constant dense<0.000000e+00> : vector<8x512xf32>
    %234 = tpu.matmul %233, %231, %cst_164 {dimension_numbers = #tpu.dot_dimension_numbers<[1], [0], [0], [1], [0, 0, 1, 1], [], []>} : vector<8x4xf32>, vector<4x512xf32>, vector<8x512xf32> -> vector<8x512xf32>
    %235 = arith.addf %226, %234 : vector<8x512xf32>
    %c0_165 = arith.constant 0 : index
    %c145_166 = arith.constant 145 : index
    %236 = vector.load %arg9[%c0_165, %c145_166] : memref<4x768xf32, #tpu.memory_space<vmem>>, vector<4x512xf32>
    %c0_167 = arith.constant 0 : index
    %c143_168 = arith.constant 143 : index
    %237 = vector.load %arg9[%c0_167, %c143_168] : memref<4x768xf32, #tpu.memory_space<vmem>>, vector<4x512xf32>
    %238 = vector.shape_cast %9 : vector<1x512xi1> to vector<1x512xi1>
    %239 = vector.broadcast %238 : vector<1x512xi1> to vector<4x512xi1>
    %240 = arith.select %239, %237, %236 : vector<4x512xi1>, vector<4x512xf32>
    %c0_169 = arith.constant 0 : index
    %c113_170 = arith.constant 113 : index
    %241 = vector.load %arg9[%c0_169, %c113_170] : memref<4x768xf32, #tpu.memory_space<vmem>>, vector<4x512xf32>
    %242 = vector.shape_cast %13 : vector<1x512xi1> to vector<1x512xi1>
    %243 = vector.broadcast %242 : vector<1x512xi1> to vector<4x512xi1>
    %244 = arith.select %243, %241, %240 : vector<4x512xi1>, vector<4x512xf32>
    %245 = arith.andi %9, %13 : vector<1x512xi1>
    %c0_171 = arith.constant 0 : index
    %c111_172 = arith.constant 111 : index
    %246 = vector.load %arg9[%c0_171, %c111_172] : memref<4x768xf32, #tpu.memory_space<vmem>>, vector<4x512xf32>
    %247 = vector.shape_cast %245 : vector<1x512xi1> to vector<1x512xi1>
    %248 = vector.broadcast %247 : vector<1x512xi1> to vector<4x512xi1>
    %249 = arith.select %248, %246, %244 : vector<4x512xi1>, vector<4x512xf32>
    %c8_173 = arith.constant 8 : index
    %c0_174 = arith.constant 0 : index
    %c0_175 = arith.constant 0 : index
    %250 = vector.load %arg4[%c8_173, %c0_174, %c0_175] : memref<9x8x4xf32, #tpu.memory_space<vmem>>, vector<1x8x4xf32>
    %251 = vector.shape_cast %250 : vector<1x8x4xf32> to vector<8x4xf32>
    %cst_176 = arith.constant dense<0.000000e+00> : vector<8x512xf32>
    %252 = tpu.matmul %251, %249, %cst_176 {dimension_numbers = #tpu.dot_dimension_numbers<[1], [0], [0], [1], [0, 0, 1, 1], [], []>} : vector<8x4xf32>, vector<4x512xf32>, vector<8x512xf32> -> vector<8x512xf32>
    %253 = arith.addf %235, %252 : vector<8x512xf32>
    %c0_177 = arith.constant 0 : index
    %c0_178 = arith.constant 0 : index
    %254 = vector.load %arg5[%c0_177, %c0_178] : memref<8x1xf32, #tpu.memory_space<vmem>>, vector<8x1xf32>
    %255 = vector.broadcast %254 : vector<8x1xf32> to vector<8x512xf32>
    %256 = arith.addf %253, %255 : vector<8x512xf32>
    %c0_179 = arith.constant 0 : index
    %c0_180 = arith.constant 0 : index
    %257 = vector.load %arg6[%c0_179, %c0_180] : memref<8x4xf32, #tpu.memory_space<vmem>>, vector<8x4xf32>
    %cst_181 = arith.constant dense<0.000000e+00> : vector<8x512xf32>
    %258 = tpu.matmul %257, %14, %cst_181 {dimension_numbers = #tpu.dot_dimension_numbers<[1], [0], [0], [1], [0, 0, 1, 1], [], []>} : vector<8x4xf32>, vector<4x512xf32>, vector<8x512xf32> -> vector<8x512xf32>
    %259 = arith.addf %258, %256 : vector<8x512xf32>
    %c0_182 = arith.constant 0 : index
    %c0_183 = arith.constant 0 : index
    %260 = vector.load %arg7[%c0_182, %c0_183] : memref<8x512xf32, #tpu.memory_space<vmem>>, vector<8x512xf32>
    tpu.vector_store %arg7[%c0_182, %c0_183], %259 {strides = array<i32>} : memref<8x512xf32, #tpu.memory_space<vmem>>, vector<8x512xf32>,
    return
  }
}

</mosaic_0001>

<llo_original>
// kernel: tpu_custom_call.1
$region0: #{tpu_custom_call.1}
  #allocation0 [shape = 'u32[]', space=smem, size = 0x4, offset = 0x4, fixed_abs, tag = 'smem constant byte address 0x4 - core index']
  #allocation1 [shape = 'u32[144,128]{1,0:T(1,128)}', space=vmem, size = 0x12000, scoped, tag = 'internal scratch']
  #allocation2 [shape = 'f32[4,768]{1,0:T(4,128)}', space=vmem, size = 0x3000, scoped, tag = 'scratch operand']
  #allocation3 [shape = 'f32[4,768]{1,0:T(4,128)}', space=vmem, size = 0x3000, scoped, tag = 'scratch operand']
  %s0 = inlined_call_operand.vmem [shape: f32[4,512], index: 0, kind: input, shape index: {}]
  %s1 = inlined_call_operand.vmem [shape: s32[2,512], index: 1, kind: input, shape index: {}]
  %s2 = inlined_call_operand.vmem [shape: f32[9,4,4], index: 2, kind: input, shape index: {}]
  %s3 = inlined_call_operand.vmem [shape: f32[4,1], index: 3, kind: input, shape index: {}]
  %s4 = inlined_call_operand.vmem [shape: f32[9,8,4], index: 4, kind: input, shape index: {}]
  %s5 = inlined_call_operand.vmem [shape: f32[8,1], index: 5, kind: input, shape index: {}]
  %s6 = inlined_call_operand.vmem [shape: f32[8,4], index: 6, kind: input, shape index: {}]
  %s7 = inlined_call_operand.hbm [shape: f32[8,512], index: 7, kind: output, shape index: {}]
  %s8 = sld [smem:[#allocation0]]
  $region38: #{tpu_custom_call.1} parent=0
    _
  %s10 = ssub.s32 1, %s8
  %s11 = scalar_select 0, %s10, %s8
  $region1: #{tpu_custom_call.1} parent=0
    #allocation4 [shape = 'u8[16384]{0}', space=vmem, size = 0x4000, scoped, tag = 'output window, operand 0, single buffered']
    #allocation5 [shape = 's32[1]{0}', space=sflag, size = 0x4, scoped, tag = 'scoped memory for tpu_custom_call.1']
    %12 = vsyncpa [#allocation5], 0
    // Predicated region
    $region2: #{tpu_custom_call.1} parent=1 // pred_check
      _
    $region3: #{tpu_custom_call.1} parent=1 // pred_check_branch
      %14 = sbr.rel (0) target = $region5
    $region4: #{tpu_custom_call.1} parent=1 // pred_region
      _
    $region5: #{tpu_custom_call.1} parent=1 // pred_fallthru
      _
    // Predicated region
    $region6: #{tpu_custom_call.1} parent=1 // pred_check
      _
    $region7: #{tpu_custom_call.1} parent=1 // pred_check_branch
      %16 = sbr.rel (0) target = $region9
    $region8: #{tpu_custom_call.1} parent=1 // pred_region
      _
    $region9: #{tpu_custom_call.1} parent=1 // pred_fallthru
      _
    // Predicated region
    $region10: #{tpu_custom_call.1} parent=1 // pred_check
      _
    $region11: #{tpu_custom_call.1} parent=1 // pred_check_branch
      %18 = sbr.rel (0) target = $region13
    $region12: #{tpu_custom_call.1} parent=1 // pred_region
      _
    $region13: #{tpu_custom_call.1} parent=1 // pred_fallthru
      _
    // Predicated region
    $region14: #{tpu_custom_call.1} parent=1 // pred_check
      _
    $region15: #{tpu_custom_call.1} parent=1 // pred_check_branch
      %20 = sbr.rel (0) target = $region17
    $region16: #{tpu_custom_call.1} parent=1 // pred_region
      _
    $region17: #{tpu_custom_call.1} parent=1 // pred_fallthru
      _
    // Predicated region
    $region18: #{tpu_custom_call.1} parent=1 // pred_check
      _
    $region19: #{tpu_custom_call.1} parent=1 // pred_check_branch
      %22 = sbr.rel (0) target = $region21
    $region20: #{tpu_custom_call.1} parent=1 // pred_region
      _
    $region21: #{tpu_custom_call.1} parent=1 // pred_fallthru
      _
    // Predicated region
    $region22: #{tpu_custom_call.1} parent=1 // pred_check
      _
    $region23: #{tpu_custom_call.1} parent=1 // pred_check_branch
      %24 = sbr.rel (0) target = $region25
    $region24: #{tpu_custom_call.1} parent=1 // pred_region
      _
    $region25: #{tpu_custom_call.1} parent=1 // pred_fallthru
      _
    // Predicated region
    $region26: #{tpu_custom_call.1} parent=1 // pred_check
      _
    $region27: #{tpu_custom_call.1} parent=1 // pred_check_branch
      %26 = sbr.rel (0) target = $region29
    $region28: #{tpu_custom_call.1} parent=1 // pred_region
      _
    $region29: #{tpu_custom_call.1} parent=1 // pred_fallthru
      _
    %27 = vst [vmem:[#allocation2] sm:$0xff] 0.0
    %28 = vst [vmem:[#allocation2 + $0x8] sm:$0xff] 0.0
    %29 = vst [vmem:[#allocation2 + $0x10] sm:$0xff] 0.0
    %30 = vst [vmem:[#allocation3] sm:$0xff] 0.0
    %31 = vst [vmem:[#allocation3 + $0x8] sm:$0xff] 0.0
    %32 = vst [vmem:[#allocation3 + $0x10] sm:$0xff] 0.0
    %v33 = vld [vmem:[%s1] ss:$2 sm:$0xf]
    %s34 = scalar_lea.vmem %s1, 1
    %v35 = vld [vmem:[%s34] ss:$2 sm:$0xf]
    %vm36 = vcmp.eq.s32.totalorder %v33, 0
    %vm37 = vcmp.eq.s32.totalorder %v33, 15
    %vm38 = vcmp.eq.s32.totalorder %v35, 0
    %vm39 = vcmp.eq.s32.totalorder %v35, 15
    %v40 = vld [vmem:[%s0] sm:$0xff]
    %v41 = vld [vmem:[%s0 + $0x8] sm:$0xff]
    %vm42 = vcmp.ge.f32.partialorder %v40, 0.0
    %vm43 = vcmp.ge.f32.partialorder %v41, 0.0
    %v44 = vmul.f32 %v40, 0.01
    %v45 = vmul.f32 %v41, 0.01
    %v46 = vsel %vm42, %v40, %v44
    %v47 = vsel %vm43, %v41, %v45
    %48 = vst [vmem:[#allocation2 + $0x4] sm:$0xff] %v46
    %49 = vst [vmem:[#allocation2 + $0xc] sm:$0xff] %v47
    %v50 = vld [vmem:[#allocation2] sm:$0xff]
    %v51 = vld [vmem:[#allocation2 + $0x8] sm:$0xff]
    %v52 = vld [vmem:[#allocation2 + $0x10] sm:$0xf]
    %v53 = vsel %vm36, 1, 0
    %v54 = vlaneseq
    %v55 = vshrl.u32 %v54, 7
    %v56 = vsub.s32 0, %v55
    %v57 = vrot.slane %v53, %v56
    %v58 = vlaneseq
    %v59 = vshrl.u32 %v58, 7
    %v60 = vsub.s32 1, %v59
    %v61 = vrot.slane %v53, %v60
    %v62 = vlaneseq
    %v63 = vshrl.u32 %v62, 7
    %v64 = vsub.s32 2, %v63
    %v65 = vrot.slane %v53, %v64
    %v66 = vlaneseq
    %v67 = vshrl.u32 %v66, 7
    %v68 = vsub.s32 3, %v67
    %v69 = vrot.slane %v53, %v68
    %vm70 = vcmp.eq.s32.totalorder %v57, 1
    %vm71 = vcmp.eq.s32.totalorder %v61, 1
    %vm72 = vcmp.eq.s32.totalorder %v65, 1
    %vm73 = vcmp.eq.s32.totalorder %v69, 1
    %v77 = vcombine.high %v50, %v50
    %v78 = vcombine.high %v51, %v51
    %79 = vrot.lane.b32.xlu0 %v50, 15
    %v80 = vpop.permute.xlu0 %79
    %81 = vrot.lane.b32.xlu0 %v77, 15
    %v82 = vpop.permute.xlu0 %81
    %83 = vrot.lane.b32.xlu0 %v51, 15
    %v84 = vpop.permute.xlu0 %83
    %85 = vrot.lane.b32.xlu0 %v78, 15
    %v86 = vpop.permute.xlu0 %85
    %87 = vrot.lane.b32.xlu0 %v52, 15
    %v88 = vpop.permute.xlu0 %87
    %vm89 = vcmask 121856
    %v90 = vsel %vm89, %v80, %v82
    %v91 = vsel %vm89, %v82, %v84
    %v92 = vsel %vm89, %v84, %v86
    %v93 = vsel %vm89, %v86, %v88
    %98 = vrot.lane.b32.xlu0 %v50, 17
    %v99 = vpop.permute.xlu0 %98
    %100 = vrot.lane.b32.xlu0 %v77, 17
    %v101 = vpop.permute.xlu0 %100
    %102 = vrot.lane.b32.xlu0 %v51, 17
    %v103 = vpop.permute.xlu0 %102
    %104 = vrot.lane.b32.xlu0 %v78, 17
    %v105 = vpop.permute.xlu0 %104
    %106 = vrot.lane.b32.xlu0 %v52, 17
    %v107 = vpop.permute.xlu0 %106
    %vm108 = vcmask 138240
    %v109 = vsel %vm108, %v99, %v101
    %v110 = vsel %vm108, %v101, %v103
    %v111 = vsel %vm108, %v103, %v105
    %v112 = vsel %vm108, %v105, %v107
    %v117 = vsel %vm70, %v90, %v109
    %v118 = vsel %vm71, %v91, %v110
    %v119 = vsel %vm72, %v92, %v111
    %v120 = vsel %vm73, %v93, %v112
    %v121 = vld [vmem:[#allocation2 + $0x4] sm:$0xff]
    %v122 = vld [vmem:[#allocation2 + $0xc] sm:$0xff]
    %v123 = vld [vmem:[#allocation2 + $0x14] sm:$0xf]
    %v124 = vsel %vm38, 1, 0
    %v125 = vlaneseq
    %v126 = vshrl.u32 %v125, 7
    %v127 = vsub.s32 0, %v126
    %v128 = vrot.slane %v124, %v127
    %v129 = vlaneseq
    %v130 = vshrl.u32 %v129, 7
    %v131 = vsub.s32 1, %v130
    %v132 = vrot.slane %v124, %v131
    %v133 = vlaneseq
    %v134 = vshrl.u32 %v133, 7
    %v135 = vsub.s32 2, %v134
    %v136 = vrot.slane %v124, %v135
    %v137 = vlaneseq
    %v138 = vshrl.u32 %v137, 7
    %v139 = vsub.s32 3, %v138
    %v140 = vrot.slane %v124, %v139
    %vm141 = vcmp.eq.s32.totalorder %v128, 1
    %vm142 = vcmp.eq.s32.totalorder %v132, 1
    %vm143 = vcmp.eq.s32.totalorder %v136, 1
    %vm144 = vcmp.eq.s32.totalorder %v140, 1
    %v148 = vcombine.high %v121, %v121
    %v149 = vcombine.high %v122, %v122
    %150 = vrot.lane.b32.xlu0 %v121, 113
    %v151 = vpop.permute.xlu0 %150
    %152 = vrot.lane.b32.xlu0 %v148, 113
    %v153 = vpop.permute.xlu0 %152
    %154 = vrot.lane.b32.xlu0 %v122, 113
    %v155 = vpop.permute.xlu0 %154
    %156 = vrot.lane.b32.xlu0 %v149, 113
    %v157 = vpop.permute.xlu0 %156
    %158 = vrot.lane.b32.xlu0 %v123, 113
    %v159 = vpop.permute.xlu0 %158
    %vm160 = vcmask 924672
    %v161 = vsel %vm160, %v151, %v153
    %v162 = vsel %vm160, %v153, %v155
    %v163 = vsel %vm160, %v155, %v157
    %v164 = vsel %vm160, %v157, %v159
    %v169 = vsel %vm141, %v161, %v117
    %v170 = vsel %vm142, %v162, %v118
    %v171 = vsel %vm143, %v163, %v119
    %v172 = vsel %vm144, %v164, %v120
    %vm173 = vmand %vm36, %vm38
    %v174 = vsel %vm173, 1, 0
    %v175 = vlaneseq
    %v176 = vshrl.u32 %v175, 7
    %v177 = vsub.s32 0, %v176
    %v178 = vrot.slane %v174, %v177
    %v179 = vlaneseq
    %v180 = vshrl.u32 %v179, 7
    %v181 = vsub.s32 1, %v180
    %v182 = vrot.slane %v174, %v181
    %v183 = vlaneseq
    %v184 = vshrl.u32 %v183, 7
    %v185 = vsub.s32 2, %v184
    %v186 = vrot.slane %v174, %v185
    %v187 = vlaneseq
    %v188 = vshrl.u32 %v187, 7
    %v189 = vsub.s32 3, %v188
    %v190 = vrot.slane %v174, %v189
    %vm191 = vcmp.eq.s32.totalorder %v178, 1
    %vm192 = vcmp.eq.s32.totalorder %v182, 1
    %vm193 = vcmp.eq.s32.totalorder %v186, 1
    %vm194 = vcmp.eq.s32.totalorder %v190, 1
    %195 = vrot.lane.b32.xlu0 %v121, 111
    %v196 = vpop.permute.xlu0 %195
    %197 = vrot.lane.b32.xlu0 %v148, 111
    %v198 = vpop.permute.xlu0 %197
    %199 = vrot.lane.b32.xlu0 %v122, 111
    %v200 = vpop.permute.xlu0 %199
    %201 = vrot.lane.b32.xlu0 %v149, 111
    %v202 = vpop.permute.xlu0 %201
    %203 = vrot.lane.b32.xlu0 %v123, 111
    %v204 = vpop.permute.xlu0 %203
    %vm205 = vcmask 908288
    %v206 = vsel %vm205, %v196, %v198
    %v207 = vsel %vm205, %v198, %v200
    %v208 = vsel %vm205, %v200, %v202
    %v209 = vsel %vm205, %v202, %v204
    %v214 = vsel %vm191, %v206, %v169
    %v215 = vsel %vm192, %v207, %v170
    %v216 = vsel %vm193, %v208, %v171
    %v217 = vsel %vm194, %v209, %v172
    %v218 = vld [vmem:[%s2] sm:$0xf]
    %219 = vrot.lane.b32.xlu0 %v121, 112
    %v220 = vpop.permute.xlu0 %219
    %221 = vrot.lane.b32.xlu0 %v148, 112
    %v222 = vpop.permute.xlu0 %221
    %223 = vrot.lane.b32.xlu0 %v122, 112
    %v224 = vpop.permute.xlu0 %223
    %225 = vrot.lane.b32.xlu0 %v149, 112
    %v226 = vpop.permute.xlu0 %225
    %227 = vrot.lane.b32.xlu0 %v123, 112
    %v228 = vpop.permute.xlu0 %227
    %vm229 = vcmask 916480
    %v230 = vsel %vm229, %v220, %v222
    %v231 = vsel %vm229, %v222, %v224
    %v232 = vsel %vm229, %v224, %v226
    %v233 = vsel %vm229, %v226, %v228
    %238 = vrot.lane.b32.xlu0 %v50, 16
    %v239 = vpop.permute.xlu0 %238
    %240 = vrot.lane.b32.xlu0 %v77, 16
    %v241 = vpop.permute.xlu0 %240
    %242 = vrot.lane.b32.xlu0 %v51, 16
    %v243 = vpop.permute.xlu0 %242
    %244 = vrot.lane.b32.xlu0 %v78, 16
    %v245 = vpop.permute.xlu0 %244
    %246 = vrot.lane.b32.xlu0 %v52, 16
    %v247 = vpop.permute.xlu0 %246
    %vm248 = vcmask 130048
    %v249 = vsel %vm248, %v239, %v241
    %v250 = vsel %vm248, %v241, %v243
    %v251 = vsel %vm248, %v243, %v245
    %v252 = vsel %vm248, %v245, %v247
    %v257 = vsel %vm141, %v230, %v249
    %v258 = vsel %vm142, %v231, %v250
    %v259 = vsel %vm143, %v232, %v251
    %v260 = vsel %vm144, %v233, %v252
    %s261 = scalar_lea.vmem %s2, 4
    %v262 = vld [vmem:[%s261] sm:$0xf]
    %vm263 = vcmask 31744
    %v265 = vsel %vm263, %v262, 0
    %vm267 = vcmask 1043456
    %v269 = vsel %vm267, %v257, 0
    %v272 = vsel %vm267, %v258, 0
    %v275 = vsel %vm267, %v259, 0
    %v278 = vsel %vm267, %v260, 0
    %280 = vmatprep.subr.mxu0 %v272
    %281 = vmatpush1.msra.mxu0 %v269
    %282 = vmatprep.subr.mxu0 0.0
    %283 = vmatpush1.msra.mxu0 0.0
    %284 = vmatprep.subr.mxu0 0.0
    %285 = vmatpush1.msra.mxu0 0.0
    %286 = vmatprep.subr.mxu0 0.0
    %287 = vmatpush1.msra.mxu0 0.0
    %288 = vmatprep.subr.mxu0 0.0
    %289 = vmatpush1.msra.mxu0 0.0
    %290 = vmatprep.subr.mxu0 0.0
    %291 = vmatpush1.msra.mxu0 0.0
    %292 = vmatprep.subr.mxu0 0.0
    %293 = vmatpush1.msra.mxu0 0.0
    %294 = vmatprep.subr.mxu0 0.0
    %295 = vmatpush1.msra.mxu0 0.0
    %296 = vmatprep.subr.mxu0 0.0
    %297 = vmatpush1.msra.mxu0 0.0
    %298 = vmatprep.subr.mxu0 0.0
    %299 = vmatpush1.msra.mxu0 0.0
    %300 = vmatprep.subr.mxu0 0.0
    %301 = vmatpush1.msra.mxu0 0.0
    %302 = vmatprep.subr.mxu0 0.0
    %303 = vmatpush1.msra.mxu0 0.0
    %304 = vmatprep.subr.mxu0 0.0
    %305 = vmatpush1.msra.mxu0 0.0
    %306 = vmatprep.subr.mxu0 0.0
    %307 = vmatpush1.msra.mxu0 0.0
    %308 = vmatprep.subr.mxu0 0.0
    %309 = vmatpush1.msra.mxu0 0.0
    %310 = vmatprep.subr.mxu0 0.0
    %311 = vmatpush1.msra.mxu0 0.0
    %312 = vmatprep.subr.mxu0 0.0
    %313 = vmatpush1.msra.mxu0 0.0
    %314 = vmatprep.subr.mxu0 0.0
    %315 = vmatpush1.msra.mxu0 0.0
    %316 = vmatprep.subr.mxu0 0.0
    %317 = vmatpush1.msra.mxu0 0.0
    %318 = vmatprep.subr.mxu0 0.0
    %319 = vmatpush1.msra.mxu0 0.0
    %320 = vmatprep.subr.mxu0 0.0
    %321 = vmatpush1.msra.mxu0 0.0
    %322 = vmatprep.subr.mxu0 0.0
    %323 = vmatpush1.msra.mxu0 0.0
    %324 = vmatprep.subr.mxu0 0.0
    %325 = vmatpush1.msra.mxu0 0.0
    %326 = vmatprep.subr.mxu0 0.0
    %327 = vmatpush1.msra.mxu0 0.0
    %328 = vmatprep.subr.mxu0 0.0
    %329 = vmatpush1.msra.mxu0 0.0
    %330 = vmatprep.subr.mxu0 0.0
    %331 = vmatpush1.msra.mxu0 0.0
    %332 = vmatprep.subr.mxu0 0.0
    %333 = vmatpush1.msra.mxu0 0.0
    %334 = vmatprep.subr.mxu0 0.0
    %335 = vmatpush1.msra.mxu0 0.0
    %336 = vmatprep.subr.mxu0 0.0
    %337 = vmatpush1.msra.mxu0 0.0
    %338 = vmatprep.subr.mxu0 0.0
    %339 = vmatpush1.msra.mxu0 0.0
    %340 = vmatprep.subr.mxu0 0.0
    %341 = vmatpush1.msra.mxu0 0.0
    %342 = vmatprep.subr.mxu0 0.0
    %343 = vmatpush1.msra.mxu0 0.0
    %344 = vmatprep.mubr.f32.mxu0 0.0
    %345 = vmatmul.mubr.f32.gmra.mrb[0].mxu0 %v265
    %v346 = vpop.f32.mrb[0].mxu0
    %v347 = vadd.f32 0.0, %v346
    %v348 = vpop.f32.mrb[0].mxu0
    %v349 = vadd.f32 0.0, %v348
    %350 = vdwg.mxu0
    %351 = vmatprep.subr.mxu0 %v278
    %352 = vmatpush1.msra.mxu0 %v275
    %353 = vmatprep.subr.mxu0 0.0
    %354 = vmatpush1.msra.mxu0 0.0
    %355 = vmatprep.subr.mxu0 0.0
    %356 = vmatpush1.msra.mxu0 0.0
    %357 = vmatprep.subr.mxu0 0.0
    %358 = vmatpush1.msra.mxu0 0.0
    %359 = vmatprep.subr.mxu0 0.0
    %360 = vmatpush1.msra.mxu0 0.0
    %361 = vmatprep.subr.mxu0 0.0
    %362 = vmatpush1.msra.mxu0 0.0
    %363 = vmatprep.subr.mxu0 0.0
    %364 = vmatpush1.msra.mxu0 0.0
    %365 = vmatprep.subr.mxu0 0.0
    %366 = vmatpush1.msra.mxu0 0.0
    %367 = vmatprep.subr.mxu0 0.0
    %368 = vmatpush1.msra.mxu0 0.0
    %369 = vmatprep.subr.mxu0 0.0
    %370 = vmatpush1.msra.mxu0 0.0
    %371 = vmatprep.subr.mxu0 0.0
    %372 = vmatpush1.msra.mxu0 0.0
    %373 = vmatprep.subr.mxu0 0.0
    %374 = vmatpush1.msra.mxu0 0.0
    %375 = vmatprep.subr.mxu0 0.0
    %376 = vmatpush1.msra.mxu0 0.0
    %377 = vmatprep.subr.mxu0 0.0
    %378 = vmatpush1.msra.mxu0 0.0
    %379 = vmatprep.subr.mxu0 0.0
    %380 = vmatpush1.msra.mxu0 0.0
    %381 = vmatprep.subr.mxu0 0.0
    %382 = vmatpush1.msra.mxu0 0.0
    %383 = vmatprep.subr.mxu0 0.0
    %384 = vmatpush1.msra.mxu0 0.0
    %385 = vmatprep.subr.mxu0 0.0
    %386 = vmatpush1.msra.mxu0 0.0
    %387 = vmatprep.subr.mxu0 0.0
    %388 = vmatpush1.msra.mxu0 0.0
    %389 = vmatprep.subr.mxu0 0.0
    %390 = vmatpush1.msra.mxu0 0.0
    %391 = vmatprep.subr.mxu0 0.0
    %392 = vmatpush1.msra.mxu0 0.0
    %393 = vmatprep.subr.mxu0 0.0
    %394 = vmatpush1.msra.mxu0 0.0
    %395 = vmatprep.subr.mxu0 0.0
    %396 = vmatpush1.msra.mxu0 0.0
    %397 = vmatprep.subr.mxu0 0.0
    %398 = vmatpush1.msra.mxu0 0.0
    %399 = vmatprep.subr.mxu0 0.0
    %400 = vmatpush1.msra.mxu0 0.0
    %401 = vmatprep.subr.mxu0 0.0
    %402 = vmatpush1.msra.mxu0 0.0
    %403 = vmatprep.subr.mxu0 0.0
    %404 = vmatpush1.msra.mxu0 0.0
    %405 = vmatprep.subr.mxu0 0.0
    %406 = vmatpush1.msra.mxu0 0.0
    %407 = vmatprep.subr.mxu0 0.0
    %408 = vmatpush1.msra.mxu0 0.0
    %409 = vmatprep.subr.mxu0 0.0
    %410 = vmatpush1.msra.mxu0 0.0
    %411 = vmatprep.subr.mxu0 0.0
    %412 = vmatpush1.msra.mxu0 0.0
    %413 = vmatprep.subr.mxu0 0.0
    %414 = vmatpush1.msra.mxu0 0.0
    %415 = vmatprep.mubr.f32.mxu0 0.0
    %416 = vmatmul.mubr.f32.gmra.mrb[0].mxu0 %v265
    %v417 = vpop.f32.mrb[0].mxu0
    %v418 = vadd.f32 0.0, %v417
    %v419 = vpop.f32.mrb[0].mxu0
    %v420 = vadd.f32 0.0, %v419
    %421 = vdwg.mxu0
    %v423 = vsel %vm263, %v218, 0
    %v426 = vsel %vm267, %v214, 0
    %v429 = vsel %vm267, %v215, 0
    %v432 = vsel %vm267, %v216, 0
    %v435 = vsel %vm267, %v217, 0
    %437 = vmatprep.subr.mxu0 %v429
    %438 = vmatpush1.msra.mxu0 %v426
    %439 = vmatprep.subr.mxu0 0.0
    %440 = vmatpush1.msra.mxu0 0.0
    %441 = vmatprep.subr.mxu0 0.0
    %442 = vmatpush1.msra.mxu0 0.0
    %443 = vmatprep.subr.mxu0 0.0
    %444 = vmatpush1.msra.mxu0 0.0
    %445 = vmatprep.subr.mxu0 0.0
    %446 = vmatpush1.msra.mxu0 0.0
    %447 = vmatprep.subr.mxu0 0.0
    %448 = vmatpush1.msra.mxu0 0.0
    %449 = vmatprep.subr.mxu0 0.0
    %450 = vmatpush1.msra.mxu0 0.0
    %451 = vmatprep.subr.mxu0 0.0
    %452 = vmatpush1.msra.mxu0 0.0
    %453 = vmatprep.subr.mxu0 0.0
    %454 = vmatpush1.msra.mxu0 0.0
    %455 = vmatprep.subr.mxu0 0.0
    %456 = vmatpush1.msra.mxu0 0.0
    %457 = vmatprep.subr.mxu0 0.0
    %458 = vmatpush1.msra.mxu0 0.0
    %459 = vmatprep.subr.mxu0 0.0
    %460 = vmatpush1.msra.mxu0 0.0
    %461 = vmatprep.subr.mxu0 0.0
    %462 = vmatpush1.msra.mxu0 0.0
    %463 = vmatprep.subr.mxu0 0.0
    %464 = vmatpush1.msra.mxu0 0.0
    %465 = vmatprep.subr.mxu0 0.0
    %466 = vmatpush1.msra.mxu0 0.0
    %467 = vmatprep.subr.mxu0 0.0
    %468 = vmatpush1.msra.mxu0 0.0
    %469 = vmatprep.subr.mxu0 0.0
    %470 = vmatpush1.msra.mxu0 0.0
    %471 = vmatprep.subr.mxu0 0.0
    %472 = vmatpush1.msra.mxu0 0.0
    %473 = vmatprep.subr.mxu0 0.0
    %474 = vmatpush1.msra.mxu0 0.0
    %475 = vmatprep.subr.mxu0 0.0
    %476 = vmatpush1.msra.mxu0 0.0
    %477 = vmatprep.subr.mxu0 0.0
    %478 = vmatpush1.msra.mxu0 0.0
    %479 = vmatprep.subr.mxu0 0.0
    %480 = vmatpush1.msra.mxu0 0.0
    %481 = vmatprep.subr.mxu0 0.0
    %482 = vmatpush1.msra.mxu0 0.0
    %483 = vmatprep.subr.mxu0 0.0
    %484 = vmatpush1.msra.mxu0 0.0
    %485 = vmatprep.subr.mxu0 0.0
    %486 = vmatpush1.msra.mxu0 0.0
    %487 = vmatprep.subr.mxu0 0.0
    %488 = vmatpush1.msra.mxu0 0.0
    %489 = vmatprep.subr.mxu0 0.0
    %490 = vmatpush1.msra.mxu0 0.0
    %491 = vmatprep.subr.mxu0 0.0
    %492 = vmatpush1.msra.mxu0 0.0
    %493 = vmatprep.subr.mxu0 0.0
    %494 = vmatpush1.msra.mxu0 0.0
    %495 = vmatprep.subr.mxu0 0.0
    %496 = vmatpush1.msra.mxu0 0.0
    %497 = vmatprep.subr.mxu0 0.0
    %498 = vmatpush1.msra.mxu0 0.0
    %499 = vmatprep.subr.mxu0 0.0
    %500 = vmatpush1.msra.mxu0 0.0
    %501 = vmatprep.mubr.f32.mxu0 0.0
    %502 = vmatmul.mubr.f32.gmra.mrb[0].mxu0 %v423
    %v503 = vpop.f32.mrb[0].mxu0
    %v504 = vadd.f32 %v347, %v503
    %v505 = vpop.f32.mrb[0].mxu0
    %v506 = vadd.f32 %v349, %v505
    %507 = vdwg.mxu0
    %508 = vmatprep.subr.mxu0 %v435
    %509 = vmatpush1.msra.mxu0 %v432
    %510 = vmatprep.subr.mxu0 0.0
    %511 = vmatpush1.msra.mxu0 0.0
    %512 = vmatprep.subr.mxu0 0.0
    %513 = vmatpush1.msra.mxu0 0.0
    %514 = vmatprep.subr.mxu0 0.0
    %515 = vmatpush1.msra.mxu0 0.0
    %516 = vmatprep.subr.mxu0 0.0
    %517 = vmatpush1.msra.mxu0 0.0
    %518 = vmatprep.subr.mxu0 0.0
    %519 = vmatpush1.msra.mxu0 0.0
    %520 = vmatprep.subr.mxu0 0.0
    %521 = vmatpush1.msra.mxu0 0.0
    %522 = vmatprep.subr.mxu0 0.0
    %523 = vmatpush1.msra.mxu0 0.0
    %524 = vmatprep.subr.mxu0 0.0
    %525 = vmatpush1.msra.mxu0 0.0
    %526 = vmatprep.subr.mxu0 0.0
    %527 = vmatpush1.msra.mxu0 0.0
    %528 = vmatprep.subr.mxu0 0.0
    %529 = vmatpush1.msra.mxu0 0.0
    %530 = vmatprep.subr.mxu0 0.0
    %531 = vmatpush1.msra.mxu0 0.0
    %532 = vmatprep.subr.mxu0 0.0
    %533 = vmatpush1.msra.mxu0 0.0
    %534 = vmatprep.subr.mxu0 0.0
    %535 = vmatpush1.msra.mxu0 0.0
    %536 = vmatprep.subr.mxu0 0.0
    %537 = vmatpush1.msra.mxu0 0.0
    %538 = vmatprep.subr.mxu0 0.0
    %539 = vmatpush1.msra.mxu0 0.0
    %540 = vmatprep.subr.mxu0 0.0
    %541 = vmatpush1.msra.mxu0 0.0
    %542 = vmatprep.subr.mxu0 0.0
    %543 = vmatpush1.msra.mxu0 0.0
    %544 = vmatprep.subr.mxu0 0.0
    %545 = vmatpush1.msra.mxu0 0.0
    %546 = vmatprep.subr.mxu0 0.0
    %547 = vmatpush1.msra.mxu0 0.0
    %548 = vmatprep.subr.mxu0 0.0
    %549 = vmatpush1.msra.mxu0 0.0
    %550 = vmatprep.subr.mxu0 0.0
    %551 = vmatpush1.msra.mxu0 0.0
    %552 = vmatprep.subr.mxu0 0.0
    %553 = vmatpush1.msra.mxu0 0.0
    %554 = vmatprep.subr.mxu0 0.0
    %555 = vmatpush1.msra.mxu0 0.0
    %556 = vmatprep.subr.mxu0 0.0
    %557 = vmatpush1.msra.mxu0 0.0
    %558 = vmatprep.subr.mxu0 0.0
    %559 = vmatpush1.msra.mxu0 0.0
    %560 = vmatprep.subr.mxu0 0.0
    %561 = vmatpush1.msra.mxu0 0.0
    %562 = vmatprep.subr.mxu0 0.0
    %563 = vmatpush1.msra.mxu0 0.0
    %564 = vmatprep.subr.mxu0 0.0
    %565 = vmatpush1.msra.mxu0 0.0
    %566 = vmatprep.subr.mxu0 0.0
    %567 = vmatpush1.msra.mxu0 0.0
    %568 = vmatprep.subr.mxu0 0.0
    %569 = vmatpush1.msra.mxu0 0.0
    %570 = vmatprep.subr.mxu0 0.0
    %571 = vmatpush1.msra.mxu0 0.0
    %572 = vmatprep.mubr.f32.mxu0 0.0
    %573 = vmatmul.mubr.f32.gmra.mrb[0].mxu0 %v423
    %v574 = vpop.f32.mrb[0].mxu0
    %v575 = vadd.f32 %v418, %v574
    %v576 = vpop.f32.mrb[0].mxu0
    %v577 = vadd.f32 %v420, %v576
    %578 = vdwg.mxu0
    %v579 = vsel %vm37, 1, 0
    %v580 = vlaneseq
    %v581 = vshrl.u32 %v580, 7
    %v582 = vsub.s32 0, %v581
    %v583 = vrot.slane %v579, %v582
    %v584 = vlaneseq
    %v585 = vshrl.u32 %v584, 7
    %v586 = vsub.s32 1, %v585
    %v587 = vrot.slane %v579, %v586
    %v588 = vlaneseq
    %v589 = vshrl.u32 %v588, 7
    %v590 = vsub.s32 2, %v589
    %v591 = vrot.slane %v579, %v590
    %v592 = vlaneseq
    %v593 = vshrl.u32 %v592, 7
    %v594 = vsub.s32 3, %v593
    %v595 = vrot.slane %v579, %v594
    %vm596 = vcmp.eq.s32.totalorder %v583, 1
    %vm597 = vcmp.eq.s32.totalorder %v587, 1
    %vm598 = vcmp.eq.s32.totalorder %v591, 1
    %vm599 = vcmp.eq.s32.totalorder %v595, 1
    %v600 = vsel %vm596, %v109, %v90
    %v601 = vsel %vm597, %v110, %v91
    %v602 = vsel %vm598, %v111, %v92
    %v603 = vsel %vm599, %v112, %v93
    %v604 = vsel %vm141, %v206, %v600
    %v605 = vsel %vm142, %v207, %v601
    %v606 = vsel %vm143, %v208, %v602
    %v607 = vsel %vm144, %v209, %v603
    %vm608 = vmand %vm37, %vm38
    %v609 = vsel %vm608, 1, 0
    %v610 = vlaneseq
    %v611 = vshrl.u32 %v610, 7
    %v612 = vsub.s32 0, %v611
    %v613 = vrot.slane %v609, %v612
    %v614 = vlaneseq
    %v615 = vshrl.u32 %v614, 7
    %v616 = vsub.s32 1, %v615
    %v617 = vrot.slane %v609, %v616
    %v618 = vlaneseq
    %v619 = vshrl.u32 %v618, 7
    %v620 = vsub.s32 2, %v619
    %v621 = vrot.slane %v609, %v620
    %v622 = vlaneseq
    %v623 = vshrl.u32 %v622, 7
    %v624 = vsub.s32 3, %v623
    %v625 = vrot.slane %v609, %v624
    %vm626 = vcmp.eq.s32.totalorder %v613, 1
    %vm627 = vcmp.eq.s32.totalorder %v617, 1
    %vm628 = vcmp.eq.s32.totalorder %v621, 1
    %vm629 = vcmp.eq.s32.totalorder %v625, 1
    %v630 = vsel %vm626, %v161, %v604
    %v631 = vsel %vm627, %v162, %v605
    %v632 = vsel %vm628, %v163, %v606
    %v633 = vsel %vm629, %v164, %v607
    %s634 = scalar_lea.vmem %s2, 8
    %v635 = vld [vmem:[%s634] sm:$0xf]
    %v637 = vsel %vm263, %v635, 0
    %v640 = vsel %vm267, %v630, 0
    %v643 = vsel %vm267, %v631, 0
    %v646 = vsel %vm267, %v632, 0
    %v649 = vsel %vm267, %v633, 0
    %651 = vmatprep.subr.mxu0 %v643
    %652 = vmatpush1.msra.mxu0 %v640
    %653 = vmatprep.subr.mxu0 0.0
    %654 = vmatpush1.msra.mxu0 0.0
    %655 = vmatprep.subr.mxu0 0.0
    %656 = vmatpush1.msra.mxu0 0.0
    %657 = vmatprep.subr.mxu0 0.0
    %658 = vmatpush1.msra.mxu0 0.0
    %659 = vmatprep.subr.mxu0 0.0
    %660 = vmatpush1.msra.mxu0 0.0
    %661 = vmatprep.subr.mxu0 0.0
    %662 = vmatpush1.msra.mxu0 0.0
    %663 = vmatprep.subr.mxu0 0.0
    %664 = vmatpush1.msra.mxu0 0.0
    %665 = vmatprep.subr.mxu0 0.0
    %666 = vmatpush1.msra.mxu0 0.0
    %667 = vmatprep.subr.mxu0 0.0
    %668 = vmatpush1.msra.mxu0 0.0
    %669 = vmatprep.subr.mxu0 0.0
    %670 = vmatpush1.msra.mxu0 0.0
    %671 = vmatprep.subr.mxu0 0.0
    %672 = vmatpush1.msra.mxu0 0.0
    %673 = vmatprep.subr.mxu0 0.0
    %674 = vmatpush1.msra.mxu0 0.0
    %675 = vmatprep.subr.mxu0 0.0
    %676 = vmatpush1.msra.mxu0 0.0
    %677 = vmatprep.subr.mxu0 0.0
    %678 = vmatpush1.msra.mxu0 0.0
    %679 = vmatprep.subr.mxu0 0.0
    %680 = vmatpush1.msra.mxu0 0.0
    %681 = vmatprep.subr.mxu0 0.0
    %682 = vmatpush1.msra.mxu0 0.0
    %683 = vmatprep.subr.mxu0 0.0
    %684 = vmatpush1.msra.mxu0 0.0
    %685 = vmatprep.subr.mxu0 0.0
    %686 = vmatpush1.msra.mxu0 0.0
    %687 = vmatprep.subr.mxu0 0.0
    %688 = vmatpush1.msra.mxu0 0.0
    %689 = vmatprep.subr.mxu0 0.0
    %690 = vmatpush1.msra.mxu0 0.0
    %691 = vmatprep.subr.mxu0 0.0
    %692 = vmatpush1.msra.mxu0 0.0
    %693 = vmatprep.subr.mxu0 0.0
    %694 = vmatpush1.msra.mxu0 0.0
    %695 = vmatprep.subr.mxu0 0.0
    %696 = vmatpush1.msra.mxu0 0.0
    %697 = vmatprep.subr.mxu0 0.0
    %698 = vmatpush1.msra.mxu0 0.0
    %699 = vmatprep.subr.mxu0 0.0
    %700 = vmatpush1.msra.mxu0 0.0
    %701 = vmatprep.subr.mxu0 0.0
    %702 = vmatpush1.msra.mxu0 0.0
    %703 = vmatprep.subr.mxu0 0.0
    %704 = vmatpush1.msra.mxu0 0.0
    %705 = vmatprep.subr.mxu0 0.0
    %706 = vmatpush1.msra.mxu0 0.0
    %707 = vmatprep.subr.mxu0 0.0
    %708 = vmatpush1.msra.mxu0 0.0
    %709 = vmatprep.subr.mxu0 0.0
    %710 = vmatpush1.msra.mxu0 0.0
    %711 = vmatprep.subr.mxu0 0.0
    %712 = vmatpush1.msra.mxu0 0.0
    %713 = vmatprep.subr.mxu0 0.0
    %714 = vmatpush1.msra.mxu0 0.0
    %715 = vmatprep.mubr.f32.mxu0 0.0
    %716 = vmatmul.mubr.f32.gmra.mrb[0].mxu0 %v637
    %v717 = vpop.f32.mrb[0].mxu0
    %v718 = vadd.f32 0.0, %v717
    %v719 = vpop.f32.mrb[0].mxu0
    %v720 = vadd.f32 0.0, %v719
    %721 = vdwg.mxu0
    %722 = vmatprep.subr.mxu0 %v649
    %723 = vmatpush1.msra.mxu0 %v646
    %724 = vmatprep.subr.mxu0 0.0
    %725 = vmatpush1.msra.mxu0 0.0
    %726 = vmatprep.subr.mxu0 0.0
    %727 = vmatpush1.msra.mxu0 0.0
    %728 = vmatprep.subr.mxu0 0.0
    %729 = vmatpush1.msra.mxu0 0.0
    %730 = vmatprep.subr.mxu0 0.0
    %731 = vmatpush1.msra.mxu0 0.0
    %732 = vmatprep.subr.mxu0 0.0
    %733 = vmatpush1.msra.mxu0 0.0
    %734 = vmatprep.subr.mxu0 0.0
    %735 = vmatpush1.msra.mxu0 0.0
    %736 = vmatprep.subr.mxu0 0.0
    %737 = vmatpush1.msra.mxu0 0.0
    %738 = vmatprep.subr.mxu0 0.0
    %739 = vmatpush1.msra.mxu0 0.0
    %740 = vmatprep.subr.mxu0 0.0
    %741 = vmatpush1.msra.mxu0 0.0
    %742 = vmatprep.subr.mxu0 0.0
    %743 = vmatpush1.msra.mxu0 0.0
    %744 = vmatprep.subr.mxu0 0.0
    %745 = vmatpush1.msra.mxu0 0.0
    %746 = vmatprep.subr.mxu0 0.0
    %747 = vmatpush1.msra.mxu0 0.0
    %748 = vmatprep.subr.mxu0 0.0
    %749 = vmatpush1.msra.mxu0 0.0
    %750 = vmatprep.subr.mxu0 0.0
    %751 = vmatpush1.msra.mxu0 0.0
    %752 = vmatprep.subr.mxu0 0.0
    %753 = vmatpush1.msra.mxu0 0.0
    %754 = vmatprep.subr.mxu0 0.0
    %755 = vmatpush1.msra.mxu0 0.0
    %756 = vmatprep.subr.mxu0 0.0
    %757 = vmatpush1.msra.mxu0 0.0
    %758 = vmatprep.subr.mxu0 0.0
    %759 = vmatpush1.msra.mxu0 0.0
    %760 = vmatprep.subr.mxu0 0.0
    %761 = vmatpush1.msra.mxu0 0.0
    %762 = vmatprep.subr.mxu0 0.0
    %763 = vmatpush1.msra.mxu0 0.0
    %764 = vmatprep.subr.mxu0 0.0
    %765 = vmatpush1.msra.mxu0 0.0
    %766 = vmatprep.subr.mxu0 0.0
    %767 = vmatpush1.msra.mxu0 0.0
    %768 = vmatprep.subr.mxu0 0.0
    %769 = vmatpush1.msra.mxu0 0.0
    %770 = vmatprep.subr.mxu0 0.0
    %771 = vmatpush1.msra.mxu0 0.0
    %772 = vmatprep.subr.mxu0 0.0
    %773 = vmatpush1.msra.mxu0 0.0
    %774 = vmatprep.subr.mxu0 0.0
    %775 = vmatpush1.msra.mxu0 0.0
    %776 = vmatprep.subr.mxu0 0.0
    %777 = vmatpush1.msra.mxu0 0.0
    %778 = vmatprep.subr.mxu0 0.0
    %779 = vmatpush1.msra.mxu0 0.0
    %780 = vmatprep.subr.mxu0 0.0
    %781 = vmatpush1.msra.mxu0 0.0
    %782 = vmatprep.subr.mxu0 0.0
    %783 = vmatpush1.msra.mxu0 0.0
    %784 = vmatprep.subr.mxu0 0.0
    %785 = vmatpush1.msra.mxu0 0.0
    %786 = vmatprep.mubr.f32.mxu0 0.0
    %787 = vmatmul.mubr.f32.gmra.mrb[0].mxu0 %v637
    %v788 = vpop.f32.mrb[0].mxu0
    %v789 = vadd.f32 0.0, %v788
    %v790 = vpop.f32.mrb[0].mxu0
    %v791 = vadd.f32 0.0, %v790
    %792 = vdwg.mxu0
    %v793 = vadd.f32 %v504, %v718
    %v794 = vadd.f32 %v506, %v720
    %v795 = vadd.f32 %v575, %v789
    %v796 = vadd.f32 %v577, %v791
    %v797 = vld [vmem:[#allocation2] sm:$0xff]
    %v798 = vld [vmem:[#allocation2 + $0x8] sm:$0xff]
    %v799 = vld [vmem:[#allocation2 + $0x10] sm:$0xf]
    %v800 = vld [vmem:[#allocation2 + $0x4] sm:$0xff]
    %v801 = vld [vmem:[#allocation2 + $0xc] sm:$0xff]
    %v802 = vld [vmem:[#allocation2 + $0x14] sm:$0xf]
    %v806 = vcombine.high %v800, %v800
    %v807 = vcombine.high %v801, %v801
    %808 = vrot.lane.b32.xlu0 %v800, 127
    %v809 = vpop.permute.xlu0 %808
    %810 = vrot.lane.b32.xlu0 %v806, 127
    %v811 = vpop.permute.xlu0 %810
    %812 = vrot.lane.b32.xlu0 %v801, 127
    %v813 = vpop.permute.xlu0 %812
    %814 = vrot.lane.b32.xlu0 %v807, 127
    %v815 = vpop.permute.xlu0 %814
    %816 = vrot.lane.b32.xlu0 %v802, 127
    %v817 = vpop.permute.xlu0 %816
    %vm818 = vcmask 1039360
    %v819 = vsel %vm818, %v809, %v811
    %v820 = vsel %vm818, %v811, %v813
    %v821 = vsel %vm818, %v813, %v815
    %v822 = vsel %vm818, %v815, %v817
    %v830 = vcombine.high %v797, %v797
    %v831 = vcombine.high %v798, %v798
    %832 = vrot.lane.b32.xlu0 %v797, 1
    %v833 = vpop.permute.xlu0 %832
    %834 = vrot.lane.b32.xlu0 %v830, 1
    %v835 = vpop.permute.xlu0 %834
    %836 = vrot.lane.b32.xlu0 %v798, 1
    %v837 = vpop.permute.xlu0 %836
    %838 = vrot.lane.b32.xlu0 %v831, 1
    %v839 = vpop.permute.xlu0 %838
    %840 = vrot.lane.b32.xlu0 %v799, 1
    %v841 = vpop.permute.xlu0 %840
    %vm842 = vcmask 7168
    %v843 = vsel %vm842, %v833, %v835
    %v844 = vsel %vm842, %v835, %v837
    %v845 = vsel %vm842, %v837, %v839
    %v846 = vsel %vm842, %v839, %v841
    %v851 = vsel %vm70, %v819, %v843
    %v852 = vsel %vm71, %v820, %v844
    %v853 = vsel %vm72, %v821, %v845
    %v854 = vsel %vm73, %v822, %v846
    %s855 = scalar_lea.vmem %s2, 12
    %v856 = vld [vmem:[%s855] sm:$0xf]
    %v858 = vsel %vm263, %v856, 0
    %v861 = vsel %vm267, %v851, 0
    %v864 = vsel %vm267, %v852, 0
    %v867 = vsel %vm267, %v853, 0
    %v870 = vsel %vm267, %v854, 0
    %872 = vmatprep.subr.mxu0 %v864
    %873 = vmatpush1.msra.mxu0 %v861
    %874 = vmatprep.subr.mxu0 0.0
    %875 = vmatpush1.msra.mxu0 0.0
    %876 = vmatprep.subr.mxu0 0.0
    %877 = vmatpush1.msra.mxu0 0.0
    %878 = vmatprep.subr.mxu0 0.0
    %879 = vmatpush1.msra.mxu0 0.0
    %880 = vmatprep.subr.mxu0 0.0
    %881 = vmatpush1.msra.mxu0 0.0
    %882 = vmatprep.subr.mxu0 0.0
    %883 = vmatpush1.msra.mxu0 0.0
    %884 = vmatprep.subr.mxu0 0.0
    %885 = vmatpush1.msra.mxu0 0.0
    %886 = vmatprep.subr.mxu0 0.0
    %887 = vmatpush1.msra.mxu0 0.0
    %888 = vmatprep.subr.mxu0 0.0
    %889 = vmatpush1.msra.mxu0 0.0
    %890 = vmatprep.subr.mxu0 0.0
    %891 = vmatpush1.msra.mxu0 0.0
    %892 = vmatprep.subr.mxu0 0.0
    %893 = vmatpush1.msra.mxu0 0.0
    %894 = vmatprep.subr.mxu0 0.0
    %895 = vmatpush1.msra.mxu0 0.0
    %896 = vmatprep.subr.mxu0 0.0
    %897 = vmatpush1.msra.mxu0 0.0
    %898 = vmatprep.subr.mxu0 0.0
    %899 = vmatpush1.msra.mxu0 0.0
    %900 = vmatprep.subr.mxu0 0.0
    %901 = vmatpush1.msra.mxu0 0.0
    %902 = vmatprep.subr.mxu0 0.0
    %903 = vmatpush1.msra.mxu0 0.0
    %904 = vmatprep.subr.mxu0 0.0
    %905 = vmatpush1.msra.mxu0 0.0
    %906 = vmatprep.subr.mxu0 0.0
    %907 = vmatpush1.msra.mxu0 0.0
    %908 = vmatprep.subr.mxu0 0.0
    %909 = vmatpush1.msra.mxu0 0.0
    %910 = vmatprep.subr.mxu0 0.0
    %911 = vmatpush1.msra.mxu0 0.0
    %912 = vmatprep.subr.mxu0 0.0
    %913 = vmatpush1.msra.mxu0 0.0
    %914 = vmatprep.subr.mxu0 0.0
    %915 = vmatpush1.msra.mxu0 0.0
    %916 = vmatprep.subr.mxu0 0.0
    %917 = vmatpush1.msra.mxu0 0.0
    %918 = vmatprep.subr.mxu0 0.0
    %919 = vmatpush1.msra.mxu0 0.0
    %920 = vmatprep.subr.mxu0 0.0
    %921 = vmatpush1.msra.mxu0 0.0
    %922 = vmatprep.subr.mxu0 0.0
    %923 = vmatpush1.msra.mxu0 0.0
    %924 = vmatprep.subr.mxu0 0.0
    %925 = vmatpush1.msra.mxu0 0.0
    %926 = vmatprep.subr.mxu0 0.0
    %927 = vmatpush1.msra.mxu0 0.0
    %928 = vmatprep.subr.mxu0 0.0
    %929 = vmatpush1.msra.mxu0 0.0
    %930 = vmatprep.subr.mxu0 0.0
    %931 = vmatpush1.msra.mxu0 0.0
    %932 = vmatprep.subr.mxu0 0.0
    %933 = vmatpush1.msra.mxu0 0.0
    %934 = vmatprep.subr.mxu0 0.0
    %935 = vmatpush1.msra.mxu0 0.0
    %936 = vmatprep.mubr.f32.mxu0 0.0
    %937 = vmatmul.mubr.f32.gmra.mrb[0].mxu0 %v858
    %v938 = vpop.f32.mrb[0].mxu0
    %v939 = vadd.f32 0.0, %v938
    %v940 = vpop.f32.mrb[0].mxu0
    %v941 = vadd.f32 0.0, %v940
    %942 = vdwg.mxu0
    %943 = vmatprep.subr.mxu0 %v870
    %944 = vmatpush1.msra.mxu0 %v867
    %945 = vmatprep.subr.mxu0 0.0
    %946 = vmatpush1.msra.mxu0 0.0
    %947 = vmatprep.subr.mxu0 0.0
    %948 = vmatpush1.msra.mxu0 0.0
    %949 = vmatprep.subr.mxu0 0.0
    %950 = vmatpush1.msra.mxu0 0.0
    %951 = vmatprep.subr.mxu0 0.0
    %952 = vmatpush1.msra.mxu0 0.0
    %953 = vmatprep.subr.mxu0 0.0
    %954 = vmatpush1.msra.mxu0 0.0
    %955 = vmatprep.subr.mxu0 0.0
    %956 = vmatpush1.msra.mxu0 0.0
    %957 = vmatprep.subr.mxu0 0.0
    %958 = vmatpush1.msra.mxu0 0.0
    %959 = vmatprep.subr.mxu0 0.0
    %960 = vmatpush1.msra.mxu0 0.0
    %961 = vmatprep.subr.mxu0 0.0
    %962 = vmatpush1.msra.mxu0 0.0
    %963 = vmatprep.subr.mxu0 0.0
    %964 = vmatpush1.msra.mxu0 0.0
    %965 = vmatprep.subr.mxu0 0.0
    %966 = vmatpush1.msra.mxu0 0.0
    %967 = vmatprep.subr.mxu0 0.0
    %968 = vmatpush1.msra.mxu0 0.0
    %969 = vmatprep.subr.mxu0 0.0
    %970 = vmatpush1.msra.mxu0 0.0
    %971 = vmatprep.subr.mxu0 0.0
    %972 = vmatpush1.msra.mxu0 0.0
    %973 = vmatprep.subr.mxu0 0.0
    %974 = vmatpush1.msra.mxu0 0.0
    %975 = vmatprep.subr.mxu0 0.0
    %976 = vmatpush1.msra.mxu0 0.0
    %977 = vmatprep.subr.mxu0 0.0
    %978 = vmatpush1.msra.mxu0 0.0
    %979 = vmatprep.subr.mxu0 0.0
    %980 = vmatpush1.msra.mxu0 0.0
    %981 = vmatprep.subr.mxu0 0.0
    %982 = vmatpush1.msra.mxu0 0.0
    %983 = vmatprep.subr.mxu0 0.0
    %984 = vmatpush1.msra.mxu0 0.0
    %985 = vmatprep.subr.mxu0 0.0
    %986 = vmatpush1.msra.mxu0 0.0
    %987 = vmatprep.subr.mxu0 0.0
    %988 = vmatpush1.msra.mxu0 0.0
    %989 = vmatprep.subr.mxu0 0.0
    %990 = vmatpush1.msra.mxu0 0.0
    %991 = vmatprep.subr.mxu0 0.0
    %992 = vmatpush1.msra.mxu0 0.0
    %993 = vmatprep.subr.mxu0 0.0
    %994 = vmatpush1.msra.mxu0 0.0
    %995 = vmatprep.subr.mxu0 0.0
    %996 = vmatpush1.msra.mxu0 0.0
    %997 = vmatprep.subr.mxu0 0.0
    %998 = vmatpush1.msra.mxu0 0.0
    %999 = vmatprep.subr.mxu0 0.0
    %1000 = vmatpush1.msra.mxu0 0.0
    %1001 = vmatprep.subr.mxu0 0.0
    %1002 = vmatpush1.msra.mxu0 0.0
    %1003 = vmatprep.subr.mxu0 0.0
    %1004 = vmatpush1.msra.mxu0 0.0
    %1005 = vmatprep.subr.mxu0 0.0
    %1006 = vmatpush1.msra.mxu0 0.0
    %1007 = vmatprep.mubr.f32.mxu0 0.0
    %1008 = vmatmul.mubr.f32.gmra.mrb[0].mxu0 %v858
    %v1009 = vpop.f32.mrb[0].mxu0
    %v1010 = vadd.f32 0.0, %v1009
    %v1011 = vpop.f32.mrb[0].mxu0
    %v1012 = vadd.f32 0.0, %v1011
    %1013 = vdwg.mxu0
    %v1014 = vadd.f32 %v793, %v939
    %v1015 = vadd.f32 %v794, %v941
    %v1016 = vadd.f32 %v795, %v1010
    %v1017 = vadd.f32 %v796, %v1012
    %v1018 = vld [vmem:[#allocation2 + $0x4] sm:$0xff]
    %v1019 = vld [vmem:[#allocation2 + $0xc] sm:$0xff]
    %s1020 = scalar_lea.vmem %s2, 16
    %v1021 = vld [vmem:[%s1020] sm:$0xf]
    %v1024 = vcombine.high %v1018, %v1018
    %v1025 = vcombine.high %v1019, %v1019
    %v1027 = vsel %vm263, %v1021, 0
    %v1029 = vsel %vm267, %v1018, 0
    %v1031 = vsel %vm267, %v1024, 0
    %v1033 = vsel %vm267, %v1019, 0
    %v1035 = vsel %vm267, %v1025, 0
    %1037 = vmatprep.subr.mxu0 %v1031
    %1038 = vmatpush1.msra.mxu0 %v1029
    %1039 = vmatprep.subr.mxu0 0.0
    %1040 = vmatpush1.msra.mxu0 0.0
    %1041 = vmatprep.subr.mxu0 0.0
    %1042 = vmatpush1.msra.mxu0 0.0
    %1043 = vmatprep.subr.mxu0 0.0
    %1044 = vmatpush1.msra.mxu0 0.0
    %1045 = vmatprep.subr.mxu0 0.0
    %1046 = vmatpush1.msra.mxu0 0.0
    %1047 = vmatprep.subr.mxu0 0.0
    %1048 = vmatpush1.msra.mxu0 0.0
    %1049 = vmatprep.subr.mxu0 0.0
    %1050 = vmatpush1.msra.mxu0 0.0
    %1051 = vmatprep.subr.mxu0 0.0
    %1052 = vmatpush1.msra.mxu0 0.0
    %1053 = vmatprep.subr.mxu0 0.0
    %1054 = vmatpush1.msra.mxu0 0.0
    %1055 = vmatprep.subr.mxu0 0.0
    %1056 = vmatpush1.msra.mxu0 0.0
    %1057 = vmatprep.subr.mxu0 0.0
    %1058 = vmatpush1.msra.mxu0 0.0
    %1059 = vmatprep.subr.mxu0 0.0
    %1060 = vmatpush1.msra.mxu0 0.0
    %1061 = vmatprep.subr.mxu0 0.0
    %1062 = vmatpush1.msra.mxu0 0.0
    %1063 = vmatprep.subr.mxu0 0.0
    %1064 = vmatpush1.msra.mxu0 0.0
    %1065 = vmatprep.subr.mxu0 0.0
    %1066 = vmatpush1.msra.mxu0 0.0
    %1067 = vmatprep.subr.mxu0 0.0
    %1068 = vmatpush1.msra.mxu0 0.0
    %1069 = vmatprep.subr.mxu0 0.0
    %1070 = vmatpush1.msra.mxu0 0.0
    %1071 = vmatprep.subr.mxu0 0.0
    %1072 = vmatpush1.msra.mxu0 0.0
    %1073 = vmatprep.subr.mxu0 0.0
    %1074 = vmatpush1.msra.mxu0 0.0
    %1075 = vmatprep.subr.mxu0 0.0
    %1076 = vmatpush1.msra.mxu0 0.0
    %1077 = vmatprep.subr.mxu0 0.0
    %1078 = vmatpush1.msra.mxu0 0.0
    %1079 = vmatprep.subr.mxu0 0.0
    %1080 = vmatpush1.msra.mxu0 0.0
    %1081 = vmatprep.subr.mxu0 0.0
    %1082 = vmatpush1.msra.mxu0 0.0
    %1083 = vmatprep.subr.mxu0 0.0
    %1084 = vmatpush1.msra.mxu0 0.0
    %1085 = vmatprep.subr.mxu0 0.0
    %1086 = vmatpush1.msra.mxu0 0.0
    %1087 = vmatprep.subr.mxu0 0.0
    %1088 = vmatpush1.msra.mxu0 0.0
    %1089 = vmatprep.subr.mxu0 0.0
    %1090 = vmatpush1.msra.mxu0 0.0
    %1091 = vmatprep.subr.mxu0 0.0
    %1092 = vmatpush1.msra.mxu0 0.0
    %1093 = vmatprep.subr.mxu0 0.0
    %1094 = vmatpush1.msra.mxu0 0.0
    %1095 = vmatprep.subr.mxu0 0.0
    %1096 = vmatpush1.msra.mxu0 0.0
    %1097 = vmatprep.subr.mxu0 0.0
    %1098 = vmatpush1.msra.mxu0 0.0
    %1099 = vmatprep.subr.mxu0 0.0
    %1100 = vmatpush1.msra.mxu0 0.0
    %1101 = vmatprep.mubr.f32.mxu0 0.0
    %1102 = vmatmul.mubr.f32.gmra.mrb[0].mxu0 %v1027
    %v1103 = vpop.f32.mrb[0].mxu0
    %v1104 = vadd.f32 0.0, %v1103
    %v1105 = vpop.f32.mrb[0].mxu0
    %v1106 = vadd.f32 0.0, %v1105
    %1107 = vdwg.mxu0
    %1108 = vmatprep.subr.mxu0 %v1035
    %1109 = vmatpush1.msra.mxu0 %v1033
    %1110 = vmatprep.subr.mxu0 0.0
    %1111 = vmatpush1.msra.mxu0 0.0
    %1112 = vmatprep.subr.mxu0 0.0
    %1113 = vmatpush1.msra.mxu0 0.0
    %1114 = vmatprep.subr.mxu0 0.0
    %1115 = vmatpush1.msra.mxu0 0.0
    %1116 = vmatprep.subr.mxu0 0.0
    %1117 = vmatpush1.msra.mxu0 0.0
    %1118 = vmatprep.subr.mxu0 0.0
    %1119 = vmatpush1.msra.mxu0 0.0
    %1120 = vmatprep.subr.mxu0 0.0
    %1121 = vmatpush1.msra.mxu0 0.0
    %1122 = vmatprep.subr.mxu0 0.0
    %1123 = vmatpush1.msra.mxu0 0.0
    %1124 = vmatprep.subr.mxu0 0.0
    %1125 = vmatpush1.msra.mxu0 0.0
    %1126 = vmatprep.subr.mxu0 0.0
    %1127 = vmatpush1.msra.mxu0 0.0
    %1128 = vmatprep.subr.mxu0 0.0
    %1129 = vmatpush1.msra.mxu0 0.0
    %1130 = vmatprep.subr.mxu0 0.0
    %1131 = vmatpush1.msra.mxu0 0.0
    %1132 = vmatprep.subr.mxu0 0.0
    %1133 = vmatpush1.msra.mxu0 0.0
    %1134 = vmatprep.subr.mxu0 0.0
    %1135 = vmatpush1.msra.mxu0 0.0
    %1136 = vmatprep.subr.mxu0 0.0
    %1137 = vmatpush1.msra.mxu0 0.0
    %1138 = vmatprep.subr.mxu0 0.0
    %1139 = vmatpush1.msra.mxu0 0.0
    %1140 = vmatprep.subr.mxu0 0.0
    %1141 = vmatpush1.msra.mxu0 0.0
    %1142 = vmatprep.subr.mxu0 0.0
    %1143 = vmatpush1.msra.mxu0 0.0
    %1144 = vmatprep.subr.mxu0 0.0
    %1145 = vmatpush1.msra.mxu0 0.0
    %1146 = vmatprep.subr.mxu0 0.0
    %1147 = vmatpush1.msra.mxu0 0.0
    %1148 = vmatprep.subr.mxu0 0.0
    %1149 = vmatpush1.msra.mxu0 0.0
    %1150 = vmatprep.subr.mxu0 0.0
    %1151 = vmatpush1.msra.mxu0 0.0
    %1152 = vmatprep.subr.mxu0 0.0
    %1153 = vmatpush1.msra.mxu0 0.0
    %1154 = vmatprep.subr.mxu0 0.0
    %1155 = vmatpush1.msra.mxu0 0.0
    %1156 = vmatprep.subr.mxu0 0.0
    %1157 = vmatpush1.msra.mxu0 0.0
    %1158 = vmatprep.subr.mxu0 0.0
    %1159 = vmatpush1.msra.mxu0 0.0
    %1160 = vmatprep.subr.mxu0 0.0
    %1161 = vmatpush1.msra.mxu0 0.0
    %1162 = vmatprep.subr.mxu0 0.0
    %1163 = vmatpush1.msra.mxu0 0.0
    %1164 = vmatprep.subr.mxu0 0.0
    %1165 = vmatpush1.msra.mxu0 0.0
    %1166 = vmatprep.subr.mxu0 0.0
    %1167 = vmatpush1.msra.mxu0 0.0
    %1168 = vmatprep.subr.mxu0 0.0
    %1169 = vmatpush1.msra.mxu0 0.0
    %1170 = vmatprep.subr.mxu0 0.0
    %1171 = vmatpush1.msra.mxu0 0.0
    %1172 = vmatprep.mubr.f32.mxu0 0.0
    %1173 = vmatmul.mubr.f32.gmra.mrb[0].mxu0 %v1027
    %v1174 = vpop.f32.mrb[0].mxu0
    %v1175 = vadd.f32 0.0, %v1174
    %v1176 = vpop.f32.mrb[0].mxu0
    %v1177 = vadd.f32 0.0, %v1176
    %1178 = vdwg.mxu0
    %v1179 = vadd.f32 %v1014, %v1104
    %v1180 = vadd.f32 %v1015, %v1106
    %v1181 = vadd.f32 %v1016, %v1175
    %v1182 = vadd.f32 %v1017, %v1177
    %v1183 = vsel %vm596, %v843, %v819
    %v1184 = vsel %vm597, %v844, %v820
    %v1185 = vsel %vm598, %v845, %v821
    %v1186 = vsel %vm599, %v846, %v822
    %s1187 = scalar_lea.vmem %s2, 20
    %v1188 = vld [vmem:[%s1187] sm:$0xf]
    %v1190 = vsel %vm263, %v1188, 0
    %v1193 = vsel %vm267, %v1183, 0
    %v1196 = vsel %vm267, %v1184, 0
    %v1199 = vsel %vm267, %v1185, 0
    %v1202 = vsel %vm267, %v1186, 0
    %1204 = vmatprep.subr.mxu0 %v1196
    %1205 = vmatpush1.msra.mxu0 %v1193
    %1206 = vmatprep.subr.mxu0 0.0
    %1207 = vmatpush1.msra.mxu0 0.0
    %1208 = vmatprep.subr.mxu0 0.0
    %1209 = vmatpush1.msra.mxu0 0.0
    %1210 = vmatprep.subr.mxu0 0.0
    %1211 = vmatpush1.msra.mxu0 0.0
    %1212 = vmatprep.subr.mxu0 0.0
    %1213 = vmatpush1.msra.mxu0 0.0
    %1214 = vmatprep.subr.mxu0 0.0
    %1215 = vmatpush1.msra.mxu0 0.0
    %1216 = vmatprep.subr.mxu0 0.0
    %1217 = vmatpush1.msra.mxu0 0.0
    %1218 = vmatprep.subr.mxu0 0.0
    %1219 = vmatpush1.msra.mxu0 0.0
    %1220 = vmatprep.subr.mxu0 0.0
    %1221 = vmatpush1.msra.mxu0 0.0
    %1222 = vmatprep.subr.mxu0 0.0
    %1223 = vmatpush1.msra.mxu0 0.0
    %1224 = vmatprep.subr.mxu0 0.0
    %1225 = vmatpush1.msra.mxu0 0.0
    %1226 = vmatprep.subr.mxu0 0.0
    %1227 = vmatpush1.msra.mxu0 0.0
    %1228 = vmatprep.subr.mxu0 0.0
    %1229 = vmatpush1.msra.mxu0 0.0
    %1230 = vmatprep.subr.mxu0 0.0
    %1231 = vmatpush1.msra.mxu0 0.0
    %1232 = vmatprep.subr.mxu0 0.0
    %1233 = vmatpush1.msra.mxu0 0.0
    %1234 = vmatprep.subr.mxu0 0.0
    %1235 = vmatpush1.msra.mxu0 0.0
    %1236 = vmatprep.subr.mxu0 0.0
    %1237 = vmatpush1.msra.mxu0 0.0
    %1238 = vmatprep.subr.mxu0 0.0
    %1239 = vmatpush1.msra.mxu0 0.0
    %1240 = vmatprep.subr.mxu0 0.0
    %1241 = vmatpush1.msra.mxu0 0.0
    %1242 = vmatprep.subr.mxu0 0.0
    %1243 = vmatpush1.msra.mxu0 0.0
    %1244 = vmatprep.subr.mxu0 0.0
    %1245 = vmatpush1.msra.mxu0 0.0
    %1246 = vmatprep.subr.mxu0 0.0
    %1247 = vmatpush1.msra.mxu0 0.0
    %1248 = vmatprep.subr.mxu0 0.0
    %1249 = vmatpush1.msra.mxu0 0.0
    %1250 = vmatprep.subr.mxu0 0.0
    %1251 = vmatpush1.msra.mxu0 0.0
    %1252 = vmatprep.subr.mxu0 0.0
    %1253 = vmatpush1.msra.mxu0 0.0
    %1254 = vmatprep.subr.mxu0 0.0
    %1255 = vmatpush1.msra.mxu0 0.0
    %1256 = vmatprep.subr.mxu0 0.0
    %1257 = vmatpush1.msra.mxu0 0.0
    %1258 = vmatprep.subr.mxu0 0.0
    %1259 = vmatpush1.msra.mxu0 0.0
    %1260 = vmatprep.subr.mxu0 0.0
    %1261 = vmatpush1.msra.mxu0 0.0
    %1262 = vmatprep.subr.mxu0 0.0
    %1263 = vmatpush1.msra.mxu0 0.0
    %1264 = vmatprep.subr.mxu0 0.0
    %1265 = vmatpush1.msra.mxu0 0.0
    %1266 = vmatprep.subr.mxu0 0.0
    %1267 = vmatpush1.msra.mxu0 0.0
    %1268 = vmatprep.mubr.f32.mxu0 0.0
    %1269 = vmatmul.mubr.f32.gmra.mrb[0].mxu0 %v1190
    %v1270 = vpop.f32.mrb[0].mxu0
    %v1271 = vadd.f32 0.0, %v1270
    %v1272 = vpop.f32.mrb[0].mxu0
    %v1273 = vadd.f32 0.0, %v1272
    %1274 = vdwg.mxu0
    %1275 = vmatprep.subr.mxu0 %v1202
    %1276 = vmatpush1.msra.mxu0 %v1199
    %1277 = vmatprep.subr.mxu0 0.0
    %1278 = vmatpush1.msra.mxu0 0.0
    %1279 = vmatprep.subr.mxu0 0.0
    %1280 = vmatpush1.msra.mxu0 0.0
    %1281 = vmatprep.subr.mxu0 0.0
    %1282 = vmatpush1.msra.mxu0 0.0
    %1283 = vmatprep.subr.mxu0 0.0
    %1284 = vmatpush1.msra.mxu0 0.0
    %1285 = vmatprep.subr.mxu0 0.0
    %1286 = vmatpush1.msra.mxu0 0.0
    %1287 = vmatprep.subr.mxu0 0.0
    %1288 = vmatpush1.msra.mxu0 0.0
    %1289 = vmatprep.subr.mxu0 0.0
    %1290 = vmatpush1.msra.mxu0 0.0
    %1291 = vmatprep.subr.mxu0 0.0
    %1292 = vmatpush1.msra.mxu0 0.0
    %1293 = vmatprep.subr.mxu0 0.0
    %1294 = vmatpush1.msra.mxu0 0.0
    %1295 = vmatprep.subr.mxu0 0.0
    %1296 = vmatpush1.msra.mxu0 0.0
    %1297 = vmatprep.subr.mxu0 0.0
    %1298 = vmatpush1.msra.mxu0 0.0
    %1299 = vmatprep.subr.mxu0 0.0
    %1300 = vmatpush1.msra.mxu0 0.0
    %1301 = vmatprep.subr.mxu0 0.0
    %1302 = vmatpush1.msra.mxu0 0.0
    %1303 = vmatprep.subr.mxu0 0.0
    %1304 = vmatpush1.msra.mxu0 0.0
    %1305 = vmatprep.subr.mxu0 0.0
    %1306 = vmatpush1.msra.mxu0 0.0
    %1307 = vmatprep.subr.mxu0 0.0
    %1308 = vmatpush1.msra.mxu0 0.0
    %1309 = vmatprep.subr.mxu0 0.0
    %1310 = vmatpush1.msra.mxu0 0.0
    %1311 = vmatprep.subr.mxu0 0.0
    %1312 = vmatpush1.msra.mxu0 0.0
    %1313 = vmatprep.subr.mxu0 0.0
    %1314 = vmatpush1.msra.mxu0 0.0
    %1315 = vmatprep.subr.mxu0 0.0
    %1316 = vmatpush1.msra.mxu0 0.0
    %1317 = vmatprep.subr.mxu0 0.0
    %1318 = vmatpush1.msra.mxu0 0.0
    %1319 = vmatprep.subr.mxu0 0.0
    %1320 = vmatpush1.msra.mxu0 0.0
    %1321 = vmatprep.subr.mxu0 0.0
    %1322 = vmatpush1.msra.mxu0 0.0
    %1323 = vmatprep.subr.mxu0 0.0
    %1324 = vmatpush1.msra.mxu0 0.0
    %1325 = vmatprep.subr.mxu0 0.0
    %1326 = vmatpush1.msra.mxu0 0.0
    %1327 = vmatprep.subr.mxu0 0.0
    %1328 = vmatpush1.msra.mxu0 0.0
    %1329 = vmatprep.subr.mxu0 0.0
    %1330 = vmatpush1.msra.mxu0 0.0
    %1331 = vmatprep.subr.mxu0 0.0
    %1332 = vmatpush1.msra.mxu0 0.0
    %1333 = vmatprep.subr.mxu0 0.0
    %1334 = vmatpush1.msra.mxu0 0.0
    %1335 = vmatprep.subr.mxu0 0.0
    %1336 = vmatpush1.msra.mxu0 0.0
    %1337 = vmatprep.subr.mxu0 0.0
    %1338 = vmatpush1.msra.mxu0 0.0
    %1339 = vmatprep.mubr.f32.mxu0 0.0
    %1340 = vmatmul.mubr.f32.gmra.mrb[0].mxu0 %v1190
    %v1341 = vpop.f32.mrb[0].mxu0
    %v1342 = vadd.f32 0.0, %v1341
    %v1343 = vpop.f32.mrb[0].mxu0
    %v1344 = vadd.f32 0.0, %v1343
    %1345 = vdwg.mxu0
    %v1346 = vadd.f32 %v1179, %v1271
    %v1347 = vadd.f32 %v1180, %v1273
    %v1348 = vadd.f32 %v1181, %v1342
    %v1349 = vadd.f32 %v1182, %v1344
    %v1350 = vsel %vm70, %v206, %v161
    %v1351 = vsel %vm71, %v207, %v162
    %v1352 = vsel %vm72, %v208, %v163
    %v1353 = vsel %vm73, %v209, %v164
    %v1354 = vsel %vm39, 1, 0
    %v1355 = vlaneseq
    %v1356 = vshrl.u32 %v1355, 7
    %v1357 = vsub.s32 0, %v1356
    %v1358 = vrot.slane %v1354, %v1357
    %v1359 = vlaneseq
    %v1360 = vshrl.u32 %v1359, 7
    %v1361 = vsub.s32 1, %v1360
    %v1362 = vrot.slane %v1354, %v1361
    %v1363 = vlaneseq
    %v1364 = vshrl.u32 %v1363, 7
    %v1365 = vsub.s32 2, %v1364
    %v1366 = vrot.slane %v1354, %v1365
    %v1367 = vlaneseq
    %v1368 = vshrl.u32 %v1367, 7
    %v1369 = vsub.s32 3, %v1368
    %v1370 = vrot.slane %v1354, %v1369
    %vm1371 = vcmp.eq.s32.totalorder %v1358, 1
    %vm1372 = vcmp.eq.s32.totalorder %v1362, 1
    %vm1373 = vcmp.eq.s32.totalorder %v1366, 1
    %vm1374 = vcmp.eq.s32.totalorder %v1370, 1
    %v1375 = vsel %vm1371, %v109, %v1350
    %v1376 = vsel %vm1372, %v110, %v1351
    %v1377 = vsel %vm1373, %v111, %v1352
    %v1378 = vsel %vm1374, %v112, %v1353
    %vm1379 = vmand %vm36, %vm39
    %v1380 = vsel %vm1379, 1, 0
    %v1381 = vlaneseq
    %v1382 = vshrl.u32 %v1381, 7
    %v1383 = vsub.s32 0, %v1382
    %v1384 = vrot.slane %v1380, %v1383
    %v1385 = vlaneseq
    %v1386 = vshrl.u32 %v1385, 7
    %v1387 = vsub.s32 1, %v1386
    %v1388 = vrot.slane %v1380, %v1387
    %v1389 = vlaneseq
    %v1390 = vshrl.u32 %v1389, 7
    %v1391 = vsub.s32 2, %v1390
    %v1392 = vrot.slane %v1380, %v1391
    %v1393 = vlaneseq
    %v1394 = vshrl.u32 %v1393, 7
    %v1395 = vsub.s32 3, %v1394
    %v1396 = vrot.slane %v1380, %v1395
    %vm1397 = vcmp.eq.s32.totalorder %v1384, 1
    %vm1398 = vcmp.eq.s32.totalorder %v1388, 1
    %vm1399 = vcmp.eq.s32.totalorder %v1392, 1
    %vm1400 = vcmp.eq.s32.totalorder %v1396, 1
    %v1401 = vsel %vm1397, %v90, %v1375
    %v1402 = vsel %vm1398, %v91, %v1376
    %v1403 = vsel %vm1399, %v92, %v1377
    %v1404 = vsel %vm1400, %v93, %v1378
    %s1405 = scalar_lea.vmem %s2, 24
    %v1406 = vld [vmem:[%s1405] sm:$0xf]
    %v1408 = vsel %vm263, %v1406, 0
    %v1411 = vsel %vm267, %v1401, 0
    %v1414 = vsel %vm267, %v1402, 0
    %v1417 = vsel %vm267, %v1403, 0
    %v1420 = vsel %vm267, %v1404, 0
    %1422 = vmatprep.subr.mxu0 %v1414
    %1423 = vmatpush1.msra.mxu0 %v1411
    %1424 = vmatprep.subr.mxu0 0.0
    %1425 = vmatpush1.msra.mxu0 0.0
    %1426 = vmatprep.subr.mxu0 0.0
    %1427 = vmatpush1.msra.mxu0 0.0
    %1428 = vmatprep.subr.mxu0 0.0
    %1429 = vmatpush1.msra.mxu0 0.0
    %1430 = vmatprep.subr.mxu0 0.0
    %1431 = vmatpush1.msra.mxu0 0.0
    %1432 = vmatprep.subr.mxu0 0.0
    %1433 = vmatpush1.msra.mxu0 0.0
    %1434 = vmatprep.subr.mxu0 0.0
    %1435 = vmatpush1.msra.mxu0 0.0
    %1436 = vmatprep.subr.mxu0 0.0
    %1437 = vmatpush1.msra.mxu0 0.0
    %1438 = vmatprep.subr.mxu0 0.0
    %1439 = vmatpush1.msra.mxu0 0.0
    %1440 = vmatprep.subr.mxu0 0.0
    %1441 = vmatpush1.msra.mxu0 0.0
    %1442 = vmatprep.subr.mxu0 0.0
    %1443 = vmatpush1.msra.mxu0 0.0
    %1444 = vmatprep.subr.mxu0 0.0
    %1445 = vmatpush1.msra.mxu0 0.0
    %1446 = vmatprep.subr.mxu0 0.0
    %1447 = vmatpush1.msra.mxu0 0.0
    %1448 = vmatprep.subr.mxu0 0.0
    %1449 = vmatpush1.msra.mxu0 0.0
    %1450 = vmatprep.subr.mxu0 0.0
    %1451 = vmatpush1.msra.mxu0 0.0
    %1452 = vmatprep.subr.mxu0 0.0
    %1453 = vmatpush1.msra.mxu0 0.0
    %1454 = vmatprep.subr.mxu0 0.0
    %1455 = vmatpush1.msra.mxu0 0.0
    %1456 = vmatprep.subr.mxu0 0.0
    %1457 = vmatpush1.msra.mxu0 0.0
    %1458 = vmatprep.subr.mxu0 0.0
    %1459 = vmatpush1.msra.mxu0 0.0
    %1460 = vmatprep.subr.mxu0 0.0
    %1461 = vmatpush1.msra.mxu0 0.0
    %1462 = vmatprep.subr.mxu0 0.0
    %1463 = vmatpush1.msra.mxu0 0.0
    %1464 = vmatprep.subr.mxu0 0.0
    %1465 = vmatpush1.msra.mxu0 0.0
    %1466 = vmatprep.subr.mxu0 0.0
    %1467 = vmatpush1.msra.mxu0 0.0
    %1468 = vmatprep.subr.mxu0 0.0
    %1469 = vmatpush1.msra.mxu0 0.0
    %1470 = vmatprep.subr.mxu0 0.0
    %1471 = vmatpush1.msra.mxu0 0.0
    %1472 = vmatprep.subr.mxu0 0.0
    %1473 = vmatpush1.msra.mxu0 0.0
    %1474 = vmatprep.subr.mxu0 0.0
    %1475 = vmatpush1.msra.mxu0 0.0
    %1476 = vmatprep.subr.mxu0 0.0
    %1477 = vmatpush1.msra.mxu0 0.0
    %1478 = vmatprep.subr.mxu0 0.0
    %1479 = vmatpush1.msra.mxu0 0.0
    %1480 = vmatprep.subr.mxu0 0.0
    %1481 = vmatpush1.msra.mxu0 0.0
    %1482 = vmatprep.subr.mxu0 0.0
    %1483 = vmatpush1.msra.mxu0 0.0
    %1484 = vmatprep.subr.mxu0 0.0
    %1485 = vmatpush1.msra.mxu0 0.0
    %1486 = vmatprep.mubr.f32.mxu0 0.0
    %1487 = vmatmul.mubr.f32.gmra.mrb[0].mxu0 %v1408
    %v1488 = vpop.f32.mrb[0].mxu0
    %v1489 = vadd.f32 0.0, %v1488
    %v1490 = vpop.f32.mrb[0].mxu0
    %v1491 = vadd.f32 0.0, %v1490
    %1492 = vdwg.mxu0
    %1493 = vmatprep.subr.mxu0 %v1420
    %1494 = vmatpush1.msra.mxu0 %v1417
    %1495 = vmatprep.subr.mxu0 0.0
    %1496 = vmatpush1.msra.mxu0 0.0
    %1497 = vmatprep.subr.mxu0 0.0
    %1498 = vmatpush1.msra.mxu0 0.0
    %1499 = vmatprep.subr.mxu0 0.0
    %1500 = vmatpush1.msra.mxu0 0.0
    %1501 = vmatprep.subr.mxu0 0.0
    %1502 = vmatpush1.msra.mxu0 0.0
    %1503 = vmatprep.subr.mxu0 0.0
    %1504 = vmatpush1.msra.mxu0 0.0
    %1505 = vmatprep.subr.mxu0 0.0
    %1506 = vmatpush1.msra.mxu0 0.0
    %1507 = vmatprep.subr.mxu0 0.0
    %1508 = vmatpush1.msra.mxu0 0.0
    %1509 = vmatprep.subr.mxu0 0.0
    %1510 = vmatpush1.msra.mxu0 0.0
    %1511 = vmatprep.subr.mxu0 0.0
    %1512 = vmatpush1.msra.mxu0 0.0
    %1513 = vmatprep.subr.mxu0 0.0
    %1514 = vmatpush1.msra.mxu0 0.0
    %1515 = vmatprep.subr.mxu0 0.0
    %1516 = vmatpush1.msra.mxu0 0.0
    %1517 = vmatprep.subr.mxu0 0.0
    %1518 = vmatpush1.msra.mxu0 0.0
    %1519 = vmatprep.subr.mxu0 0.0
    %1520 = vmatpush1.msra.mxu0 0.0
    %1521 = vmatprep.subr.mxu0 0.0
    %1522 = vmatpush1.msra.mxu0 0.0
    %1523 = vmatprep.subr.mxu0 0.0
    %1524 = vmatpush1.msra.mxu0 0.0
    %1525 = vmatprep.subr.mxu0 0.0
    %1526 = vmatpush1.msra.mxu0 0.0
    %1527 = vmatprep.subr.mxu0 0.0
    %1528 = vmatpush1.msra.mxu0 0.0
    %1529 = vmatprep.subr.mxu0 0.0
    %1530 = vmatpush1.msra.mxu0 0.0
    %1531 = vmatprep.subr.mxu0 0.0
    %1532 = vmatpush1.msra.mxu0 0.0
    %1533 = vmatprep.subr.mxu0 0.0
    %1534 = vmatpush1.msra.mxu0 0.0
    %1535 = vmatprep.subr.mxu0 0.0
    %1536 = vmatpush1.msra.mxu0 0.0
    %1537 = vmatprep.subr.mxu0 0.0
    %1538 = vmatpush1.msra.mxu0 0.0
    %1539 = vmatprep.subr.mxu0 0.0
    %1540 = vmatpush1.msra.mxu0 0.0
    %1541 = vmatprep.subr.mxu0 0.0
    %1542 = vmatpush1.msra.mxu0 0.0
    %1543 = vmatprep.subr.mxu0 0.0
    %1544 = vmatpush1.msra.mxu0 0.0
    %1545 = vmatprep.subr.mxu0 0.0
    %1546 = vmatpush1.msra.mxu0 0.0
    %1547 = vmatprep.subr.mxu0 0.0
    %1548 = vmatpush1.msra.mxu0 0.0
    %1549 = vmatprep.subr.mxu0 0.0
    %1550 = vmatpush1.msra.mxu0 0.0
    %1551 = vmatprep.subr.mxu0 0.0
    %1552 = vmatpush1.msra.mxu0 0.0
    %1553 = vmatprep.subr.mxu0 0.0
    %1554 = vmatpush1.msra.mxu0 0.0
    %1555 = vmatprep.subr.mxu0 0.0
    %1556 = vmatpush1.msra.mxu0 0.0
    %1557 = vmatprep.mubr.f32.mxu0 0.0
    %1558 = vmatmul.mubr.f32.gmra.mrb[0].mxu0 %v1408
    %v1559 = vpop.f32.mrb[0].mxu0
    %v1560 = vadd.f32 0.0, %v1559
    %v1561 = vpop.f32.mrb[0].mxu0
    %v1562 = vadd.f32 0.0, %v1561
    %1563 = vdwg.mxu0
    %v1564 = vadd.f32 %v1346, %v1489
    %v1565 = vadd.f32 %v1347, %v1491
    %v1566 = vadd.f32 %v1348, %v1560
    %v1567 = vadd.f32 %v1349, %v1562
    %v1568 = vsel %vm1371, %v249, %v230
    %v1569 = vsel %vm1372, %v250, %v231
    %v1570 = vsel %vm1373, %v251, %v232
    %v1571 = vsel %vm1374, %v252, %v233
    %s1572 = scalar_lea.vmem %s2, 28
    %v1573 = vld [vmem:[%s1572] sm:$0xf]
    %v1575 = vsel %vm263, %v1573, 0
    %v1578 = vsel %vm267, %v1568, 0
    %v1581 = vsel %vm267, %v1569, 0
    %v1584 = vsel %vm267, %v1570, 0
    %v1587 = vsel %vm267, %v1571, 0
    %1589 = vmatprep.subr.mxu0 %v1581
    %1590 = vmatpush1.msra.mxu0 %v1578
    %1591 = vmatprep.subr.mxu0 0.0
    %1592 = vmatpush1.msra.mxu0 0.0
    %1593 = vmatprep.subr.mxu0 0.0
    %1594 = vmatpush1.msra.mxu0 0.0
    %1595 = vmatprep.subr.mxu0 0.0
    %1596 = vmatpush1.msra.mxu0 0.0
    %1597 = vmatprep.subr.mxu0 0.0
    %1598 = vmatpush1.msra.mxu0 0.0
    %1599 = vmatprep.subr.mxu0 0.0
    %1600 = vmatpush1.msra.mxu0 0.0
    %1601 = vmatprep.subr.mxu0 0.0
    %1602 = vmatpush1.msra.mxu0 0.0
    %1603 = vmatprep.subr.mxu0 0.0
    %1604 = vmatpush1.msra.mxu0 0.0
    %1605 = vmatprep.subr.mxu0 0.0
    %1606 = vmatpush1.msra.mxu0 0.0
    %1607 = vmatprep.subr.mxu0 0.0
    %1608 = vmatpush1.msra.mxu0 0.0
    %1609 = vmatprep.subr.mxu0 0.0
    %1610 = vmatpush1.msra.mxu0 0.0
    %1611 = vmatprep.subr.mxu0 0.0
    %1612 = vmatpush1.msra.mxu0 0.0
    %1613 = vmatprep.subr.mxu0 0.0
    %1614 = vmatpush1.msra.mxu0 0.0
    %1615 = vmatprep.subr.mxu0 0.0
    %1616 = vmatpush1.msra.mxu0 0.0
    %1617 = vmatprep.subr.mxu0 0.0
    %1618 = vmatpush1.msra.mxu0 0.0
    %1619 = vmatprep.subr.mxu0 0.0
    %1620 = vmatpush1.msra.mxu0 0.0
    %1621 = vmatprep.subr.mxu0 0.0
    %1622 = vmatpush1.msra.mxu0 0.0
    %1623 = vmatprep.subr.mxu0 0.0
    %1624 = vmatpush1.msra.mxu0 0.0
    %1625 = vmatprep.subr.mxu0 0.0
    %1626 = vmatpush1.msra.mxu0 0.0
    %1627 = vmatprep.subr.mxu0 0.0
    %1628 = vmatpush1.msra.mxu0 0.0
    %1629 = vmatprep.subr.mxu0 0.0
    %1630 = vmatpush1.msra.mxu0 0.0
    %1631 = vmatprep.subr.mxu0 0.0
    %1632 = vmatpush1.msra.mxu0 0.0
    %1633 = vmatprep.subr.mxu0 0.0
    %1634 = vmatpush1.msra.mxu0 0.0
    %1635 = vmatprep.subr.mxu0 0.0
    %1636 = vmatpush1.msra.mxu0 0.0
    %1637 = vmatprep.subr.mxu0 0.0
    %1638 = vmatpush1.msra.mxu0 0.0
    %1639 = vmatprep.subr.mxu0 0.0
    %1640 = vmatpush1.msra.mxu0 0.0
    %1641 = vmatprep.subr.mxu0 0.0
    %1642 = vmatpush1.msra.mxu0 0.0
    %1643 = vmatprep.subr.mxu0 0.0
    %1644 = vmatpush1.msra.mxu0 0.0
    %1645 = vmatprep.subr.mxu0 0.0
    %1646 = vmatpush1.msra.mxu0 0.0
    %1647 = vmatprep.subr.mxu0 0.0
    %1648 = vmatpush1.msra.mxu0 0.0
    %1649 = vmatprep.subr.mxu0 0.0
    %1650 = vmatpush1.msra.mxu0 0.0
    %1651 = vmatprep.subr.mxu0 0.0
    %1652 = vmatpush1.msra.mxu0 0.0
    %1653 = vmatprep.mubr.f32.mxu0 0.0
    %1654 = vmatmul.mubr.f32.gmra.mrb[0].mxu0 %v1575
    %v1655 = vpop.f32.mrb[0].mxu0
    %v1656 = vadd.f32 0.0, %v1655
    %v1657 = vpop.f32.mrb[0].mxu0
    %v1658 = vadd.f32 0.0, %v1657
    %1659 = vdwg.mxu0
    %1660 = vmatprep.subr.mxu0 %v1587
    %1661 = vmatpush1.msra.mxu0 %v1584
    %1662 = vmatprep.subr.mxu0 0.0
    %1663 = vmatpush1.msra.mxu0 0.0
    %1664 = vmatprep.subr.mxu0 0.0
    %1665 = vmatpush1.msra.mxu0 0.0
    %1666 = vmatprep.subr.mxu0 0.0
    %1667 = vmatpush1.msra.mxu0 0.0
    %1668 = vmatprep.subr.mxu0 0.0
    %1669 = vmatpush1.msra.mxu0 0.0
    %1670 = vmatprep.subr.mxu0 0.0
    %1671 = vmatpush1.msra.mxu0 0.0
    %1672 = vmatprep.subr.mxu0 0.0
    %1673 = vmatpush1.msra.mxu0 0.0
    %1674 = vmatprep.subr.mxu0 0.0
    %1675 = vmatpush1.msra.mxu0 0.0
    %1676 = vmatprep.subr.mxu0 0.0
    %1677 = vmatpush1.msra.mxu0 0.0
    %1678 = vmatprep.subr.mxu0 0.0
    %1679 = vmatpush1.msra.mxu0 0.0
    %1680 = vmatprep.subr.mxu0 0.0
    %1681 = vmatpush1.msra.mxu0 0.0
    %1682 = vmatprep.subr.mxu0 0.0
    %1683 = vmatpush1.msra.mxu0 0.0
    %1684 = vmatprep.subr.mxu0 0.0
    %1685 = vmatpush1.msra.mxu0 0.0
    %1686 = vmatprep.subr.mxu0 0.0
    %1687 = vmatpush1.msra.mxu0 0.0
    %1688 = vmatprep.subr.mxu0 0.0
    %1689 = vmatpush1.msra.mxu0 0.0
    %1690 = vmatprep.subr.mxu0 0.0
    %1691 = vmatpush1.msra.mxu0 0.0
    %1692 = vmatprep.subr.mxu0 0.0
    %1693 = vmatpush1.msra.mxu0 0.0
    %1694 = vmatprep.subr.mxu0 0.0
    %1695 = vmatpush1.msra.mxu0 0.0
    %1696 = vmatprep.subr.mxu0 0.0
    %1697 = vmatpush1.msra.mxu0 0.0
    %1698 = vmatprep.subr.mxu0 0.0
    %1699 = vmatpush1.msra.mxu0 0.0
    %1700 = vmatprep.subr.mxu0 0.0
    %1701 = vmatpush1.msra.mxu0 0.0
    %1702 = vmatprep.subr.mxu0 0.0
    %1703 = vmatpush1.msra.mxu0 0.0
    %1704 = vmatprep.subr.mxu0 0.0
    %1705 = vmatpush1.msra.mxu0 0.0
    %1706 = vmatprep.subr.mxu0 0.0
    %1707 = vmatpush1.msra.mxu0 0.0
    %1708 = vmatprep.subr.mxu0 0.0
    %1709 = vmatpush1.msra.mxu0 0.0
    %1710 = vmatprep.subr.mxu0 0.0
    %1711 = vmatpush1.msra.mxu0 0.0
    %1712 = vmatprep.subr.mxu0 0.0
    %1713 = vmatpush1.msra.mxu0 0.0
    %1714 = vmatprep.subr.mxu0 0.0
    %1715 = vmatpush1.msra.mxu0 0.0
    %1716 = vmatprep.subr.mxu0 0.0
    %1717 = vmatpush1.msra.mxu0 0.0
    %1718 = vmatprep.subr.mxu0 0.0
    %1719 = vmatpush1.msra.mxu0 0.0
    %1720 = vmatprep.subr.mxu0 0.0
    %1721 = vmatpush1.msra.mxu0 0.0
    %1722 = vmatprep.subr.mxu0 0.0
    %1723 = vmatpush1.msra.mxu0 0.0
    %1724 = vmatprep.mubr.f32.mxu0 0.0
    %1725 = vmatmul.mubr.f32.gmra.mrb[0].mxu0 %v1575
    %v1726 = vpop.f32.mrb[0].mxu0
    %v1727 = vadd.f32 0.0, %v1726
    %v1728 = vpop.f32.mrb[0].mxu0
    %v1729 = vadd.f32 0.0, %v1728
    %1730 = vdwg.mxu0
    %v1731 = vadd.f32 %v1564, %v1656
    %v1732 = vadd.f32 %v1565, %v1658
    %v1733 = vadd.f32 %v1566, %v1727
    %v1734 = vadd.f32 %v1567, %v1729
    %v1735 = vsel %vm596, %v161, %v206
    %v1736 = vsel %vm597, %v162, %v207
    %v1737 = vsel %vm598, %v163, %v208
    %v1738 = vsel %vm599, %v164, %v209
    %v1739 = vsel %vm1371, %v90, %v1735
    %v1740 = vsel %vm1372, %v91, %v1736
    %v1741 = vsel %vm1373, %v92, %v1737
    %v1742 = vsel %vm1374, %v93, %v1738
    %vm1743 = vmand %vm37, %vm39
    %v1744 = vsel %vm1743, 1, 0
    %v1745 = vlaneseq
    %v1746 = vshrl.u32 %v1745, 7
    %v1747 = vsub.s32 0, %v1746
    %v1748 = vrot.slane %v1744, %v1747
    %v1749 = vlaneseq
    %v1750 = vshrl.u32 %v1749, 7
    %v1751 = vsub.s32 1, %v1750
    %v1752 = vrot.slane %v1744, %v1751
    %v1753 = vlaneseq
    %v1754 = vshrl.u32 %v1753, 7
    %v1755 = vsub.s32 2, %v1754
    %v1756 = vrot.slane %v1744, %v1755
    %v1757 = vlaneseq
    %v1758 = vshrl.u32 %v1757, 7
    %v1759 = vsub.s32 3, %v1758
    %v1760 = vrot.slane %v1744, %v1759
    %vm1761 = vcmp.eq.s32.totalorder %v1748, 1
    %vm1762 = vcmp.eq.s32.totalorder %v1752, 1
    %vm1763 = vcmp.eq.s32.totalorder %v1756, 1
    %vm1764 = vcmp.eq.s32.totalorder %v1760, 1
    %v1765 = vsel %vm1761, %v109, %v1739
    %v1766 = vsel %vm1762, %v110, %v1740
    %v1767 = vsel %vm1763, %v111, %v1741
    %v1768 = vsel %vm1764, %v112, %v1742
    %s1769 = scalar_lea.vmem %s2, 32
    %v1770 = vld [vmem:[%s1769] sm:$0xf]
    %v1772 = vsel %vm263, %v1770, 0
    %v1775 = vsel %vm267, %v1765, 0
    %v1778 = vsel %vm267, %v1766, 0
    %v1781 = vsel %vm267, %v1767, 0
    %v1784 = vsel %vm267, %v1768, 0
    %1786 = vmatprep.subr.mxu0 %v1778
    %1787 = vmatpush1.msra.mxu0 %v1775
    %1788 = vmatprep.subr.mxu0 0.0
    %1789 = vmatpush1.msra.mxu0 0.0
    %1790 = vmatprep.subr.mxu0 0.0
    %1791 = vmatpush1.msra.mxu0 0.0
    %1792 = vmatprep.subr.mxu0 0.0
    %1793 = vmatpush1.msra.mxu0 0.0
    %1794 = vmatprep.subr.mxu0 0.0
    %1795 = vmatpush1.msra.mxu0 0.0
    %1796 = vmatprep.subr.mxu0 0.0
    %1797 = vmatpush1.msra.mxu0 0.0
    %1798 = vmatprep.subr.mxu0 0.0
    %1799 = vmatpush1.msra.mxu0 0.0
    %1800 = vmatprep.subr.mxu0 0.0
    %1801 = vmatpush1.msra.mxu0 0.0
    %1802 = vmatprep.subr.mxu0 0.0
    %1803 = vmatpush1.msra.mxu0 0.0
    %1804 = vmatprep.subr.mxu0 0.0
    %1805 = vmatpush1.msra.mxu0 0.0
    %1806 = vmatprep.subr.mxu0 0.0
    %1807 = vmatpush1.msra.mxu0 0.0
    %1808 = vmatprep.subr.mxu0 0.0
    %1809 = vmatpush1.msra.mxu0 0.0
    %1810 = vmatprep.subr.mxu0 0.0
    %1811 = vmatpush1.msra.mxu0 0.0
    %1812 = vmatprep.subr.mxu0 0.0
    %1813 = vmatpush1.msra.mxu0 0.0
    %1814 = vmatprep.subr.mxu0 0.0
    %1815 = vmatpush1.msra.mxu0 0.0
    %1816 = vmatprep.subr.mxu0 0.0
    %1817 = vmatpush1.msra.mxu0 0.0
    %1818 = vmatprep.subr.mxu0 0.0
    %1819 = vmatpush1.msra.mxu0 0.0
    %1820 = vmatprep.subr.mxu0 0.0
    %1821 = vmatpush1.msra.mxu0 0.0
    %1822 = vmatprep.subr.mxu0 0.0
    %1823 = vmatpush1.msra.mxu0 0.0
    %1824 = vmatprep.subr.mxu0 0.0
    %1825 = vmatpush1.msra.mxu0 0.0
    %1826 = vmatprep.subr.mxu0 0.0
    %1827 = vmatpush1.msra.mxu0 0.0
    %1828 = vmatprep.subr.mxu0 0.0
    %1829 = vmatpush1.msra.mxu0 0.0
    %1830 = vmatprep.subr.mxu0 0.0
    %1831 = vmatpush1.msra.mxu0 0.0
    %1832 = vmatprep.subr.mxu0 0.0
    %1833 = vmatpush1.msra.mxu0 0.0
    %1834 = vmatprep.subr.mxu0 0.0
    %1835 = vmatpush1.msra.mxu0 0.0
    %1836 = vmatprep.subr.mxu0 0.0
    %1837 = vmatpush1.msra.mxu0 0.0
    %1838 = vmatprep.subr.mxu0 0.0
    %1839 = vmatpush1.msra.mxu0 0.0
    %1840 = vmatprep.subr.mxu0 0.0
    %1841 = vmatpush1.msra.mxu0 0.0
    %1842 = vmatprep.subr.mxu0 0.0
    %1843 = vmatpush1.msra.mxu0 0.0
    %1844 = vmatprep.subr.mxu0 0.0
    %1845 = vmatpush1.msra.mxu0 0.0
    %1846 = vmatprep.subr.mxu0 0.0
    %1847 = vmatpush1.msra.mxu0 0.0
    %1848 = vmatprep.subr.mxu0 0.0
    %1849 = vmatpush1.msra.mxu0 0.0
    %1850 = vmatprep.mubr.f32.mxu0 0.0
    %1851 = vmatmul.mubr.f32.gmra.mrb[0].mxu0 %v1772
    %v1852 = vpop.f32.mrb[0].mxu0
    %v1853 = vadd.f32 0.0, %v1852
    %v1854 = vpop.f32.mrb[0].mxu0
    %v1855 = vadd.f32 0.0, %v1854
    %1856 = vdwg.mxu0
    %1857 = vmatprep.subr.mxu0 %v1784
    %1858 = vmatpush1.msra.mxu0 %v1781
    %1859 = vmatprep.subr.mxu0 0.0
    %1860 = vmatpush1.msra.mxu0 0.0
    %1861 = vmatprep.subr.mxu0 0.0
    %1862 = vmatpush1.msra.mxu0 0.0
    %1863 = vmatprep.subr.mxu0 0.0
    %1864 = vmatpush1.msra.mxu0 0.0
    %1865 = vmatprep.subr.mxu0 0.0
    %1866 = vmatpush1.msra.mxu0 0.0
    %1867 = vmatprep.subr.mxu0 0.0
    %1868 = vmatpush1.msra.mxu0 0.0
    %1869 = vmatprep.subr.mxu0 0.0
    %1870 = vmatpush1.msra.mxu0 0.0
    %1871 = vmatprep.subr.mxu0 0.0
    %1872 = vmatpush1.msra.mxu0 0.0
    %1873 = vmatprep.subr.mxu0 0.0
    %1874 = vmatpush1.msra.mxu0 0.0
    %1875 = vmatprep.subr.mxu0 0.0
    %1876 = vmatpush1.msra.mxu0 0.0
    %1877 = vmatprep.subr.mxu0 0.0
    %1878 = vmatpush1.msra.mxu0 0.0
    %1879 = vmatprep.subr.mxu0 0.0
    %1880 = vmatpush1.msra.mxu0 0.0
    %1881 = vmatprep.subr.mxu0 0.0
    %1882 = vmatpush1.msra.mxu0 0.0
    %1883 = vmatprep.subr.mxu0 0.0
    %1884 = vmatpush1.msra.mxu0 0.0
    %1885 = vmatprep.subr.mxu0 0.0
    %1886 = vmatpush1.msra.mxu0 0.0
    %1887 = vmatprep.subr.mxu0 0.0
    %1888 = vmatpush1.msra.mxu0 0.0
    %1889 = vmatprep.subr.mxu0 0.0
    %1890 = vmatpush1.msra.mxu0 0.0
    %1891 = vmatprep.subr.mxu0 0.0
    %1892 = vmatpush1.msra.mxu0 0.0
    %1893 = vmatprep.subr.mxu0 0.0
    %1894 = vmatpush1.msra.mxu0 0.0
    %1895 = vmatprep.subr.mxu0 0.0
    %1896 = vmatpush1.msra.mxu0 0.0
    %1897 = vmatprep.subr.mxu0 0.0
    %1898 = vmatpush1.msra.mxu0 0.0
    %1899 = vmatprep.subr.mxu0 0.0
    %1900 = vmatpush1.msra.mxu0 0.0
    %1901 = vmatprep.subr.mxu0 0.0
    %1902 = vmatpush1.msra.mxu0 0.0
    %1903 = vmatprep.subr.mxu0 0.0
    %1904 = vmatpush1.msra.mxu0 0.0
    %1905 = vmatprep.subr.mxu0 0.0
    %1906 = vmatpush1.msra.mxu0 0.0
    %1907 = vmatprep.subr.mxu0 0.0
    %1908 = vmatpush1.msra.mxu0 0.0
    %1909 = vmatprep.subr.mxu0 0.0
    %1910 = vmatpush1.msra.mxu0 0.0
    %1911 = vmatprep.subr.mxu0 0.0
    %1912 = vmatpush1.msra.mxu0 0.0
    %1913 = vmatprep.subr.mxu0 0.0
    %1914 = vmatpush1.msra.mxu0 0.0
    %1915 = vmatprep.subr.mxu0 0.0
    %1916 = vmatpush1.msra.mxu0 0.0
    %1917 = vmatprep.subr.mxu0 0.0
    %1918 = vmatpush1.msra.mxu0 0.0
    %1919 = vmatprep.subr.mxu0 0.0
    %1920 = vmatpush1.msra.mxu0 0.0
    %1921 = vmatprep.mubr.f32.mxu0 0.0
    %1922 = vmatmul.mubr.f32.gmra.mrb[0].mxu0 %v1772
    %v1923 = vpop.f32.mrb[0].mxu0
    %v1924 = vadd.f32 0.0, %v1923
    %v1925 = vpop.f32.mrb[0].mxu0
    %v1926 = vadd.f32 0.0, %v1925
    %1927 = vdwg.mxu0
    %v1928 = vadd.f32 %v1731, %v1853
    %v1929 = vadd.f32 %v1732, %v1855
    %v1930 = vadd.f32 %v1733, %v1924
    %v1931 = vadd.f32 %v1734, %v1926
    %v1932 = vld [vmem:[%s3] sm:$0xf]
    %1934 = vset.pattern.permute.xlu0 0
    %1935 = vperm.xlu0 %1934, %v1932
    %v1936 = vpop.permute.xlu0 %1935
    %v1938 = vadd.f32 %v1928, %v1936
    %v1939 = vadd.f32 %v1929, %v1936
    %v1940 = vadd.f32 %v1930, %v1936
    %v1941 = vadd.f32 %v1931, %v1936
    %vm1942 = vcmp.ge.f32.partialorder %v1938, 0.0
    %vm1943 = vcmp.ge.f32.partialorder %v1939, 0.0
    %vm1944 = vcmp.ge.f32.partialorder %v1940, 0.0
    %vm1945 = vcmp.ge.f32.partialorder %v1941, 0.0
    %v1946 = vmul.f32 %v1938, 0.01
    %v1947 = vmul.f32 %v1939, 0.01
    %v1948 = vmul.f32 %v1940, 0.01
    %v1949 = vmul.f32 %v1941, 0.01
    %v1950 = vsel %vm1942, %v1938, %v1946
    %v1951 = vsel %vm1943, %v1939, %v1947
    %v1952 = vsel %vm1944, %v1940, %v1948
    %v1953 = vsel %vm1945, %v1941, %v1949
    %v1958 = vcombine.low %v1950, %v1951
    %v1959 = vcombine.low %v1952, %v1953
    %1962 = vst [vmem:[#allocation3 + $0x4] sm:$0xff] %v1958
    %1963 = vst [vmem:[#allocation3 + $0xc] sm:$0xff] %v1959
    %v1964 = vld [vmem:[#allocation3] sm:$0xff]
    %v1965 = vld [vmem:[#allocation3 + $0x8] sm:$0xff]
    %v1966 = vld [vmem:[#allocation3 + $0x10] sm:$0xf]
    %v1970 = vcombine.high %v1964, %v1964
    %v1971 = vcombine.high %v1965, %v1965
    %1972 = vrot.lane.b32.xlu0 %v1964, 15
    %v1973 = vpop.permute.xlu0 %1972
    %1974 = vrot.lane.b32.xlu0 %v1970, 15
    %v1975 = vpop.permute.xlu0 %1974
    %1976 = vrot.lane.b32.xlu0 %v1965, 15
    %v1977 = vpop.permute.xlu0 %1976
    %1978 = vrot.lane.b32.xlu0 %v1971, 15
    %v1979 = vpop.permute.xlu0 %1978
    %1980 = vrot.lane.b32.xlu0 %v1966, 15
    %v1981 = vpop.permute.xlu0 %1980
    %v1982 = vsel %vm89, %v1973, %v1975
    %v1983 = vsel %vm89, %v1975, %v1977
    %v1984 = vsel %vm89, %v1977, %v1979
    %v1985 = vsel %vm89, %v1979, %v1981
    %1990 = vrot.lane.b32.xlu0 %v1964, 17
    %v1991 = vpop.permute.xlu0 %1990
    %1992 = vrot.lane.b32.xlu0 %v1970, 17
    %v1993 = vpop.permute.xlu0 %1992
    %1994 = vrot.lane.b32.xlu0 %v1965, 17
    %v1995 = vpop.permute.xlu0 %1994
    %1996 = vrot.lane.b32.xlu0 %v1971, 17
    %v1997 = vpop.permute.xlu0 %1996
    %1998 = vrot.lane.b32.xlu0 %v1966, 17
    %v1999 = vpop.permute.xlu0 %1998
    %v2000 = vsel %vm108, %v1991, %v1993
    %v2001 = vsel %vm108, %v1993, %v1995
    %v2002 = vsel %vm108, %v1995, %v1997
    %v2003 = vsel %vm108, %v1997, %v1999
    %v2008 = vsel %vm70, %v1982, %v2000
    %v2009 = vsel %vm71, %v1983, %v2001
    %v2010 = vsel %vm72, %v1984, %v2002
    %v2011 = vsel %vm73, %v1985, %v2003
    %v2012 = vld [vmem:[#allocation3 + $0x4] sm:$0xff]
    %v2013 = vld [vmem:[#allocation3 + $0xc] sm:$0xff]
    %v2014 = vld [vmem:[#allocation3 + $0x14] sm:$0xf]
    %v2018 = vcombine.high %v2012, %v2012
    %v2019 = vcombine.high %v2013, %v2013
    %2020 = vrot.lane.b32.xlu0 %v2012, 113
    %v2021 = vpop.permute.xlu0 %2020
    %2022 = vrot.lane.b32.xlu0 %v2018, 113
    %v2023 = vpop.permute.xlu0 %2022
    %2024 = vrot.lane.b32.xlu0 %v2013, 113
    %v2025 = vpop.permute.xlu0 %2024
    %2026 = vrot.lane.b32.xlu0 %v2019, 113
    %v2027 = vpop.permute.xlu0 %2026
    %2028 = vrot.lane.b32.xlu0 %v2014, 113
    %v2029 = vpop.permute.xlu0 %2028
    %v2030 = vsel %vm160, %v2021, %v2023
    %v2031 = vsel %vm160, %v2023, %v2025
    %v2032 = vsel %vm160, %v2025, %v2027
    %v2033 = vsel %vm160, %v2027, %v2029
    %v2038 = vsel %vm141, %v2030, %v2008
    %v2039 = vsel %vm142, %v2031, %v2009
    %v2040 = vsel %vm143, %v2032, %v2010
    %v2041 = vsel %vm144, %v2033, %v2011
    %2042 = vrot.lane.b32.xlu0 %v2012, 111
    %v2043 = vpop.permute.xlu0 %2042
    %2044 = vrot.lane.b32.xlu0 %v2018, 111
    %v2045 = vpop.permute.xlu0 %2044
    %2046 = vrot.lane.b32.xlu0 %v2013, 111
    %v2047 = vpop.permute.xlu0 %2046
    %2048 = vrot.lane.b32.xlu0 %v2019, 111
    %v2049 = vpop.permute.xlu0 %2048
    %2050 = vrot.lane.b32.xlu0 %v2014, 111
    %v2051 = vpop.permute.xlu0 %2050
    %v2052 = vsel %vm205, %v2043, %v2045
    %v2053 = vsel %vm205, %v2045, %v2047
    %v2054 = vsel %vm205, %v2047, %v2049
    %v2055 = vsel %vm205, %v2049, %v2051
    %v2060 = vsel %vm191, %v2052, %v2038
    %v2061 = vsel %vm192, %v2053, %v2039
    %v2062 = vsel %vm193, %v2054, %v2040
    %v2063 = vsel %vm194, %v2055, %v2041
    %v2064 = vld [vmem:[%s4] sm:$0xff]
    %2065 = vrot.lane.b32.xlu0 %v2012, 112
    %v2066 = vpop.permute.xlu0 %2065
    %2067 = vrot.lane.b32.xlu0 %v2018, 112
    %v2068 = vpop.permute.xlu0 %2067
    %2069 = vrot.lane.b32.xlu0 %v2013, 112
    %v2070 = vpop.permute.xlu0 %2069
    %2071 = vrot.lane.b32.xlu0 %v2019, 112
    %v2072 = vpop.permute.xlu0 %2071
    %2073 = vrot.lane.b32.xlu0 %v2014, 112
    %v2074 = vpop.permute.xlu0 %2073
    %v2075 = vsel %vm229, %v2066, %v2068
    %v2076 = vsel %vm229, %v2068, %v2070
    %v2077 = vsel %vm229, %v2070, %v2072
    %v2078 = vsel %vm229, %v2072, %v2074
    %2083 = vrot.lane.b32.xlu0 %v1964, 16
    %v2084 = vpop.permute.xlu0 %2083
    %2085 = vrot.lane.b32.xlu0 %v1970, 16
    %v2086 = vpop.permute.xlu0 %2085
    %2087 = vrot.lane.b32.xlu0 %v1965, 16
    %v2088 = vpop.permute.xlu0 %2087
    %2089 = vrot.lane.b32.xlu0 %v1971, 16
    %v2090 = vpop.permute.xlu0 %2089
    %2091 = vrot.lane.b32.xlu0 %v1966, 16
    %v2092 = vpop.permute.xlu0 %2091
    %v2093 = vsel %vm248, %v2084, %v2086
    %v2094 = vsel %vm248, %v2086, %v2088
    %v2095 = vsel %vm248, %v2088, %v2090
    %v2096 = vsel %vm248, %v2090, %v2092
    %v2101 = vsel %vm141, %v2075, %v2093
    %v2102 = vsel %vm142, %v2076, %v2094
    %v2103 = vsel %vm143, %v2077, %v2095
    %v2104 = vsel %vm144, %v2078, %v2096
    %s2105 = scalar_lea.vmem %s4, 8
    %v2106 = vld [vmem:[%s2105] sm:$0xff]
    %v2108 = vsel %vm263, %v2106, 0
    %v2111 = vsel %vm267, %v2101, 0
    %v2114 = vsel %vm267, %v2102, 0
    %v2117 = vsel %vm267, %v2103, 0
    %v2120 = vsel %vm267, %v2104, 0
    %2122 = vmatprep.subr.mxu0 %v2114
    %2123 = vmatpush1.msra.mxu0 %v2111
    %2124 = vmatprep.subr.mxu0 0.0
    %2125 = vmatpush1.msra.mxu0 0.0
    %2126 = vmatprep.subr.mxu0 0.0
    %2127 = vmatpush1.msra.mxu0 0.0
    %2128 = vmatprep.subr.mxu0 0.0
    %2129 = vmatpush1.msra.mxu0 0.0
    %2130 = vmatprep.subr.mxu0 0.0
    %2131 = vmatpush1.msra.mxu0 0.0
    %2132 = vmatprep.subr.mxu0 0.0
    %2133 = vmatpush1.msra.mxu0 0.0
    %2134 = vmatprep.subr.mxu0 0.0
    %2135 = vmatpush1.msra.mxu0 0.0
    %2136 = vmatprep.subr.mxu0 0.0
    %2137 = vmatpush1.msra.mxu0 0.0
    %2138 = vmatprep.subr.mxu0 0.0
    %2139 = vmatpush1.msra.mxu0 0.0
    %2140 = vmatprep.subr.mxu0 0.0
    %2141 = vmatpush1.msra.mxu0 0.0
    %2142 = vmatprep.subr.mxu0 0.0
    %2143 = vmatpush1.msra.mxu0 0.0
    %2144 = vmatprep.subr.mxu0 0.0
    %2145 = vmatpush1.msra.mxu0 0.0
    %2146 = vmatprep.subr.mxu0 0.0
    %2147 = vmatpush1.msra.mxu0 0.0
    %2148 = vmatprep.subr.mxu0 0.0
    %2149 = vmatpush1.msra.mxu0 0.0
    %2150 = vmatprep.subr.mxu0 0.0
    %2151 = vmatpush1.msra.mxu0 0.0
    %2152 = vmatprep.subr.mxu0 0.0
    %2153 = vmatpush1.msra.mxu0 0.0
    %2154 = vmatprep.subr.mxu0 0.0
    %2155 = vmatpush1.msra.mxu0 0.0
    %2156 = vmatprep.subr.mxu0 0.0
    %2157 = vmatpush1.msra.mxu0 0.0
    %2158 = vmatprep.subr.mxu0 0.0
    %2159 = vmatpush1.msra.mxu0 0.0
    %2160 = vmatprep.subr.mxu0 0.0
    %2161 = vmatpush1.msra.mxu0 0.0
    %2162 = vmatprep.subr.mxu0 0.0
    %2163 = vmatpush1.msra.mxu0 0.0
    %2164 = vmatprep.subr.mxu0 0.0
    %2165 = vmatpush1.msra.mxu0 0.0
    %2166 = vmatprep.subr.mxu0 0.0
    %2167 = vmatpush1.msra.mxu0 0.0
    %2168 = vmatprep.subr.mxu0 0.0
    %2169 = vmatpush1.msra.mxu0 0.0
    %2170 = vmatprep.subr.mxu0 0.0
    %2171 = vmatpush1.msra.mxu0 0.0
    %2172 = vmatprep.subr.mxu0 0.0
    %2173 = vmatpush1.msra.mxu0 0.0
    %2174 = vmatprep.subr.mxu0 0.0
    %2175 = vmatpush1.msra.mxu0 0.0
    %2176 = vmatprep.subr.mxu0 0.0
    %2177 = vmatpush1.msra.mxu0 0.0
    %2178 = vmatprep.subr.mxu0 0.0
    %2179 = vmatpush1.msra.mxu0 0.0
    %2180 = vmatprep.subr.mxu0 0.0
    %2181 = vmatpush1.msra.mxu0 0.0
    %2182 = vmatprep.subr.mxu0 0.0
    %2183 = vmatpush1.msra.mxu0 0.0
    %2184 = vmatprep.subr.mxu0 0.0
    %2185 = vmatpush1.msra.mxu0 0.0
    %2186 = vmatprep.mubr.f32.mxu0 0.0
    %2187 = vmatmul.mubr.f32.gmra.mrb[0].mxu0 %v2108
    %v2188 = vpop.f32.mrb[0].mxu0
    %v2189 = vadd.f32 0.0, %v2188
    %v2190 = vpop.f32.mrb[0].mxu0
    %v2191 = vadd.f32 0.0, %v2190
    %2192 = vdwg.mxu0
    %2193 = vmatprep.subr.mxu0 %v2120
    %2194 = vmatpush1.msra.mxu0 %v2117
    %2195 = vmatprep.subr.mxu0 0.0
    %2196 = vmatpush1.msra.mxu0 0.0
    %2197 = vmatprep.subr.mxu0 0.0
    %2198 = vmatpush1.msra.mxu0 0.0
    %2199 = vmatprep.subr.mxu0 0.0
    %2200 = vmatpush1.msra.mxu0 0.0
    %2201 = vmatprep.subr.mxu0 0.0
    %2202 = vmatpush1.msra.mxu0 0.0
    %2203 = vmatprep.subr.mxu0 0.0
    %2204 = vmatpush1.msra.mxu0 0.0
    %2205 = vmatprep.subr.mxu0 0.0
    %2206 = vmatpush1.msra.mxu0 0.0
    %2207 = vmatprep.subr.mxu0 0.0
    %2208 = vmatpush1.msra.mxu0 0.0
    %2209 = vmatprep.subr.mxu0 0.0
    %2210 = vmatpush1.msra.mxu0 0.0
    %2211 = vmatprep.subr.mxu0 0.0
    %2212 = vmatpush1.msra.mxu0 0.0
    %2213 = vmatprep.subr.mxu0 0.0
    %2214 = vmatpush1.msra.mxu0 0.0
    %2215 = vmatprep.subr.mxu0 0.0
    %2216 = vmatpush1.msra.mxu0 0.0
    %2217 = vmatprep.subr.mxu0 0.0
    %2218 = vmatpush1.msra.mxu0 0.0
    %2219 = vmatprep.subr.mxu0 0.0
    %2220 = vmatpush1.msra.mxu0 0.0
    %2221 = vmatprep.subr.mxu0 0.0
    %2222 = vmatpush1.msra.mxu0 0.0
    %2223 = vmatprep.subr.mxu0 0.0
    %2224 = vmatpush1.msra.mxu0 0.0
    %2225 = vmatprep.subr.mxu0 0.0
    %2226 = vmatpush1.msra.mxu0 0.0
    %2227 = vmatprep.subr.mxu0 0.0
    %2228 = vmatpush1.msra.mxu0 0.0
    %2229 = vmatprep.subr.mxu0 0.0
    %2230 = vmatpush1.msra.mxu0 0.0
    %2231 = vmatprep.subr.mxu0 0.0
    %2232 = vmatpush1.msra.mxu0 0.0
    %2233 = vmatprep.subr.mxu0 0.0
    %2234 = vmatpush1.msra.mxu0 0.0
    %2235 = vmatprep.subr.mxu0 0.0
    %2236 = vmatpush1.msra.mxu0 0.0
    %2237 = vmatprep.subr.mxu0 0.0
    %2238 = vmatpush1.msra.mxu0 0.0
    %2239 = vmatprep.subr.mxu0 0.0
    %2240 = vmatpush1.msra.mxu0 0.0
    %2241 = vmatprep.subr.mxu0 0.0
    %2242 = vmatpush1.msra.mxu0 0.0
    %2243 = vmatprep.subr.mxu0 0.0
    %2244 = vmatpush1.msra.mxu0 0.0
    %2245 = vmatprep.subr.mxu0 0.0
    %2246 = vmatpush1.msra.mxu0 0.0
    %2247 = vmatprep.subr.mxu0 0.0
    %2248 = vmatpush1.msra.mxu0 0.0
    %2249 = vmatprep.subr.mxu0 0.0
    %2250 = vmatpush1.msra.mxu0 0.0
    %2251 = vmatprep.subr.mxu0 0.0
    %2252 = vmatpush1.msra.mxu0 0.0
    %2253 = vmatprep.subr.mxu0 0.0
    %2254 = vmatpush1.msra.mxu0 0.0
    %2255 = vmatprep.subr.mxu0 0.0
    %2256 = vmatpush1.msra.mxu0 0.0
    %2257 = vmatprep.mubr.f32.mxu0 0.0
    %2258 = vmatmul.mubr.f32.gmra.mrb[0].mxu0 %v2108
    %v2259 = vpop.f32.mrb[0].mxu0
    %v2260 = vadd.f32 0.0, %v2259
    %v2261 = vpop.f32.mrb[0].mxu0
    %v2262 = vadd.f32 0.0, %v2261
    %2263 = vdwg.mxu0
    %v2265 = vsel %vm263, %v2064, 0
    %v2268 = vsel %vm267, %v2060, 0
    %v2271 = vsel %vm267, %v2061, 0
    %v2274 = vsel %vm267, %v2062, 0
    %v2277 = vsel %vm267, %v2063, 0
    %2279 = vmatprep.subr.mxu0 %v2271
    %2280 = vmatpush1.msra.mxu0 %v2268
    %2281 = vmatprep.subr.mxu0 0.0
    %2282 = vmatpush1.msra.mxu0 0.0
    %2283 = vmatprep.subr.mxu0 0.0
    %2284 = vmatpush1.msra.mxu0 0.0
    %2285 = vmatprep.subr.mxu0 0.0
    %2286 = vmatpush1.msra.mxu0 0.0
    %2287 = vmatprep.subr.mxu0 0.0
    %2288 = vmatpush1.msra.mxu0 0.0
    %2289 = vmatprep.subr.mxu0 0.0
    %2290 = vmatpush1.msra.mxu0 0.0
    %2291 = vmatprep.subr.mxu0 0.0
    %2292 = vmatpush1.msra.mxu0 0.0
    %2293 = vmatprep.subr.mxu0 0.0
    %2294 = vmatpush1.msra.mxu0 0.0
    %2295 = vmatprep.subr.mxu0 0.0
    %2296 = vmatpush1.msra.mxu0 0.0
    %2297 = vmatprep.subr.mxu0 0.0
    %2298 = vmatpush1.msra.mxu0 0.0
    %2299 = vmatprep.subr.mxu0 0.0
    %2300 = vmatpush1.msra.mxu0 0.0
    %2301 = vmatprep.subr.mxu0 0.0
    %2302 = vmatpush1.msra.mxu0 0.0
    %2303 = vmatprep.subr.mxu0 0.0
    %2304 = vmatpush1.msra.mxu0 0.0
    %2305 = vmatprep.subr.mxu0 0.0
    %2306 = vmatpush1.msra.mxu0 0.0
    %2307 = vmatprep.subr.mxu0 0.0
    %2308 = vmatpush1.msra.mxu0 0.0
    %2309 = vmatprep.subr.mxu0 0.0
    %2310 = vmatpush1.msra.mxu0 0.0
    %2311 = vmatprep.subr.mxu0 0.0
    %2312 = vmatpush1.msra.mxu0 0.0
    %2313 = vmatprep.subr.mxu0 0.0
    %2314 = vmatpush1.msra.mxu0 0.0
    %2315 = vmatprep.subr.mxu0 0.0
    %2316 = vmatpush1.msra.mxu0 0.0
    %2317 = vmatprep.subr.mxu0 0.0
    %2318 = vmatpush1.msra.mxu0 0.0
    %2319 = vmatprep.subr.mxu0 0.0
    %2320 = vmatpush1.msra.mxu0 0.0
    %2321 = vmatprep.subr.mxu0 0.0
    %2322 = vmatpush1.msra.mxu0 0.0
    %2323 = vmatprep.subr.mxu0 0.0
    %2324 = vmatpush1.msra.mxu0 0.0
    %2325 = vmatprep.subr.mxu0 0.0
    %2326 = vmatpush1.msra.mxu0 0.0
    %2327 = vmatprep.subr.mxu0 0.0
    %2328 = vmatpush1.msra.mxu0 0.0
    %2329 = vmatprep.subr.mxu0 0.0
    %2330 = vmatpush1.msra.mxu0 0.0
    %2331 = vmatprep.subr.mxu0 0.0
    %2332 = vmatpush1.msra.mxu0 0.0
    %2333 = vmatprep.subr.mxu0 0.0
    %2334 = vmatpush1.msra.mxu0 0.0
    %2335 = vmatprep.subr.mxu0 0.0
    %2336 = vmatpush1.msra.mxu0 0.0
    %2337 = vmatprep.subr.mxu0 0.0
    %2338 = vmatpush1.msra.mxu0 0.0
    %2339 = vmatprep.subr.mxu0 0.0
    %2340 = vmatpush1.msra.mxu0 0.0
    %2341 = vmatprep.subr.mxu0 0.0
    %2342 = vmatpush1.msra.mxu0 0.0
    %2343 = vmatprep.mubr.f32.mxu0 0.0
    %2344 = vmatmul.mubr.f32.gmra.mrb[0].mxu0 %v2265
    %v2345 = vpop.f32.mrb[0].mxu0
    %v2346 = vadd.f32 %v2189, %v2345
    %v2347 = vpop.f32.mrb[0].mxu0
    %v2348 = vadd.f32 %v2191, %v2347
    %2349 = vdwg.mxu0
    %2350 = vmatprep.subr.mxu0 %v2277
    %2351 = vmatpush1.msra.mxu0 %v2274
    %2352 = vmatprep.subr.mxu0 0.0
    %2353 = vmatpush1.msra.mxu0 0.0
    %2354 = vmatprep.subr.mxu0 0.0
    %2355 = vmatpush1.msra.mxu0 0.0
    %2356 = vmatprep.subr.mxu0 0.0
    %2357 = vmatpush1.msra.mxu0 0.0
    %2358 = vmatprep.subr.mxu0 0.0
    %2359 = vmatpush1.msra.mxu0 0.0
    %2360 = vmatprep.subr.mxu0 0.0
    %2361 = vmatpush1.msra.mxu0 0.0
    %2362 = vmatprep.subr.mxu0 0.0
    %2363 = vmatpush1.msra.mxu0 0.0
    %2364 = vmatprep.subr.mxu0 0.0
    %2365 = vmatpush1.msra.mxu0 0.0
    %2366 = vmatprep.subr.mxu0 0.0
    %2367 = vmatpush1.msra.mxu0 0.0
    %2368 = vmatprep.subr.mxu0 0.0
    %2369 = vmatpush1.msra.mxu0 0.0
    %2370 = vmatprep.subr.mxu0 0.0
    %2371 = vmatpush1.msra.mxu0 0.0
    %2372 = vmatprep.subr.mxu0 0.0
    %2373 = vmatpush1.msra.mxu0 0.0
    %2374 = vmatprep.subr.mxu0 0.0
    %2375 = vmatpush1.msra.mxu0 0.0
    %2376 = vmatprep.subr.mxu0 0.0
    %2377 = vmatpush1.msra.mxu0 0.0
    %2378 = vmatprep.subr.mxu0 0.0
    %2379 = vmatpush1.msra.mxu0 0.0
    %2380 = vmatprep.subr.mxu0 0.0
    %2381 = vmatpush1.msra.mxu0 0.0
    %2382 = vmatprep.subr.mxu0 0.0
    %2383 = vmatpush1.msra.mxu0 0.0
    %2384 = vmatprep.subr.mxu0 0.0
    %2385 = vmatpush1.msra.mxu0 0.0
    %2386 = vmatprep.subr.mxu0 0.0
    %2387 = vmatpush1.msra.mxu0 0.0
    %2388 = vmatprep.subr.mxu0 0.0
    %2389 = vmatpush1.msra.mxu0 0.0
    %2390 = vmatprep.subr.mxu0 0.0
    %2391 = vmatpush1.msra.mxu0 0.0
    %2392 = vmatprep.subr.mxu0 0.0
    %2393 = vmatpush1.msra.mxu0 0.0
    %2394 = vmatprep.subr.mxu0 0.0
    %2395 = vmatpush1.msra.mxu0 0.0
    %2396 = vmatprep.subr.mxu0 0.0
    %2397 = vmatpush1.msra.mxu0 0.0
    %2398 = vmatprep.subr.mxu0 0.0
    %2399 = vmatpush1.msra.mxu0 0.0
    %2400 = vmatprep.subr.mxu0 0.0
    %2401 = vmatpush1.msra.mxu0 0.0
    %2402 = vmatprep.subr.mxu0 0.0
    %2403 = vmatpush1.msra.mxu0 0.0
    %2404 = vmatprep.subr.mxu0 0.0
    %2405 = vmatpush1.msra.mxu0 0.0
    %2406 = vmatprep.subr.mxu0 0.0
    %2407 = vmatpush1.msra.mxu0 0.0
    %2408 = vmatprep.subr.mxu0 0.0
    %2409 = vmatpush1.msra.mxu0 0.0
    %2410 = vmatprep.subr.mxu0 0.0
    %2411 = vmatpush1.msra.mxu0 0.0
    %2412 = vmatprep.subr.mxu0 0.0
    %2413 = vmatpush1.msra.mxu0 0.0
    %2414 = vmatprep.mubr.f32.mxu0 0.0
    %2415 = vmatmul.mubr.f32.gmra.mrb[0].mxu0 %v2265
    %v2416 = vpop.f32.mrb[0].mxu0
    %v2417 = vadd.f32 %v2260, %v2416
    %v2418 = vpop.f32.mrb[0].mxu0
    %v2419 = vadd.f32 %v2262, %v2418
    %2420 = vdwg.mxu0
    %v2421 = vsel %vm596, %v2000, %v1982
    %v2422 = vsel %vm597, %v2001, %v1983
    %v2423 = vsel %vm598, %v2002, %v1984
    %v2424 = vsel %vm599, %v2003, %v1985
    %v2425 = vsel %vm141, %v2052, %v2421
    %v2426 = vsel %vm142, %v2053, %v2422
    %v2427 = vsel %vm143, %v2054, %v2423
    %v2428 = vsel %vm144, %v2055, %v2424
    %v2429 = vsel %vm626, %v2030, %v2425
    %v2430 = vsel %vm627, %v2031, %v2426
    %v2431 = vsel %vm628, %v2032, %v2427
    %v2432 = vsel %vm629, %v2033, %v2428
    %s2433 = scalar_lea.vmem %s4, 16
    %v2434 = vld [vmem:[%s2433] sm:$0xff]
    %v2436 = vsel %vm263, %v2434, 0
    %v2439 = vsel %vm267, %v2429, 0
    %v2442 = vsel %vm267, %v2430, 0
    %v2445 = vsel %vm267, %v2431, 0
    %v2448 = vsel %vm267, %v2432, 0
    %2450 = vmatprep.subr.mxu0 %v2442
    %2451 = vmatpush1.msra.mxu0 %v2439
    %2452 = vmatprep.subr.mxu0 0.0
    %2453 = vmatpush1.msra.mxu0 0.0
    %2454 = vmatprep.subr.mxu0 0.0
    %2455 = vmatpush1.msra.mxu0 0.0
    %2456 = vmatprep.subr.mxu0 0.0
    %2457 = vmatpush1.msra.mxu0 0.0
    %2458 = vmatprep.subr.mxu0 0.0
    %2459 = vmatpush1.msra.mxu0 0.0
    %2460 = vmatprep.subr.mxu0 0.0
    %2461 = vmatpush1.msra.mxu0 0.0
    %2462 = vmatprep.subr.mxu0 0.0
    %2463 = vmatpush1.msra.mxu0 0.0
    %2464 = vmatprep.subr.mxu0 0.0
    %2465 = vmatpush1.msra.mxu0 0.0
    %2466 = vmatprep.subr.mxu0 0.0
    %2467 = vmatpush1.msra.mxu0 0.0
    %2468 = vmatprep.subr.mxu0 0.0
    %2469 = vmatpush1.msra.mxu0 0.0
    %2470 = vmatprep.subr.mxu0 0.0
    %2471 = vmatpush1.msra.mxu0 0.0
    %2472 = vmatprep.subr.mxu0 0.0
    %2473 = vmatpush1.msra.mxu0 0.0
    %2474 = vmatprep.subr.mxu0 0.0
    %2475 = vmatpush1.msra.mxu0 0.0
    %2476 = vmatprep.subr.mxu0 0.0
    %2477 = vmatpush1.msra.mxu0 0.0
    %2478 = vmatprep.subr.mxu0 0.0
    %2479 = vmatpush1.msra.mxu0 0.0
    %2480 = vmatprep.subr.mxu0 0.0
    %2481 = vmatpush1.msra.mxu0 0.0
    %2482 = vmatprep.subr.mxu0 0.0
    %2483 = vmatpush1.msra.mxu0 0.0
    %2484 = vmatprep.subr.mxu0 0.0
    %2485 = vmatpush1.msra.mxu0 0.0
    %2486 = vmatprep.subr.mxu0 0.0
    %2487 = vmatpush1.msra.mxu0 0.0
    %2488 = vmatprep.subr.mxu0 0.0
    %2489 = vmatpush1.msra.mxu0 0.0
    %2490 = vmatprep.subr.mxu0 0.0
    %2491 = vmatpush1.msra.mxu0 0.0
    %2492 = vmatprep.subr.mxu0 0.0
    %2493 = vmatpush1.msra.mxu0 0.0
    %2494 = vmatprep.subr.mxu0 0.0
    %2495 = vmatpush1.msra.mxu0 0.0
    %2496 = vmatprep.subr.mxu0 0.0
    %2497 = vmatpush1.msra.mxu0 0.0
    %2498 = vmatprep.subr.mxu0 0.0
    %2499 = vmatpush1.msra.mxu0 0.0
    %2500 = vmatprep.subr.mxu0 0.0
    %2501 = vmatpush1.msra.mxu0 0.0
    %2502 = vmatprep.subr.mxu0 0.0
    %2503 = vmatpush1.msra.mxu0 0.0
    %2504 = vmatprep.subr.mxu0 0.0
    %2505 = vmatpush1.msra.mxu0 0.0
    %2506 = vmatprep.subr.mxu0 0.0
    %2507 = vmatpush1.msra.mxu0 0.0
    %2508 = vmatprep.subr.mxu0 0.0
    %2509 = vmatpush1.msra.mxu0 0.0
    %2510 = vmatprep.subr.mxu0 0.0
    %2511 = vmatpush1.msra.mxu0 0.0
    %2512 = vmatprep.subr.mxu0 0.0
    %2513 = vmatpush1.msra.mxu0 0.0
    %2514 = vmatprep.mubr.f32.mxu0 0.0
    %2515 = vmatmul.mubr.f32.gmra.mrb[0].mxu0 %v2436
    %v2516 = vpop.f32.mrb[0].mxu0
    %v2517 = vadd.f32 0.0, %v2516
    %v2518 = vpop.f32.mrb[0].mxu0
    %v2519 = vadd.f32 0.0, %v2518
    %2520 = vdwg.mxu0
    %2521 = vmatprep.subr.mxu0 %v2448
    %2522 = vmatpush1.msra.mxu0 %v2445
    %2523 = vmatprep.subr.mxu0 0.0
    %2524 = vmatpush1.msra.mxu0 0.0
    %2525 = vmatprep.subr.mxu0 0.0
    %2526 = vmatpush1.msra.mxu0 0.0
    %2527 = vmatprep.subr.mxu0 0.0
    %2528 = vmatpush1.msra.mxu0 0.0
    %2529 = vmatprep.subr.mxu0 0.0
    %2530 = vmatpush1.msra.mxu0 0.0
    %2531 = vmatprep.subr.mxu0 0.0
    %2532 = vmatpush1.msra.mxu0 0.0
    %2533 = vmatprep.subr.mxu0 0.0
    %2534 = vmatpush1.msra.mxu0 0.0
    %2535 = vmatprep.subr.mxu0 0.0
    %2536 = vmatpush1.msra.mxu0 0.0
    %2537 = vmatprep.subr.mxu0 0.0
    %2538 = vmatpush1.msra.mxu0 0.0
    %2539 = vmatprep.subr.mxu0 0.0
    %2540 = vmatpush1.msra.mxu0 0.0
    %2541 = vmatprep.subr.mxu0 0.0
    %2542 = vmatpush1.msra.mxu0 0.0
    %2543 = vmatprep.subr.mxu0 0.0
    %2544 = vmatpush1.msra.mxu0 0.0
    %2545 = vmatprep.subr.mxu0 0.0
    %2546 = vmatpush1.msra.mxu0 0.0
    %2547 = vmatprep.subr.mxu0 0.0
    %2548 = vmatpush1.msra.mxu0 0.0
    %2549 = vmatprep.subr.mxu0 0.0
    %2550 = vmatpush1.msra.mxu0 0.0
    %2551 = vmatprep.subr.mxu0 0.0
    %2552 = vmatpush1.msra.mxu0 0.0
    %2553 = vmatprep.subr.mxu0 0.0
    %2554 = vmatpush1.msra.mxu0 0.0
    %2555 = vmatprep.subr.mxu0 0.0
    %2556 = vmatpush1.msra.mxu0 0.0
    %2557 = vmatprep.subr.mxu0 0.0
    %2558 = vmatpush1.msra.mxu0 0.0
    %2559 = vmatprep.subr.mxu0 0.0
    %2560 = vmatpush1.msra.mxu0 0.0
    %2561 = vmatprep.subr.mxu0 0.0
    %2562 = vmatpush1.msra.mxu0 0.0
    %2563 = vmatprep.subr.mxu0 0.0
    %2564 = vmatpush1.msra.mxu0 0.0
    %2565 = vmatprep.subr.mxu0 0.0
    %2566 = vmatpush1.msra.mxu0 0.0
    %2567 = vmatprep.subr.mxu0 0.0
    %2568 = vmatpush1.msra.mxu0 0.0
    %2569 = vmatprep.subr.mxu0 0.0
    %2570 = vmatpush1.msra.mxu0 0.0
    %2571 = vmatprep.subr.mxu0 0.0
    %2572 = vmatpush1.msra.mxu0 0.0
    %2573 = vmatprep.subr.mxu0 0.0
    %2574 = vmatpush1.msra.mxu0 0.0
    %2575 = vmatprep.subr.mxu0 0.0
    %2576 = vmatpush1.msra.mxu0 0.0
    %2577 = vmatprep.subr.mxu0 0.0
    %2578 = vmatpush1.msra.mxu0 0.0
    %2579 = vmatprep.subr.mxu0 0.0
    %2580 = vmatpush1.msra.mxu0 0.0
    %2581 = vmatprep.subr.mxu0 0.0
    %2582 = vmatpush1.msra.mxu0 0.0
    %2583 = vmatprep.subr.mxu0 0.0
    %2584 = vmatpush1.msra.mxu0 0.0
    %2585 = vmatprep.mubr.f32.mxu0 0.0
    %2586 = vmatmul.mubr.f32.gmra.mrb[0].mxu0 %v2436
    %v2587 = vpop.f32.mrb[0].mxu0
    %v2588 = vadd.f32 0.0, %v2587
    %v2589 = vpop.f32.mrb[0].mxu0
    %v2590 = vadd.f32 0.0, %v2589
    %2591 = vdwg.mxu0
    %v2592 = vadd.f32 %v2346, %v2517
    %v2593 = vadd.f32 %v2348, %v2519
    %v2594 = vadd.f32 %v2417, %v2588
    %v2595 = vadd.f32 %v2419, %v2590
    %v2596 = vld [vmem:[#allocation3] sm:$0xff]
    %v2597 = vld [vmem:[#allocation3 + $0x8] sm:$0xff]
    %v2598 = vld [vmem:[#allocation3 + $0x10] sm:$0xf]
    %v2599 = vld [vmem:[#allocation3 + $0x4] sm:$0xff]
    %v2600 = vld [vmem:[#allocation3 + $0xc] sm:$0xff]
    %v2601 = vld [vmem:[#allocation3 + $0x14] sm:$0xf]
    %v2605 = vcombine.high %v2599, %v2599
    %v2606 = vcombine.high %v2600, %v2600
    %2607 = vrot.lane.b32.xlu0 %v2599, 127
    %v2608 = vpop.permute.xlu0 %2607
    %2609 = vrot.lane.b32.xlu0 %v2605, 127
    %v2610 = vpop.permute.xlu0 %2609
    %2611 = vrot.lane.b32.xlu0 %v2600, 127
    %v2612 = vpop.permute.xlu0 %2611
    %2613 = vrot.lane.b32.xlu0 %v2606, 127
    %v2614 = vpop.permute.xlu0 %2613
    %2615 = vrot.lane.b32.xlu0 %v2601, 127
    %v2616 = vpop.permute.xlu0 %2615
    %v2617 = vsel %vm818, %v2608, %v2610
    %v2618 = vsel %vm818, %v2610, %v2612
    %v2619 = vsel %vm818, %v2612, %v2614
    %v2620 = vsel %vm818, %v2614, %v2616
    %v2628 = vcombine.high %v2596, %v2596
    %v2629 = vcombine.high %v2597, %v2597
    %2630 = vrot.lane.b32.xlu0 %v2596, 1
    %v2631 = vpop.permute.xlu0 %2630
    %2632 = vrot.lane.b32.xlu0 %v2628, 1
    %v2633 = vpop.permute.xlu0 %2632
    %2634 = vrot.lane.b32.xlu0 %v2597, 1
    %v2635 = vpop.permute.xlu0 %2634
    %2636 = vrot.lane.b32.xlu0 %v2629, 1
    %v2637 = vpop.permute.xlu0 %2636
    %2638 = vrot.lane.b32.xlu0 %v2598, 1
    %v2639 = vpop.permute.xlu0 %2638
    %v2640 = vsel %vm842, %v2631, %v2633
    %v2641 = vsel %vm842, %v2633, %v2635
    %v2642 = vsel %vm842, %v2635, %v2637
    %v2643 = vsel %vm842, %v2637, %v2639
    %v2648 = vsel %vm70, %v2617, %v2640
    %v2649 = vsel %vm71, %v2618, %v2641
    %v2650 = vsel %vm72, %v2619, %v2642
    %v2651 = vsel %vm73, %v2620, %v2643
    %s2652 = scalar_lea.vmem %s4, 24
    %v2653 = vld [vmem:[%s2652] sm:$0xff]
    %v2655 = vsel %vm263, %v2653, 0
    %v2658 = vsel %vm267, %v2648, 0
    %v2661 = vsel %vm267, %v2649, 0
    %v2664 = vsel %vm267, %v2650, 0
    %v2667 = vsel %vm267, %v2651, 0
    %2669 = vmatprep.subr.mxu0 %v2661
    %2670 = vmatpush1.msra.mxu0 %v2658
    %2671 = vmatprep.subr.mxu0 0.0
    %2672 = vmatpush1.msra.mxu0 0.0
    %2673 = vmatprep.subr.mxu0 0.0
    %2674 = vmatpush1.msra.mxu0 0.0
    %2675 = vmatprep.subr.mxu0 0.0
    %2676 = vmatpush1.msra.mxu0 0.0
    %2677 = vmatprep.subr.mxu0 0.0
    %2678 = vmatpush1.msra.mxu0 0.0
    %2679 = vmatprep.subr.mxu0 0.0
    %2680 = vmatpush1.msra.mxu0 0.0
    %2681 = vmatprep.subr.mxu0 0.0
    %2682 = vmatpush1.msra.mxu0 0.0
    %2683 = vmatprep.subr.mxu0 0.0
    %2684 = vmatpush1.msra.mxu0 0.0
    %2685 = vmatprep.subr.mxu0 0.0
    %2686 = vmatpush1.msra.mxu0 0.0
    %2687 = vmatprep.subr.mxu0 0.0
    %2688 = vmatpush1.msra.mxu0 0.0
    %2689 = vmatprep.subr.mxu0 0.0
    %2690 = vmatpush1.msra.mxu0 0.0
    %2691 = vmatprep.subr.mxu0 0.0
    %2692 = vmatpush1.msra.mxu0 0.0
    %2693 = vmatprep.subr.mxu0 0.0
    %2694 = vmatpush1.msra.mxu0 0.0
    %2695 = vmatprep.subr.mxu0 0.0
    %2696 = vmatpush1.msra.mxu0 0.0
    %2697 = vmatprep.subr.mxu0 0.0
    %2698 = vmatpush1.msra.mxu0 0.0
    %2699 = vmatprep.subr.mxu0 0.0
    %2700 = vmatpush1.msra.mxu0 0.0
    %2701 = vmatprep.subr.mxu0 0.0
    %2702 = vmatpush1.msra.mxu0 0.0
    %2703 = vmatprep.subr.mxu0 0.0
    %2704 = vmatpush1.msra.mxu0 0.0
    %2705 = vmatprep.subr.mxu0 0.0
    %2706 = vmatpush1.msra.mxu0 0.0
    %2707 = vmatprep.subr.mxu0 0.0
    %2708 = vmatpush1.msra.mxu0 0.0
    %2709 = vmatprep.subr.mxu0 0.0
    %2710 = vmatpush1.msra.mxu0 0.0
    %2711 = vmatprep.subr.mxu0 0.0
    %2712 = vmatpush1.msra.mxu0 0.0
    %2713 = vmatprep.subr.mxu0 0.0
    %2714 = vmatpush1.msra.mxu0 0.0
    %2715 = vmatprep.subr.mxu0 0.0
    %2716 = vmatpush1.msra.mxu0 0.0
    %2717 = vmatprep.subr.mxu0 0.0
    %2718 = vmatpush1.msra.mxu0 0.0
    %2719 = vmatprep.subr.mxu0 0.0
    %2720 = vmatpush1.msra.mxu0 0.0
    %2721 = vmatprep.subr.mxu0 0.0
    %2722 = vmatpush1.msra.mxu0 0.0
    %2723 = vmatprep.subr.mxu0 0.0
    %2724 = vmatpush1.msra.mxu0 0.0
    %2725 = vmatprep.subr.mxu0 0.0
    %2726 = vmatpush1.msra.mxu0 0.0
    %2727 = vmatprep.subr.mxu0 0.0
    %2728 = vmatpush1.msra.mxu0 0.0
    %2729 = vmatprep.subr.mxu0 0.0
    %2730 = vmatpush1.msra.mxu0 0.0
    %2731 = vmatprep.subr.mxu0 0.0
    %2732 = vmatpush1.msra.mxu0 0.0
    %2733 = vmatprep.mubr.f32.mxu0 0.0
    %2734 = vmatmul.mubr.f32.gmra.mrb[0].mxu0 %v2655
    %v2735 = vpop.f32.mrb[0].mxu0
    %v2736 = vadd.f32 0.0, %v2735
    %v2737 = vpop.f32.mrb[0].mxu0
    %v2738 = vadd.f32 0.0, %v2737
    %2739 = vdwg.mxu0
    %2740 = vmatprep.subr.mxu0 %v2667
    %2741 = vmatpush1.msra.mxu0 %v2664
    %2742 = vmatprep.subr.mxu0 0.0
    %2743 = vmatpush1.msra.mxu0 0.0
    %2744 = vmatprep.subr.mxu0 0.0
    %2745 = vmatpush1.msra.mxu0 0.0
    %2746 = vmatprep.subr.mxu0 0.0
    %2747 = vmatpush1.msra.mxu0 0.0
    %2748 = vmatprep.subr.mxu0 0.0
    %2749 = vmatpush1.msra.mxu0 0.0
    %2750 = vmatprep.subr.mxu0 0.0
    %2751 = vmatpush1.msra.mxu0 0.0
    %2752 = vmatprep.subr.mxu0 0.0
    %2753 = vmatpush1.msra.mxu0 0.0
    %2754 = vmatprep.subr.mxu0 0.0
    %2755 = vmatpush1.msra.mxu0 0.0
    %2756 = vmatprep.subr.mxu0 0.0
    %2757 = vmatpush1.msra.mxu0 0.0
    %2758 = vmatprep.subr.mxu0 0.0
    %2759 = vmatpush1.msra.mxu0 0.0
    %2760 = vmatprep.subr.mxu0 0.0
    %2761 = vmatpush1.msra.mxu0 0.0
    %2762 = vmatprep.subr.mxu0 0.0
    %2763 = vmatpush1.msra.mxu0 0.0
    %2764 = vmatprep.subr.mxu0 0.0
    %2765 = vmatpush1.msra.mxu0 0.0
    %2766 = vmatprep.subr.mxu0 0.0
    %2767 = vmatpush1.msra.mxu0 0.0
    %2768 = vmatprep.subr.mxu0 0.0
    %2769 = vmatpush1.msra.mxu0 0.0
    %2770 = vmatprep.subr.mxu0 0.0
    %2771 = vmatpush1.msra.mxu0 0.0
    %2772 = vmatprep.subr.mxu0 0.0
    %2773 = vmatpush1.msra.mxu0 0.0
    %2774 = vmatprep.subr.mxu0 0.0
    %2775 = vmatpush1.msra.mxu0 0.0
    %2776 = vmatprep.subr.mxu0 0.0
    %2777 = vmatpush1.msra.mxu0 0.0
    %2778 = vmatprep.subr.mxu0 0.0
    %2779 = vmatpush1.msra.mxu0 0.0
    %2780 = vmatprep.subr.mxu0 0.0
    %2781 = vmatpush1.msra.mxu0 0.0
    %2782 = vmatprep.subr.mxu0 0.0
    %2783 = vmatpush1.msra.mxu0 0.0
    %2784 = vmatprep.subr.mxu0 0.0
    %2785 = vmatpush1.msra.mxu0 0.0
    %2786 = vmatprep.subr.mxu0 0.0
    %2787 = vmatpush1.msra.mxu0 0.0
    %2788 = vmatprep.subr.mxu0 0.0
    %2789 = vmatpush1.msra.mxu0 0.0
    %2790 = vmatprep.subr.mxu0 0.0
    %2791 = vmatpush1.msra.mxu0 0.0
    %2792 = vmatprep.subr.mxu0 0.0
    %2793 = vmatpush1.msra.mxu0 0.0
    %2794 = vmatprep.subr.mxu0 0.0
    %2795 = vmatpush1.msra.mxu0 0.0
    %2796 = vmatprep.subr.mxu0 0.0
    %2797 = vmatpush1.msra.mxu0 0.0
    %2798 = vmatprep.subr.mxu0 0.0
    %2799 = vmatpush1.msra.mxu0 0.0
    %2800 = vmatprep.subr.mxu0 0.0
    %2801 = vmatpush1.msra.mxu0 0.0
    %2802 = vmatprep.subr.mxu0 0.0
    %2803 = vmatpush1.msra.mxu0 0.0
    %2804 = vmatprep.mubr.f32.mxu0 0.0
    %2805 = vmatmul.mubr.f32.gmra.mrb[0].mxu0 %v2655
    %v2806 = vpop.f32.mrb[0].mxu0
    %v2807 = vadd.f32 0.0, %v2806
    %v2808 = vpop.f32.mrb[0].mxu0
    %v2809 = vadd.f32 0.0, %v2808
    %2810 = vdwg.mxu0
    %v2811 = vadd.f32 %v2592, %v2736
    %v2812 = vadd.f32 %v2593, %v2738
    %v2813 = vadd.f32 %v2594, %v2807
    %v2814 = vadd.f32 %v2595, %v2809
    %v2815 = vld [vmem:[#allocation3 + $0x4] sm:$0xff]
    %v2816 = vld [vmem:[#allocation3 + $0xc] sm:$0xff]
    %s2817 = scalar_lea.vmem %s4, 32
    %v2818 = vld [vmem:[%s2817] sm:$0xff]
    %v2821 = vcombine.high %v2815, %v2815
    %v2822 = vcombine.high %v2816, %v2816
    %v2824 = vsel %vm263, %v2818, 0
    %v2826 = vsel %vm267, %v2815, 0
    %v2828 = vsel %vm267, %v2821, 0
    %v2830 = vsel %vm267, %v2816, 0
    %v2832 = vsel %vm267, %v2822, 0
    %2834 = vmatprep.subr.mxu0 %v2828
    %2835 = vmatpush1.msra.mxu0 %v2826
    %2836 = vmatprep.subr.mxu0 0.0
    %2837 = vmatpush1.msra.mxu0 0.0
    %2838 = vmatprep.subr.mxu0 0.0
    %2839 = vmatpush1.msra.mxu0 0.0
    %2840 = vmatprep.subr.mxu0 0.0
    %2841 = vmatpush1.msra.mxu0 0.0
    %2842 = vmatprep.subr.mxu0 0.0
    %2843 = vmatpush1.msra.mxu0 0.0
    %2844 = vmatprep.subr.mxu0 0.0
    %2845 = vmatpush1.msra.mxu0 0.0
    %2846 = vmatprep.subr.mxu0 0.0
    %2847 = vmatpush1.msra.mxu0 0.0
    %2848 = vmatprep.subr.mxu0 0.0
    %2849 = vmatpush1.msra.mxu0 0.0
    %2850 = vmatprep.subr.mxu0 0.0
    %2851 = vmatpush1.msra.mxu0 0.0
    %2852 = vmatprep.subr.mxu0 0.0
    %2853 = vmatpush1.msra.mxu0 0.0
    %2854 = vmatprep.subr.mxu0 0.0
    %2855 = vmatpush1.msra.mxu0 0.0
    %2856 = vmatprep.subr.mxu0 0.0
    %2857 = vmatpush1.msra.mxu0 0.0
    %2858 = vmatprep.subr.mxu0 0.0
    %2859 = vmatpush1.msra.mxu0 0.0
    %2860 = vmatprep.subr.mxu0 0.0
    %2861 = vmatpush1.msra.mxu0 0.0
    %2862 = vmatprep.subr.mxu0 0.0
    %2863 = vmatpush1.msra.mxu0 0.0
    %2864 = vmatprep.subr.mxu0 0.0
    %2865 = vmatpush1.msra.mxu0 0.0
    %2866 = vmatprep.subr.mxu0 0.0
    %2867 = vmatpush1.msra.mxu0 0.0
    %2868 = vmatprep.subr.mxu0 0.0
    %2869 = vmatpush1.msra.mxu0 0.0
    %2870 = vmatprep.subr.mxu0 0.0
    %2871 = vmatpush1.msra.mxu0 0.0
    %2872 = vmatprep.subr.mxu0 0.0
    %2873 = vmatpush1.msra.mxu0 0.0
    %2874 = vmatprep.subr.mxu0 0.0
    %2875 = vmatpush1.msra.mxu0 0.0
    %2876 = vmatprep.subr.mxu0 0.0
    %2877 = vmatpush1.msra.mxu0 0.0
    %2878 = vmatprep.subr.mxu0 0.0
    %2879 = vmatpush1.msra.mxu0 0.0
    %2880 = vmatprep.subr.mxu0 0.0
    %2881 = vmatpush1.msra.mxu0 0.0
    %2882 = vmatprep.subr.mxu0 0.0
    %2883 = vmatpush1.msra.mxu0 0.0
    %2884 = vmatprep.subr.mxu0 0.0
    %2885 = vmatpush1.msra.mxu0 0.0
    %2886 = vmatprep.subr.mxu0 0.0
    %2887 = vmatpush1.msra.mxu0 0.0
    %2888 = vmatprep.subr.mxu0 0.0
    %2889 = vmatpush1.msra.mxu0 0.0
    %2890 = vmatprep.subr.mxu0 0.0
    %2891 = vmatpush1.msra.mxu0 0.0
    %2892 = vmatprep.subr.mxu0 0.0
    %2893 = vmatpush1.msra.mxu0 0.0
    %2894 = vmatprep.subr.mxu0 0.0
    %2895 = vmatpush1.msra.mxu0 0.0
    %2896 = vmatprep.subr.mxu0 0.0
    %2897 = vmatpush1.msra.mxu0 0.0
    %2898 = vmatprep.mubr.f32.mxu0 0.0
    %2899 = vmatmul.mubr.f32.gmra.mrb[0].mxu0 %v2824
    %v2900 = vpop.f32.mrb[0].mxu0
    %v2901 = vadd.f32 0.0, %v2900
    %v2902 = vpop.f32.mrb[0].mxu0
    %v2903 = vadd.f32 0.0, %v2902
    %2904 = vdwg.mxu0
    %2905 = vmatprep.subr.mxu0 %v2832
    %2906 = vmatpush1.msra.mxu0 %v2830
    %2907 = vmatprep.subr.mxu0 0.0
    %2908 = vmatpush1.msra.mxu0 0.0
    %2909 = vmatprep.subr.mxu0 0.0
    %2910 = vmatpush1.msra.mxu0 0.0
    %2911 = vmatprep.subr.mxu0 0.0
    %2912 = vmatpush1.msra.mxu0 0.0
    %2913 = vmatprep.subr.mxu0 0.0
    %2914 = vmatpush1.msra.mxu0 0.0
    %2915 = vmatprep.subr.mxu0 0.0
    %2916 = vmatpush1.msra.mxu0 0.0
    %2917 = vmatprep.subr.mxu0 0.0
    %2918 = vmatpush1.msra.mxu0 0.0
    %2919 = vmatprep.subr.mxu0 0.0
    %2920 = vmatpush1.msra.mxu0 0.0
    %2921 = vmatprep.subr.mxu0 0.0
    %2922 = vmatpush1.msra.mxu0 0.0
    %2923 = vmatprep.subr.mxu0 0.0
    %2924 = vmatpush1.msra.mxu0 0.0
    %2925 = vmatprep.subr.mxu0 0.0
    %2926 = vmatpush1.msra.mxu0 0.0
    %2927 = vmatprep.subr.mxu0 0.0
    %2928 = vmatpush1.msra.mxu0 0.0
    %2929 = vmatprep.subr.mxu0 0.0
    %2930 = vmatpush1.msra.mxu0 0.0
    %2931 = vmatprep.subr.mxu0 0.0
    %2932 = vmatpush1.msra.mxu0 0.0
    %2933 = vmatprep.subr.mxu0 0.0
    %2934 = vmatpush1.msra.mxu0 0.0
    %2935 = vmatprep.subr.mxu0 0.0
    %2936 = vmatpush1.msra.mxu0 0.0
    %2937 = vmatprep.subr.mxu0 0.0
    %2938 = vmatpush1.msra.mxu0 0.0
    %2939 = vmatprep.subr.mxu0 0.0
    %2940 = vmatpush1.msra.mxu0 0.0
    %2941 = vmatprep.subr.mxu0 0.0
    %2942 = vmatpush1.msra.mxu0 0.0
    %2943 = vmatprep.subr.mxu0 0.0
    %2944 = vmatpush1.msra.mxu0 0.0
    %2945 = vmatprep.subr.mxu0 0.0
    %2946 = vmatpush1.msra.mxu0 0.0
    %2947 = vmatprep.subr.mxu0 0.0
    %2948 = vmatpush1.msra.mxu0 0.0
    %2949 = vmatprep.subr.mxu0 0.0
    %2950 = vmatpush1.msra.mxu0 0.0
    %2951 = vmatprep.subr.mxu0 0.0
    %2952 = vmatpush1.msra.mxu0 0.0
    %2953 = vmatprep.subr.mxu0 0.0
    %2954 = vmatpush1.msra.mxu0 0.0
    %2955 = vmatprep.subr.mxu0 0.0
    %2956 = vmatpush1.msra.mxu0 0.0
    %2957 = vmatprep.subr.mxu0 0.0
    %2958 = vmatpush1.msra.mxu0 0.0
    %2959 = vmatprep.subr.mxu0 0.0
    %2960 = vmatpush1.msra.mxu0 0.0
    %2961 = vmatprep.subr.mxu0 0.0
    %2962 = vmatpush1.msra.mxu0 0.0
    %2963 = vmatprep.subr.mxu0 0.0
    %2964 = vmatpush1.msra.mxu0 0.0
    %2965 = vmatprep.subr.mxu0 0.0
    %2966 = vmatpush1.msra.mxu0 0.0
    %2967 = vmatprep.subr.mxu0 0.0
    %2968 = vmatpush1.msra.mxu0 0.0
    %2969 = vmatprep.mubr.f32.mxu0 0.0
    %2970 = vmatmul.mubr.f32.gmra.mrb[0].mxu0 %v2824
    %v2971 = vpop.f32.mrb[0].mxu0
    %v2972 = vadd.f32 0.0, %v2971
    %v2973 = vpop.f32.mrb[0].mxu0
    %v2974 = vadd.f32 0.0, %v2973
    %2975 = vdwg.mxu0
    %v2976 = vadd.f32 %v2811, %v2901
    %v2977 = vadd.f32 %v2812, %v2903
    %v2978 = vadd.f32 %v2813, %v2972
    %v2979 = vadd.f32 %v2814, %v2974
    %v2980 = vsel %vm596, %v2640, %v2617
    %v2981 = vsel %vm597, %v2641, %v2618
    %v2982 = vsel %vm598, %v2642, %v2619
    %v2983 = vsel %vm599, %v2643, %v2620
    %s2984 = scalar_lea.vmem %s4, 40
    %v2985 = vld [vmem:[%s2984] sm:$0xff]
    %v2987 = vsel %vm263, %v2985, 0
    %v2990 = vsel %vm267, %v2980, 0
    %v2993 = vsel %vm267, %v2981, 0
    %v2996 = vsel %vm267, %v2982, 0
    %v2999 = vsel %vm267, %v2983, 0
    %3001 = vmatprep.subr.mxu0 %v2993
    %3002 = vmatpush1.msra.mxu0 %v2990
    %3003 = vmatprep.subr.mxu0 0.0
    %3004 = vmatpush1.msra.mxu0 0.0
    %3005 = vmatprep.subr.mxu0 0.0
    %3006 = vmatpush1.msra.mxu0 0.0
    %3007 = vmatprep.subr.mxu0 0.0
    %3008 = vmatpush1.msra.mxu0 0.0
    %3009 = vmatprep.subr.mxu0 0.0
    %3010 = vmatpush1.msra.mxu0 0.0
    %3011 = vmatprep.subr.mxu0 0.0
    %3012 = vmatpush1.msra.mxu0 0.0
    %3013 = vmatprep.subr.mxu0 0.0
    %3014 = vmatpush1.msra.mxu0 0.0
    %3015 = vmatprep.subr.mxu0 0.0
    %3016 = vmatpush1.msra.mxu0 0.0
    %3017 = vmatprep.subr.mxu0 0.0
    %3018 = vmatpush1.msra.mxu0 0.0
    %3019 = vmatprep.subr.mxu0 0.0
    %3020 = vmatpush1.msra.mxu0 0.0
    %3021 = vmatprep.subr.mxu0 0.0
    %3022 = vmatpush1.msra.mxu0 0.0
    %3023 = vmatprep.subr.mxu0 0.0
    %3024 = vmatpush1.msra.mxu0 0.0
    %3025 = vmatprep.subr.mxu0 0.0
    %3026 = vmatpush1.msra.mxu0 0.0
    %3027 = vmatprep.subr.mxu0 0.0
    %3028 = vmatpush1.msra.mxu0 0.0
    %3029 = vmatprep.subr.mxu0 0.0
    %3030 = vmatpush1.msra.mxu0 0.0
    %3031 = vmatprep.subr.mxu0 0.0
    %3032 = vmatpush1.msra.mxu0 0.0
    %3033 = vmatprep.subr.mxu0 0.0
    %3034 = vmatpush1.msra.mxu0 0.0
    %3035 = vmatprep.subr.mxu0 0.0
    %3036 = vmatpush1.msra.mxu0 0.0
    %3037 = vmatprep.subr.mxu0 0.0
    %3038 = vmatpush1.msra.mxu0 0.0
    %3039 = vmatprep.subr.mxu0 0.0
    %3040 = vmatpush1.msra.mxu0 0.0
    %3041 = vmatprep.subr.mxu0 0.0
    %3042 = vmatpush1.msra.mxu0 0.0
    %3043 = vmatprep.subr.mxu0 0.0
    %3044 = vmatpush1.msra.mxu0 0.0
    %3045 = vmatprep.subr.mxu0 0.0
    %3046 = vmatpush1.msra.mxu0 0.0
    %3047 = vmatprep.subr.mxu0 0.0
    %3048 = vmatpush1.msra.mxu0 0.0
    %3049 = vmatprep.subr.mxu0 0.0
    %3050 = vmatpush1.msra.mxu0 0.0
    %3051 = vmatprep.subr.mxu0 0.0
    %3052 = vmatpush1.msra.mxu0 0.0
    %3053 = vmatprep.subr.mxu0 0.0
    %3054 = vmatpush1.msra.mxu0 0.0
    %3055 = vmatprep.subr.mxu0 0.0
    %3056 = vmatpush1.msra.mxu0 0.0
    %3057 = vmatprep.subr.mxu0 0.0
    %3058 = vmatpush1.msra.mxu0 0.0
    %3059 = vmatprep.subr.mxu0 0.0
    %3060 = vmatpush1.msra.mxu0 0.0
    %3061 = vmatprep.subr.mxu0 0.0
    %3062 = vmatpush1.msra.mxu0 0.0
    %3063 = vmatprep.subr.mxu0 0.0
    %3064 = vmatpush1.msra.mxu0 0.0
    %3065 = vmatprep.mubr.f32.mxu0 0.0
    %3066 = vmatmul.mubr.f32.gmra.mrb[0].mxu0 %v2987
    %v3067 = vpop.f32.mrb[0].mxu0
    %v3068 = vadd.f32 0.0, %v3067
    %v3069 = vpop.f32.mrb[0].mxu0
    %v3070 = vadd.f32 0.0, %v3069
    %3071 = vdwg.mxu0
    %3072 = vmatprep.subr.mxu0 %v2999
    %3073 = vmatpush1.msra.mxu0 %v2996
    %3074 = vmatprep.subr.mxu0 0.0
    %3075 = vmatpush1.msra.mxu0 0.0
    %3076 = vmatprep.subr.mxu0 0.0
    %3077 = vmatpush1.msra.mxu0 0.0
    %3078 = vmatprep.subr.mxu0 0.0
    %3079 = vmatpush1.msra.mxu0 0.0
    %3080 = vmatprep.subr.mxu0 0.0
    %3081 = vmatpush1.msra.mxu0 0.0
    %3082 = vmatprep.subr.mxu0 0.0
    %3083 = vmatpush1.msra.mxu0 0.0
    %3084 = vmatprep.subr.mxu0 0.0
    %3085 = vmatpush1.msra.mxu0 0.0
    %3086 = vmatprep.subr.mxu0 0.0
    %3087 = vmatpush1.msra.mxu0 0.0
    %3088 = vmatprep.subr.mxu0 0.0
    %3089 = vmatpush1.msra.mxu0 0.0
    %3090 = vmatprep.subr.mxu0 0.0
    %3091 = vmatpush1.msra.mxu0 0.0
    %3092 = vmatprep.subr.mxu0 0.0
    %3093 = vmatpush1.msra.mxu0 0.0
    %3094 = vmatprep.subr.mxu0 0.0
    %3095 = vmatpush1.msra.mxu0 0.0
    %3096 = vmatprep.subr.mxu0 0.0
    %3097 = vmatpush1.msra.mxu0 0.0
    %3098 = vmatprep.subr.mxu0 0.0
    %3099 = vmatpush1.msra.mxu0 0.0
    %3100 = vmatprep.subr.mxu0 0.0
    %3101 = vmatpush1.msra.mxu0 0.0
    %3102 = vmatprep.subr.mxu0 0.0
    %3103 = vmatpush1.msra.mxu0 0.0
    %3104 = vmatprep.subr.mxu0 0.0
    %3105 = vmatpush1.msra.mxu0 0.0
    %3106 = vmatprep.subr.mxu0 0.0
    %3107 = vmatpush1.msra.mxu0 0.0
    %3108 = vmatprep.subr.mxu0 0.0
    %3109 = vmatpush1.msra.mxu0 0.0
    %3110 = vmatprep.subr.mxu0 0.0
    %3111 = vmatpush1.msra.mxu0 0.0
    %3112 = vmatprep.subr.mxu0 0.0
    %3113 = vmatpush1.msra.mxu0 0.0
    %3114 = vmatprep.subr.mxu0 0.0
    %3115 = vmatpush1.msra.mxu0 0.0
    %3116 = vmatprep.subr.mxu0 0.0
    %3117 = vmatpush1.msra.mxu0 0.0
    %3118 = vmatprep.subr.mxu0 0.0
    %3119 = vmatpush1.msra.mxu0 0.0
    %3120 = vmatprep.subr.mxu0 0.0
    %3121 = vmatpush1.msra.mxu0 0.0
    %3122 = vmatprep.subr.mxu0 0.0
    %3123 = vmatpush1.msra.mxu0 0.0
    %3124 = vmatprep.subr.mxu0 0.0
    %3125 = vmatpush1.msra.mxu0 0.0
    %3126 = vmatprep.subr.mxu0 0.0
    %3127 = vmatpush1.msra.mxu0 0.0
    %3128 = vmatprep.subr.mxu0 0.0
    %3129 = vmatpush1.msra.mxu0 0.0
    %3130 = vmatprep.subr.mxu0 0.0
    %3131 = vmatpush1.msra.mxu0 0.0
    %3132 = vmatprep.subr.mxu0 0.0
    %3133 = vmatpush1.msra.mxu0 0.0
    %3134 = vmatprep.subr.mxu0 0.0
    %3135 = vmatpush1.msra.mxu0 0.0
    %3136 = vmatprep.mubr.f32.mxu0 0.0
    %3137 = vmatmul.mubr.f32.gmra.mrb[0].mxu0 %v2987
    %v3138 = vpop.f32.mrb[0].mxu0
    %v3139 = vadd.f32 0.0, %v3138
    %v3140 = vpop.f32.mrb[0].mxu0
    %v3141 = vadd.f32 0.0, %v3140
    %3142 = vdwg.mxu0
    %v3143 = vadd.f32 %v2976, %v3068
    %v3144 = vadd.f32 %v2977, %v3070
    %v3145 = vadd.f32 %v2978, %v3139
    %v3146 = vadd.f32 %v2979, %v3141
    %v3147 = vsel %vm70, %v2052, %v2030
    %v3148 = vsel %vm71, %v2053, %v2031
    %v3149 = vsel %vm72, %v2054, %v2032
    %v3150 = vsel %vm73, %v2055, %v2033
    %v3151 = vsel %vm1371, %v2000, %v3147
    %v3152 = vsel %vm1372, %v2001, %v3148
    %v3153 = vsel %vm1373, %v2002, %v3149
    %v3154 = vsel %vm1374, %v2003, %v3150
    %v3155 = vsel %vm1397, %v1982, %v3151
    %v3156 = vsel %vm1398, %v1983, %v3152
    %v3157 = vsel %vm1399, %v1984, %v3153
    %v3158 = vsel %vm1400, %v1985, %v3154
    %s3159 = scalar_lea.vmem %s4, 48
    %v3160 = vld [vmem:[%s3159] sm:$0xff]
    %v3162 = vsel %vm263, %v3160, 0
    %v3165 = vsel %vm267, %v3155, 0
    %v3168 = vsel %vm267, %v3156, 0
    %v3171 = vsel %vm267, %v3157, 0
    %v3174 = vsel %vm267, %v3158, 0
    %3176 = vmatprep.subr.mxu0 %v3168
    %3177 = vmatpush1.msra.mxu0 %v3165
    %3178 = vmatprep.subr.mxu0 0.0
    %3179 = vmatpush1.msra.mxu0 0.0
    %3180 = vmatprep.subr.mxu0 0.0
    %3181 = vmatpush1.msra.mxu0 0.0
    %3182 = vmatprep.subr.mxu0 0.0
    %3183 = vmatpush1.msra.mxu0 0.0
    %3184 = vmatprep.subr.mxu0 0.0
    %3185 = vmatpush1.msra.mxu0 0.0
    %3186 = vmatprep.subr.mxu0 0.0
    %3187 = vmatpush1.msra.mxu0 0.0
    %3188 = vmatprep.subr.mxu0 0.0
    %3189 = vmatpush1.msra.mxu0 0.0
    %3190 = vmatprep.subr.mxu0 0.0
    %3191 = vmatpush1.msra.mxu0 0.0
    %3192 = vmatprep.subr.mxu0 0.0
    %3193 = vmatpush1.msra.mxu0 0.0
    %3194 = vmatprep.subr.mxu0 0.0
    %3195 = vmatpush1.msra.mxu0 0.0
    %3196 = vmatprep.subr.mxu0 0.0
    %3197 = vmatpush1.msra.mxu0 0.0
    %3198 = vmatprep.subr.mxu0 0.0
    %3199 = vmatpush1.msra.mxu0 0.0
    %3200 = vmatprep.subr.mxu0 0.0
    %3201 = vmatpush1.msra.mxu0 0.0
    %3202 = vmatprep.subr.mxu0 0.0
    %3203 = vmatpush1.msra.mxu0 0.0
    %3204 = vmatprep.subr.mxu0 0.0
    %3205 = vmatpush1.msra.mxu0 0.0
    %3206 = vmatprep.subr.mxu0 0.0
    %3207 = vmatpush1.msra.mxu0 0.0
    %3208 = vmatprep.subr.mxu0 0.0
    %3209 = vmatpush1.msra.mxu0 0.0
    %3210 = vmatprep.subr.mxu0 0.0
    %3211 = vmatpush1.msra.mxu0 0.0
    %3212 = vmatprep.subr.mxu0 0.0
    %3213 = vmatpush1.msra.mxu0 0.0
    %3214 = vmatprep.subr.mxu0 0.0
    %3215 = vmatpush1.msra.mxu0 0.0
    %3216 = vmatprep.subr.mxu0 0.0
    %3217 = vmatpush1.msra.mxu0 0.0
    %3218 = vmatprep.subr.mxu0 0.0
    %3219 = vmatpush1.msra.mxu0 0.0
    %3220 = vmatprep.subr.mxu0 0.0
    %3221 = vmatpush1.msra.mxu0 0.0
    %3222 = vmatprep.subr.mxu0 0.0
    %3223 = vmatpush1.msra.mxu0 0.0
    %3224 = vmatprep.subr.mxu0 0.0
    %3225 = vmatpush1.msra.mxu0 0.0
    %3226 = vmatprep.subr.mxu0 0.0
    %3227 = vmatpush1.msra.mxu0 0.0
    %3228 = vmatprep.subr.mxu0 0.0
    %3229 = vmatpush1.msra.mxu0 0.0
    %3230 = vmatprep.subr.mxu0 0.0
    %3231 = vmatpush1.msra.mxu0 0.0
    %3232 = vmatprep.subr.mxu0 0.0
    %3233 = vmatpush1.msra.mxu0 0.0
    %3234 = vmatprep.subr.mxu0 0.0
    %3235 = vmatpush1.msra.mxu0 0.0
    %3236 = vmatprep.subr.mxu0 0.0
    %3237 = vmatpush1.msra.mxu0 0.0
    %3238 = vmatprep.subr.mxu0 0.0
    %3239 = vmatpush1.msra.mxu0 0.0
    %3240 = vmatprep.mubr.f32.mxu0 0.0
    %3241 = vmatmul.mubr.f32.gmra.mrb[0].mxu0 %v3162
    %v3242 = vpop.f32.mrb[0].mxu0
    %v3243 = vadd.f32 0.0, %v3242
    %v3244 = vpop.f32.mrb[0].mxu0
    %v3245 = vadd.f32 0.0, %v3244
    %3246 = vdwg.mxu0
    %3247 = vmatprep.subr.mxu0 %v3174
    %3248 = vmatpush1.msra.mxu0 %v3171
    %3249 = vmatprep.subr.mxu0 0.0
    %3250 = vmatpush1.msra.mxu0 0.0
    %3251 = vmatprep.subr.mxu0 0.0
    %3252 = vmatpush1.msra.mxu0 0.0
    %3253 = vmatprep.subr.mxu0 0.0
    %3254 = vmatpush1.msra.mxu0 0.0
    %3255 = vmatprep.subr.mxu0 0.0
    %3256 = vmatpush1.msra.mxu0 0.0
    %3257 = vmatprep.subr.mxu0 0.0
    %3258 = vmatpush1.msra.mxu0 0.0
    %3259 = vmatprep.subr.mxu0 0.0
    %3260 = vmatpush1.msra.mxu0 0.0
    %3261 = vmatprep.subr.mxu0 0.0
    %3262 = vmatpush1.msra.mxu0 0.0
    %3263 = vmatprep.subr.mxu0 0.0
    %3264 = vmatpush1.msra.mxu0 0.0
    %3265 = vmatprep.subr.mxu0 0.0
    %3266 = vmatpush1.msra.mxu0 0.0
    %3267 = vmatprep.subr.mxu0 0.0
    %3268 = vmatpush1.msra.mxu0 0.0
    %3269 = vmatprep.subr.mxu0 0.0
    %3270 = vmatpush1.msra.mxu0 0.0
    %3271 = vmatprep.subr.mxu0 0.0
    %3272 = vmatpush1.msra.mxu0 0.0
    %3273 = vmatprep.subr.mxu0 0.0
    %3274 = vmatpush1.msra.mxu0 0.0
    %3275 = vmatprep.subr.mxu0 0.0
    %3276 = vmatpush1.msra.mxu0 0.0
    %3277 = vmatprep.subr.mxu0 0.0
    %3278 = vmatpush1.msra.mxu0 0.0
    %3279 = vmatprep.subr.mxu0 0.0
    %3280 = vmatpush1.msra.mxu0 0.0
    %3281 = vmatprep.subr.mxu0 0.0
    %3282 = vmatpush1.msra.mxu0 0.0
    %3283 = vmatprep.subr.mxu0 0.0
    %3284 = vmatpush1.msra.mxu0 0.0
    %3285 = vmatprep.subr.mxu0 0.0
    %3286 = vmatpush1.msra.mxu0 0.0
    %3287 = vmatprep.subr.mxu0 0.0
    %3288 = vmatpush1.msra.mxu0 0.0
    %3289 = vmatprep.subr.mxu0 0.0
    %3290 = vmatpush1.msra.mxu0 0.0
    %3291 = vmatprep.subr.mxu0 0.0
    %3292 = vmatpush1.msra.mxu0 0.0
    %3293 = vmatprep.subr.mxu0 0.0
    %3294 = vmatpush1.msra.mxu0 0.0
    %3295 = vmatprep.subr.mxu0 0.0
    %3296 = vmatpush1.msra.mxu0 0.0
    %3297 = vmatprep.subr.mxu0 0.0
    %3298 = vmatpush1.msra.mxu0 0.0
    %3299 = vmatprep.subr.mxu0 0.0
    %3300 = vmatpush1.msra.mxu0 0.0
    %3301 = vmatprep.subr.mxu0 0.0
    %3302 = vmatpush1.msra.mxu0 0.0
    %3303 = vmatprep.subr.mxu0 0.0
    %3304 = vmatpush1.msra.mxu0 0.0
    %3305 = vmatprep.subr.mxu0 0.0
    %3306 = vmatpush1.msra.mxu0 0.0
    %3307 = vmatprep.subr.mxu0 0.0
    %3308 = vmatpush1.msra.mxu0 0.0
    %3309 = vmatprep.subr.mxu0 0.0
    %3310 = vmatpush1.msra.mxu0 0.0
    %3311 = vmatprep.mubr.f32.mxu0 0.0
    %3312 = vmatmul.mubr.f32.gmra.mrb[0].mxu0 %v3162
    %v3313 = vpop.f32.mrb[0].mxu0
    %v3314 = vadd.f32 0.0, %v3313
    %v3315 = vpop.f32.mrb[0].mxu0
    %v3316 = vadd.f32 0.0, %v3315
    %3317 = vdwg.mxu0
    %v3318 = vadd.f32 %v3143, %v3243
    %v3319 = vadd.f32 %v3144, %v3245
    %v3320 = vadd.f32 %v3145, %v3314
    %v3321 = vadd.f32 %v3146, %v3316
    %v3322 = vsel %vm1371, %v2093, %v2075
    %v3323 = vsel %vm1372, %v2094, %v2076
    %v3324 = vsel %vm1373, %v2095, %v2077
    %v3325 = vsel %vm1374, %v2096, %v2078
    %s3326 = scalar_lea.vmem %s4, 56
    %v3327 = vld [vmem:[%s3326] sm:$0xff]
    %v3329 = vsel %vm263, %v3327, 0
    %v3332 = vsel %vm267, %v3322, 0
    %v3335 = vsel %vm267, %v3323, 0
    %v3338 = vsel %vm267, %v3324, 0
    %v3341 = vsel %vm267, %v3325, 0
    %3343 = vmatprep.subr.mxu0 %v3335
    %3344 = vmatpush1.msra.mxu0 %v3332
    %3345 = vmatprep.subr.mxu0 0.0
    %3346 = vmatpush1.msra.mxu0 0.0
    %3347 = vmatprep.subr.mxu0 0.0
    %3348 = vmatpush1.msra.mxu0 0.0
    %3349 = vmatprep.subr.mxu0 0.0
    %3350 = vmatpush1.msra.mxu0 0.0
    %3351 = vmatprep.subr.mxu0 0.0
    %3352 = vmatpush1.msra.mxu0 0.0
    %3353 = vmatprep.subr.mxu0 0.0
    %3354 = vmatpush1.msra.mxu0 0.0
    %3355 = vmatprep.subr.mxu0 0.0
    %3356 = vmatpush1.msra.mxu0 0.0
    %3357 = vmatprep.subr.mxu0 0.0
    %3358 = vmatpush1.msra.mxu0 0.0
    %3359 = vmatprep.subr.mxu0 0.0
    %3360 = vmatpush1.msra.mxu0 0.0
    %3361 = vmatprep.subr.mxu0 0.0
    %3362 = vmatpush1.msra.mxu0 0.0
    %3363 = vmatprep.subr.mxu0 0.0
    %3364 = vmatpush1.msra.mxu0 0.0
    %3365 = vmatprep.subr.mxu0 0.0
    %3366 = vmatpush1.msra.mxu0 0.0
    %3367 = vmatprep.subr.mxu0 0.0
    %3368 = vmatpush1.msra.mxu0 0.0
    %3369 = vmatprep.subr.mxu0 0.0
    %3370 = vmatpush1.msra.mxu0 0.0
    %3371 = vmatprep.subr.mxu0 0.0
    %3372 = vmatpush1.msra.mxu0 0.0
    %3373 = vmatprep.subr.mxu0 0.0
    %3374 = vmatpush1.msra.mxu0 0.0
    %3375 = vmatprep.subr.mxu0 0.0
    %3376 = vmatpush1.msra.mxu0 0.0
    %3377 = vmatprep.subr.mxu0 0.0
    %3378 = vmatpush1.msra.mxu0 0.0
    %3379 = vmatprep.subr.mxu0 0.0
    %3380 = vmatpush1.msra.mxu0 0.0
    %3381 = vmatprep.subr.mxu0 0.0
    %3382 = vmatpush1.msra.mxu0 0.0
    %3383 = vmatprep.subr.mxu0 0.0
    %3384 = vmatpush1.msra.mxu0 0.0
    %3385 = vmatprep.subr.mxu0 0.0
    %3386 = vmatpush1.msra.mxu0 0.0
    %3387 = vmatprep.subr.mxu0 0.0
    %3388 = vmatpush1.msra.mxu0 0.0
    %3389 = vmatprep.subr.mxu0 0.0
    %3390 = vmatpush1.msra.mxu0 0.0
    %3391 = vmatprep.subr.mxu0 0.0
    %3392 = vmatpush1.msra.mxu0 0.0
    %3393 = vmatprep.subr.mxu0 0.0
    %3394 = vmatpush1.msra.mxu0 0.0
    %3395 = vmatprep.subr.mxu0 0.0
    %3396 = vmatpush1.msra.mxu0 0.0
    %3397 = vmatprep.subr.mxu0 0.0
    %3398 = vmatpush1.msra.mxu0 0.0
    %3399 = vmatprep.subr.mxu0 0.0
    %3400 = vmatpush1.msra.mxu0 0.0
    %3401 = vmatprep.subr.mxu0 0.0
    %3402 = vmatpush1.msra.mxu0 0.0
    %3403 = vmatprep.subr.mxu0 0.0
    %3404 = vmatpush1.msra.mxu0 0.0
    %3405 = vmatprep.subr.mxu0 0.0
    %3406 = vmatpush1.msra.mxu0 0.0
    %3407 = vmatprep.mubr.f32.mxu0 0.0
    %3408 = vmatmul.mubr.f32.gmra.mrb[0].mxu0 %v3329
    %v3409 = vpop.f32.mrb[0].mxu0
    %v3410 = vadd.f32 0.0, %v3409
    %v3411 = vpop.f32.mrb[0].mxu0
    %v3412 = vadd.f32 0.0, %v3411
    %3413 = vdwg.mxu0
    %3414 = vmatprep.subr.mxu0 %v3341
    %3415 = vmatpush1.msra.mxu0 %v3338
    %3416 = vmatprep.subr.mxu0 0.0
    %3417 = vmatpush1.msra.mxu0 0.0
    %3418 = vmatprep.subr.mxu0 0.0
    %3419 = vmatpush1.msra.mxu0 0.0
    %3420 = vmatprep.subr.mxu0 0.0
    %3421 = vmatpush1.msra.mxu0 0.0
    %3422 = vmatprep.subr.mxu0 0.0
    %3423 = vmatpush1.msra.mxu0 0.0
    %3424 = vmatprep.subr.mxu0 0.0
    %3425 = vmatpush1.msra.mxu0 0.0
    %3426 = vmatprep.subr.mxu0 0.0
    %3427 = vmatpush1.msra.mxu0 0.0
    %3428 = vmatprep.subr.mxu0 0.0
    %3429 = vmatpush1.msra.mxu0 0.0
    %3430 = vmatprep.subr.mxu0 0.0
    %3431 = vmatpush1.msra.mxu0 0.0
    %3432 = vmatprep.subr.mxu0 0.0
    %3433 = vmatpush1.msra.mxu0 0.0
    %3434 = vmatprep.subr.mxu0 0.0
    %3435 = vmatpush1.msra.mxu0 0.0
    %3436 = vmatprep.subr.mxu0 0.0
    %3437 = vmatpush1.msra.mxu0 0.0
    %3438 = vmatprep.subr.mxu0 0.0
    %3439 = vmatpush1.msra.mxu0 0.0
    %3440 = vmatprep.subr.mxu0 0.0
    %3441 = vmatpush1.msra.mxu0 0.0
    %3442 = vmatprep.subr.mxu0 0.0
    %3443 = vmatpush1.msra.mxu0 0.0
    %3444 = vmatprep.subr.mxu0 0.0
    %3445 = vmatpush1.msra.mxu0 0.0
    %3446 = vmatprep.subr.mxu0 0.0
    %3447 = vmatpush1.msra.mxu0 0.0
    %3448 = vmatprep.subr.mxu0 0.0
    %3449 = vmatpush1.msra.mxu0 0.0
    %3450 = vmatprep.subr.mxu0 0.0
    %3451 = vmatpush1.msra.mxu0 0.0
    %3452 = vmatprep.subr.mxu0 0.0
    %3453 = vmatpush1.msra.mxu0 0.0
    %3454 = vmatprep.subr.mxu0 0.0
    %3455 = vmatpush1.msra.mxu0 0.0
    %3456 = vmatprep.subr.mxu0 0.0
    %3457 = vmatpush1.msra.mxu0 0.0
    %3458 = vmatprep.subr.mxu0 0.0
    %3459 = vmatpush1.msra.mxu0 0.0
    %3460 = vmatprep.subr.mxu0 0.0
    %3461 = vmatpush1.msra.mxu0 0.0
    %3462 = vmatprep.subr.mxu0 0.0
    %3463 = vmatpush1.msra.mxu0 0.0
    %3464 = vmatprep.subr.mxu0 0.0
    %3465 = vmatpush1.msra.mxu0 0.0
    %3466 = vmatprep.subr.mxu0 0.0
    %3467 = vmatpush1.msra.mxu0 0.0
    %3468 = vmatprep.subr.mxu0 0.0
    %3469 = vmatpush1.msra.mxu0 0.0
    %3470 = vmatprep.subr.mxu0 0.0
    %3471 = vmatpush1.msra.mxu0 0.0
    %3472 = vmatprep.subr.mxu0 0.0
    %3473 = vmatpush1.msra.mxu0 0.0
    %3474 = vmatprep.subr.mxu0 0.0
    %3475 = vmatpush1.msra.mxu0 0.0
    %3476 = vmatprep.subr.mxu0 0.0
    %3477 = vmatpush1.msra.mxu0 0.0
    %3478 = vmatprep.mubr.f32.mxu0 0.0
    %3479 = vmatmul.mubr.f32.gmra.mrb[0].mxu0 %v3329
    %v3480 = vpop.f32.mrb[0].mxu0
    %v3481 = vadd.f32 0.0, %v3480
    %v3482 = vpop.f32.mrb[0].mxu0
    %v3483 = vadd.f32 0.0, %v3482
    %3484 = vdwg.mxu0
    %v3485 = vadd.f32 %v3318, %v3410
    %v3486 = vadd.f32 %v3319, %v3412
    %v3487 = vadd.f32 %v3320, %v3481
    %v3488 = vadd.f32 %v3321, %v3483
    %v3489 = vsel %vm596, %v2030, %v2052
    %v3490 = vsel %vm597, %v2031, %v2053
    %v3491 = vsel %vm598, %v2032, %v2054
    %v3492 = vsel %vm599, %v2033, %v2055
    %v3493 = vsel %vm1371, %v1982, %v3489
    %v3494 = vsel %vm1372, %v1983, %v3490
    %v3495 = vsel %vm1373, %v1984, %v3491
    %v3496 = vsel %vm1374, %v1985, %v3492
    %v3497 = vsel %vm1761, %v2000, %v3493
    %v3498 = vsel %vm1762, %v2001, %v3494
    %v3499 = vsel %vm1763, %v2002, %v3495
    %v3500 = vsel %vm1764, %v2003, %v3496
    %s3501 = scalar_lea.vmem %s4, 64
    %v3502 = vld [vmem:[%s3501] sm:$0xff]
    %v3504 = vsel %vm263, %v3502, 0
    %v3507 = vsel %vm267, %v3497, 0
    %v3510 = vsel %vm267, %v3498, 0
    %v3513 = vsel %vm267, %v3499, 0
    %v3516 = vsel %vm267, %v3500, 0
    %3518 = vmatprep.subr.mxu0 %v3510
    %3519 = vmatpush1.msra.mxu0 %v3507
    %3520 = vmatprep.subr.mxu0 0.0
    %3521 = vmatpush1.msra.mxu0 0.0
    %3522 = vmatprep.subr.mxu0 0.0
    %3523 = vmatpush1.msra.mxu0 0.0
    %3524 = vmatprep.subr.mxu0 0.0
    %3525 = vmatpush1.msra.mxu0 0.0
    %3526 = vmatprep.subr.mxu0 0.0
    %3527 = vmatpush1.msra.mxu0 0.0
    %3528 = vmatprep.subr.mxu0 0.0
    %3529 = vmatpush1.msra.mxu0 0.0
    %3530 = vmatprep.subr.mxu0 0.0
    %3531 = vmatpush1.msra.mxu0 0.0
    %3532 = vmatprep.subr.mxu0 0.0
    %3533 = vmatpush1.msra.mxu0 0.0
    %3534 = vmatprep.subr.mxu0 0.0
    %3535 = vmatpush1.msra.mxu0 0.0
    %3536 = vmatprep.subr.mxu0 0.0
    %3537 = vmatpush1.msra.mxu0 0.0
    %3538 = vmatprep.subr.mxu0 0.0
    %3539 = vmatpush1.msra.mxu0 0.0
    %3540 = vmatprep.subr.mxu0 0.0
    %3541 = vmatpush1.msra.mxu0 0.0
    %3542 = vmatprep.subr.mxu0 0.0
    %3543 = vmatpush1.msra.mxu0 0.0
    %3544 = vmatprep.subr.mxu0 0.0
    %3545 = vmatpush1.msra.mxu0 0.0
    %3546 = vmatprep.subr.mxu0 0.0
    %3547 = vmatpush1.msra.mxu0 0.0
    %3548 = vmatprep.subr.mxu0 0.0
    %3549 = vmatpush1.msra.mxu0 0.0
    %3550 = vmatprep.subr.mxu0 0.0
    %3551 = vmatpush1.msra.mxu0 0.0
    %3552 = vmatprep.subr.mxu0 0.0
    %3553 = vmatpush1.msra.mxu0 0.0
    %3554 = vmatprep.subr.mxu0 0.0
    %3555 = vmatpush1.msra.mxu0 0.0
    %3556 = vmatprep.subr.mxu0 0.0
    %3557 = vmatpush1.msra.mxu0 0.0
    %3558 = vmatprep.subr.mxu0 0.0
    %3559 = vmatpush1.msra.mxu0 0.0
    %3560 = vmatprep.subr.mxu0 0.0
    %3561 = vmatpush1.msra.mxu0 0.0
    %3562 = vmatprep.subr.mxu0 0.0
    %3563 = vmatpush1.msra.mxu0 0.0
    %3564 = vmatprep.subr.mxu0 0.0
    %3565 = vmatpush1.msra.mxu0 0.0
    %3566 = vmatprep.subr.mxu0 0.0
    %3567 = vmatpush1.msra.mxu0 0.0
    %3568 = vmatprep.subr.mxu0 0.0
    %3569 = vmatpush1.msra.mxu0 0.0
    %3570 = vmatprep.subr.mxu0 0.0
    %3571 = vmatpush1.msra.mxu0 0.0
    %3572 = vmatprep.subr.mxu0 0.0
    %3573 = vmatpush1.msra.mxu0 0.0
    %3574 = vmatprep.subr.mxu0 0.0
    %3575 = vmatpush1.msra.mxu0 0.0
    %3576 = vmatprep.subr.mxu0 0.0
    %3577 = vmatpush1.msra.mxu0 0.0
    %3578 = vmatprep.subr.mxu0 0.0
    %3579 = vmatpush1.msra.mxu0 0.0
    %3580 = vmatprep.subr.mxu0 0.0
    %3581 = vmatpush1.msra.mxu0 0.0
    %3582 = vmatprep.mubr.f32.mxu0 0.0
    %3583 = vmatmul.mubr.f32.gmra.mrb[0].mxu0 %v3504
    %v3584 = vpop.f32.mrb[0].mxu0
    %v3585 = vadd.f32 0.0, %v3584
    %v3586 = vpop.f32.mrb[0].mxu0
    %v3587 = vadd.f32 0.0, %v3586
    %3588 = vdwg.mxu0
    %3589 = vmatprep.subr.mxu0 %v3516
    %3590 = vmatpush1.msra.mxu0 %v3513
    %3591 = vmatprep.subr.mxu0 0.0
    %3592 = vmatpush1.msra.mxu0 0.0
    %3593 = vmatprep.subr.mxu0 0.0
    %3594 = vmatpush1.msra.mxu0 0.0
    %3595 = vmatprep.subr.mxu0 0.0
    %3596 = vmatpush1.msra.mxu0 0.0
    %3597 = vmatprep.subr.mxu0 0.0
    %3598 = vmatpush1.msra.mxu0 0.0
    %3599 = vmatprep.subr.mxu0 0.0
    %3600 = vmatpush1.msra.mxu0 0.0
    %3601 = vmatprep.subr.mxu0 0.0
    %3602 = vmatpush1.msra.mxu0 0.0
    %3603 = vmatprep.subr.mxu0 0.0
    %3604 = vmatpush1.msra.mxu0 0.0
    %3605 = vmatprep.subr.mxu0 0.0
    %3606 = vmatpush1.msra.mxu0 0.0
    %3607 = vmatprep.subr.mxu0 0.0
    %3608 = vmatpush1.msra.mxu0 0.0
    %3609 = vmatprep.subr.mxu0 0.0
    %3610 = vmatpush1.msra.mxu0 0.0
    %3611 = vmatprep.subr.mxu0 0.0
    %3612 = vmatpush1.msra.mxu0 0.0
    %3613 = vmatprep.subr.mxu0 0.0
    %3614 = vmatpush1.msra.mxu0 0.0
    %3615 = vmatprep.subr.mxu0 0.0
    %3616 = vmatpush1.msra.mxu0 0.0
    %3617 = vmatprep.subr.mxu0 0.0
    %3618 = vmatpush1.msra.mxu0 0.0
    %3619 = vmatprep.subr.mxu0 0.0
    %3620 = vmatpush1.msra.mxu0 0.0
    %3621 = vmatprep.subr.mxu0 0.0
    %3622 = vmatpush1.msra.mxu0 0.0
    %3623 = vmatprep.subr.mxu0 0.0
    %3624 = vmatpush1.msra.mxu0 0.0
    %3625 = vmatprep.subr.mxu0 0.0
    %3626 = vmatpush1.msra.mxu0 0.0
    %3627 = vmatprep.subr.mxu0 0.0
    %3628 = vmatpush1.msra.mxu0 0.0
    %3629 = vmatprep.subr.mxu0 0.0
    %3630 = vmatpush1.msra.mxu0 0.0
    %3631 = vmatprep.subr.mxu0 0.0
    %3632 = vmatpush1.msra.mxu0 0.0
    %3633 = vmatprep.subr.mxu0 0.0
    %3634 = vmatpush1.msra.mxu0 0.0
    %3635 = vmatprep.subr.mxu0 0.0
    %3636 = vmatpush1.msra.mxu0 0.0
    %3637 = vmatprep.subr.mxu0 0.0
    %3638 = vmatpush1.msra.mxu0 0.0
    %3639 = vmatprep.subr.mxu0 0.0
    %3640 = vmatpush1.msra.mxu0 0.0
    %3641 = vmatprep.subr.mxu0 0.0
    %3642 = vmatpush1.msra.mxu0 0.0
    %3643 = vmatprep.subr.mxu0 0.0
    %3644 = vmatpush1.msra.mxu0 0.0
    %3645 = vmatprep.subr.mxu0 0.0
    %3646 = vmatpush1.msra.mxu0 0.0
    %3647 = vmatprep.subr.mxu0 0.0
    %3648 = vmatpush1.msra.mxu0 0.0
    %3649 = vmatprep.subr.mxu0 0.0
    %3650 = vmatpush1.msra.mxu0 0.0
    %3651 = vmatprep.subr.mxu0 0.0
    %3652 = vmatpush1.msra.mxu0 0.0
    %3653 = vmatprep.mubr.f32.mxu0 0.0
    %3654 = vmatmul.mubr.f32.gmra.mrb[0].mxu0 %v3504
    %v3655 = vpop.f32.mrb[0].mxu0
    %v3656 = vadd.f32 0.0, %v3655
    %v3657 = vpop.f32.mrb[0].mxu0
    %v3658 = vadd.f32 0.0, %v3657
    %3659 = vdwg.mxu0
    %v3660 = vadd.f32 %v3485, %v3585
    %v3661 = vadd.f32 %v3486, %v3587
    %v3662 = vadd.f32 %v3487, %v3656
    %v3663 = vadd.f32 %v3488, %v3658
    %v3664 = vld [vmem:[%s5] sm:$0xff]
    %3666 = vset.pattern.permute.xlu0 0
    %3667 = vperm.xlu0 %3666, %v3664
    %v3668 = vpop.permute.xlu0 %3667
    %v3670 = vadd.f32 %v3660, %v3668
    %v3671 = vadd.f32 %v3661, %v3668
    %v3672 = vadd.f32 %v3662, %v3668
    %v3673 = vadd.f32 %v3663, %v3668
    %v3674 = vld [vmem:[%s6] sm:$0xff]
    %v3677 = vcombine.high %v40, %v40
    %v3678 = vcombine.high %v41, %v41
    %v3680 = vsel %vm263, %v3674, 0
    %v3682 = vsel %vm267, %v40, 0
    %v3684 = vsel %vm267, %v3677, 0
    %v3686 = vsel %vm267, %v41, 0
    %v3688 = vsel %vm267, %v3678, 0
    %3690 = vmatprep.subr.mxu0 %v3684
    %3691 = vmatpush1.msra.mxu0 %v3682
    %3692 = vmatprep.subr.mxu0 0.0
    %3693 = vmatpush1.msra.mxu0 0.0
    %3694 = vmatprep.subr.mxu0 0.0
    %3695 = vmatpush1.msra.mxu0 0.0
    %3696 = vmatprep.subr.mxu0 0.0
    %3697 = vmatpush1.msra.mxu0 0.0
    %3698 = vmatprep.subr.mxu0 0.0
    %3699 = vmatpush1.msra.mxu0 0.0
    %3700 = vmatprep.subr.mxu0 0.0
    %3701 = vmatpush1.msra.mxu0 0.0
    %3702 = vmatprep.subr.mxu0 0.0
    %3703 = vmatpush1.msra.mxu0 0.0
    %3704 = vmatprep.subr.mxu0 0.0
    %3705 = vmatpush1.msra.mxu0 0.0
    %3706 = vmatprep.subr.mxu0 0.0
    %3707 = vmatpush1.msra.mxu0 0.0
    %3708 = vmatprep.subr.mxu0 0.0
    %3709 = vmatpush1.msra.mxu0 0.0
    %3710 = vmatprep.subr.mxu0 0.0
    %3711 = vmatpush1.msra.mxu0 0.0
    %3712 = vmatprep.subr.mxu0 0.0
    %3713 = vmatpush1.msra.mxu0 0.0
    %3714 = vmatprep.subr.mxu0 0.0
    %3715 = vmatpush1.msra.mxu0 0.0
    %3716 = vmatprep.subr.mxu0 0.0
    %3717 = vmatpush1.msra.mxu0 0.0
    %3718 = vmatprep.subr.mxu0 0.0
    %3719 = vmatpush1.msra.mxu0 0.0
    %3720 = vmatprep.subr.mxu0 0.0
    %3721 = vmatpush1.msra.mxu0 0.0
    %3722 = vmatprep.subr.mxu0 0.0
    %3723 = vmatpush1.msra.mxu0 0.0
    %3724 = vmatprep.subr.mxu0 0.0
    %3725 = vmatpush1.msra.mxu0 0.0
    %3726 = vmatprep.subr.mxu0 0.0
    %3727 = vmatpush1.msra.mxu0 0.0
    %3728 = vmatprep.subr.mxu0 0.0
    %3729 = vmatpush1.msra.mxu0 0.0
    %3730 = vmatprep.subr.mxu0 0.0
    %3731 = vmatpush1.msra.mxu0 0.0
    %3732 = vmatprep.subr.mxu0 0.0
    %3733 = vmatpush1.msra.mxu0 0.0
    %3734 = vmatprep.subr.mxu0 0.0
    %3735 = vmatpush1.msra.mxu0 0.0
    %3736 = vmatprep.subr.mxu0 0.0
    %3737 = vmatpush1.msra.mxu0 0.0
    %3738 = vmatprep.subr.mxu0 0.0
    %3739 = vmatpush1.msra.mxu0 0.0
    %3740 = vmatprep.subr.mxu0 0.0
    %3741 = vmatpush1.msra.mxu0 0.0
    %3742 = vmatprep.subr.mxu0 0.0
    %3743 = vmatpush1.msra.mxu0 0.0
    %3744 = vmatprep.subr.mxu0 0.0
    %3745 = vmatpush1.msra.mxu0 0.0
    %3746 = vmatprep.subr.mxu0 0.0
    %3747 = vmatpush1.msra.mxu0 0.0
    %3748 = vmatprep.subr.mxu0 0.0
    %3749 = vmatpush1.msra.mxu0 0.0
    %3750 = vmatprep.subr.mxu0 0.0
    %3751 = vmatpush1.msra.mxu0 0.0
    %3752 = vmatprep.subr.mxu0 0.0
    %3753 = vmatpush1.msra.mxu0 0.0
    %3754 = vmatprep.mubr.f32.mxu0 0.0
    %3755 = vmatmul.mubr.f32.gmra.mrb[0].mxu0 %v3680
    %v3756 = vpop.f32.mrb[0].mxu0
    %v3757 = vadd.f32 %v3670, %v3756
    %v3758 = vpop.f32.mrb[0].mxu0
    %v3759 = vadd.f32 %v3671, %v3758
    %3760 = vdwg.mxu0
    %3761 = vmatprep.subr.mxu0 %v3688
    %3762 = vmatpush1.msra.mxu0 %v3686
    %3763 = vmatprep.subr.mxu0 0.0
    %3764 = vmatpush1.msra.mxu0 0.0
    %3765 = vmatprep.subr.mxu0 0.0
    %3766 = vmatpush1.msra.mxu0 0.0
    %3767 = vmatprep.subr.mxu0 0.0
    %3768 = vmatpush1.msra.mxu0 0.0
    %3769 = vmatprep.subr.mxu0 0.0
    %3770 = vmatpush1.msra.mxu0 0.0
    %3771 = vmatprep.subr.mxu0 0.0
    %3772 = vmatpush1.msra.mxu0 0.0
    %3773 = vmatprep.subr.mxu0 0.0
    %3774 = vmatpush1.msra.mxu0 0.0
    %3775 = vmatprep.subr.mxu0 0.0
    %3776 = vmatpush1.msra.mxu0 0.0
    %3777 = vmatprep.subr.mxu0 0.0
    %3778 = vmatpush1.msra.mxu0 0.0
    %3779 = vmatprep.subr.mxu0 0.0
    %3780 = vmatpush1.msra.mxu0 0.0
    %3781 = vmatprep.subr.mxu0 0.0
    %3782 = vmatpush1.msra.mxu0 0.0
    %3783 = vmatprep.subr.mxu0 0.0
    %3784 = vmatpush1.msra.mxu0 0.0
    %3785 = vmatprep.subr.mxu0 0.0
    %3786 = vmatpush1.msra.mxu0 0.0
    %3787 = vmatprep.subr.mxu0 0.0
    %3788 = vmatpush1.msra.mxu0 0.0
    %3789 = vmatprep.subr.mxu0 0.0
    %3790 = vmatpush1.msra.mxu0 0.0
    %3791 = vmatprep.subr.mxu0 0.0
    %3792 = vmatpush1.msra.mxu0 0.0
    %3793 = vmatprep.subr.mxu0 0.0
    %3794 = vmatpush1.msra.mxu0 0.0
    %3795 = vmatprep.subr.mxu0 0.0
    %3796 = vmatpush1.msra.mxu0 0.0
    %3797 = vmatprep.subr.mxu0 0.0
    %3798 = vmatpush1.msra.mxu0 0.0
    %3799 = vmatprep.subr.mxu0 0.0
    %3800 = vmatpush1.msra.mxu0 0.0
    %3801 = vmatprep.subr.mxu0 0.0
    %3802 = vmatpush1.msra.mxu0 0.0
    %3803 = vmatprep.subr.mxu0 0.0
    %3804 = vmatpush1.msra.mxu0 0.0
    %3805 = vmatprep.subr.mxu0 0.0
    %3806 = vmatpush1.msra.mxu0 0.0
    %3807 = vmatprep.subr.mxu0 0.0
    %3808 = vmatpush1.msra.mxu0 0.0
    %3809 = vmatprep.subr.mxu0 0.0
    %3810 = vmatpush1.msra.mxu0 0.0
    %3811 = vmatprep.subr.mxu0 0.0
    %3812 = vmatpush1.msra.mxu0 0.0
    %3813 = vmatprep.subr.mxu0 0.0
    %3814 = vmatpush1.msra.mxu0 0.0
    %3815 = vmatprep.subr.mxu0 0.0
    %3816 = vmatpush1.msra.mxu0 0.0
    %3817 = vmatprep.subr.mxu0 0.0
    %3818 = vmatpush1.msra.mxu0 0.0
    %3819 = vmatprep.subr.mxu0 0.0
    %3820 = vmatpush1.msra.mxu0 0.0
    %3821 = vmatprep.subr.mxu0 0.0
    %3822 = vmatpush1.msra.mxu0 0.0
    %3823 = vmatprep.subr.mxu0 0.0
    %3824 = vmatpush1.msra.mxu0 0.0
    %3825 = vmatprep.mubr.f32.mxu0 0.0
    %3826 = vmatmul.mubr.f32.gmra.mrb[0].mxu0 %v3680
    %v3827 = vpop.f32.mrb[0].mxu0
    %v3828 = vadd.f32 %v3672, %v3827
    %v3829 = vpop.f32.mrb[0].mxu0
    %v3830 = vadd.f32 %v3673, %v3829
    %3831 = vdwg.mxu0
    %3832 = vst [vmem:[#allocation4] sm:$0xff] %v3757
    %3833 = vst [vmem:[#allocation4 + $0x8] sm:$0xff] %v3759
    %3834 = vst [vmem:[#allocation4 + $0x10] sm:$0xff] %v3828
    %3835 = vst [vmem:[#allocation4 + $0x18] sm:$0xff] %v3830
    // Predicated region
    $region30: #{tpu_custom_call.1} parent=1 // pred_check
      _
    $region31: #{tpu_custom_call.1} parent=1 // pred_check_branch
      %3837 = sbr.rel (0) target = $region33
    $region32: #{tpu_custom_call.1} parent=1 // pred_region
      %s3839 = ssub.s32 512, 512
      %3840 = vsyncadd [#allocation5], %s3839
      %s3842 = sshll.u32 [#allocation4], 4
      %s3843 = int_to_ptr.vmem [resolvable:$true] %s3842
      %3845 = dma.vmem_to_hbm [thread:$0]  %s3843, 512, %s7, [#allocation5]
    $region33: #{tpu_custom_call.1} parent=1 // pred_fallthru
      _
    // Predicated region
    $region34: #{tpu_custom_call.1} parent=1 // pred_check
      _
    $region35: #{tpu_custom_call.1} parent=1 // pred_check_branch
      %3847 = sbr.rel (0) target = $region37
    $region36: #{tpu_custom_call.1} parent=1 // pred_region
      %3848 = dma.done [#allocation5], 512
    $region37: #{tpu_custom_call.1} parent=1 // pred_fallthru
      _
    %3849 = vsyncpa [#allocation5], 1

</llo_original>
